<compile_context>
chip_gen: v6e
topology: v6e:2x2x1
jax: 0.10.0
libtpu: 0.0.40
codegen_flags: <defaults>
</compile_context>

<pallas_src>
import functools
import math

import jax
import jax.numpy as jnp
from jax.experimental import pallas as pl
from jax.experimental.pallas import tpu as pltpu  # noqa: F401  (kept for TPU-specific tuning hooks)

# ---------------- small synthetic config ----------------
BATCH = 2
SEQ = 8
INPUT_DIM = 16          # config.encoder.input_dim
HIDDEN_DIM = 32         # config.decoder.hidden_dim
COND_DIM = 32           # config.decoder.conditioning_dim
NUM_HEADS = 4           # config.decoder.num_heads
HEAD_DIM = HIDDEN_DIM // NUM_HEADS
DEPTH = 2               # config.decoder.depth
MLP_RATIO = 4
FREQ_EMB = 256          # TimestepEmbedder frequency_embedding_size (default)
LN_EPS = 1e-5
# dropout = 0.0 -> eval-mode identity inside the blocks.


# ---------------- fully fused decoder kernel ----------------
def _decoder_fwd_kernel(
    x_ref, tf_ref, cosf_ref, sinf_ref, rot_ref, bias_ref,
    in_w_ref, in_b_ref, t_w1_ref, t_b1_ref, t_w2_ref, t_b2_ref,
    adaw_ref, adab_ref, n1w_ref, qkvw_ref, aow_ref, n2w_ref,
    w1_ref, b1_ref, w2_ref, b2_ref,
    faw_ref, fab_ref, fnw_ref, flw_ref, flb_ref,
    o_ref, *, num_heads, depth,
):
    f32 = jnp.float32
    D = n1w_ref.shape[-1]
    hd = D // num_heads
    inv_sqrt_hd = 1.0 / math.sqrt(hd)

    def dotf(a, b):
        return jnp.dot(a, b, preferred_element_type=f32)

    def dot_qkt(q, k):
        # contract the head dim of q and k directly (no materialized k.T)
        return jax.lax.dot_general(
            q, k, (((1,), (1,)), ((), ())), preferred_element_type=f32)

    def silu(v):
        return v * (1.0 / (1.0 + jnp.exp(-v)))

    def layer_norm(v, w):
        mu = jnp.mean(v, axis=-1, keepdims=True)
        var = jnp.mean((v - mu) ** 2, axis=-1, keepdims=True)
        return (v - mu) * jax.lax.rsqrt(var + LN_EPS) * w  # weight-only LayerNorm

    # ---- input projection: (B*S, IN) @ (IN, D) ----
    h = dotf(x_ref[...], in_w_ref[...]) + in_b_ref[...]          # (B*S, D)

    # ---- timestep embedding MLP + outer SiLU (rows already expanded over seq) ----
    e = silu(dotf(tf_ref[...], t_w1_ref[...]) + t_b1_ref[...])   # (B*S, C)
    c_rows = silu(dotf(e, t_w2_ref[...]) + t_b2_ref[...])        # (B*S, C)

    cosf = cosf_ref[...]          # (B*S, D) rotary cos, tiled over heads & batch
    sinf = sinf_ref[...]
    rot = rot_ref[...]            # (D, D) block-diagonal rotate_half matrix
    bias = bias_ref[...]          # (B*S, B*S) block-diagonal attention bias

    # ---- DDiT blocks (static unroll over depth) ----
    for l in range(depth):
        mod = dotf(c_rows, adaw_ref[l]) + adab_ref[l]            # (B*S, 6D)
        shift_msa = mod[:, 0 * D:1 * D]
        scale_msa = mod[:, 1 * D:2 * D]
        gate_msa = mod[:, 2 * D:3 * D]
        shift_mlp = mod[:, 3 * D:4 * D]
        scale_mlp = mod[:, 4 * D:5 * D]
        gate_mlp = mod[:, 5 * D:6 * D]

        # attention branch: h + gate_msa * attn_out(Attn(modulate(LN(h))))
        hn = layer_norm(h, n1w_ref[l])
        hn = hn * (1.0 + scale_msa) + shift_msa
        qkv = dotf(hn, qkvw_ref[l])                              # (B*S, 3D)
        q = qkv[:, 0 * D:1 * D]
        k = qkv[:, 1 * D:2 * D]
        v = qkv[:, 2 * D:3 * D]
        # rotary (GPT-NeoX style): u*cos + rotate_half(u)*sin, rotate_half via matmul
        q = q * cosf + dotf(q, rot) * sinf
        k = k * cosf + dotf(k, rot) * sinf

        aow_l = aow_ref[l]                                       # (D, D)
        attn = jnp.zeros_like(h)
        for hh in range(num_heads):                              # static unroll, 4 heads
            qh = q[:, hh * hd:(hh + 1) * hd]
            kh = k[:, hh * hd:(hh + 1) * hd]
            vh = v[:, hh * hd:(hh + 1) * hd]
            sc = dot_qkt(qh, kh) * inv_sqrt_hd + bias            # (B*S, B*S)
            sc = sc - jnp.max(sc, axis=-1, keepdims=True)
            p = jnp.exp(sc)
            p = p * pl.reciprocal(jnp.sum(p, axis=-1, keepdims=True), approx=True)
            oh = dotf(p, vh)                                     # (B*S, hd)
            # fuse the output projection: concat over heads == sum of per-head slabs
            attn = attn + dotf(oh, aow_l[hh * hd:(hh + 1) * hd, :])
        h = h + gate_msa * attn                                  # dropout=0 -> identity

        # MLP branch: h + gate_mlp * MLP(modulate(LN(h)))
        hn2 = layer_norm(h, n2w_ref[l])
        hn2 = hn2 * (1.0 + scale_mlp) + shift_mlp
        m = dotf(hn2, w1_ref[l]) + b1_ref[l]
        c0 = 0.7978845608028654                                  # sqrt(2/pi), tanh-GELU
        m = 0.5 * m * (1.0 + jnp.tanh(c0 * (m + 0.044715 * m * m * m)))
        m = dotf(m, w2_ref[l]) + b2_ref[l]
        h = h + gate_mlp * m

    # ---- DDitFinalLayer ----
    mod2 = dotf(c_rows, faw_ref[...]) + fab_ref[...]             # (B*S, 2D)
    shift = mod2[:, :D]
    scale = mod2[:, D:]
    hn = layer_norm(h, fnw_ref[...])
    hn = hn * (1.0 + scale) + shift
    o_ref[...] = dotf(hn, flw_ref[...]) + flb_ref[...]           # (B*S, OUT)


# ---------------- parameters (deterministic synthetic init) ----------------
def init_params(key):
    keys = iter(jax.random.split(key, 64))

    def nrm(shape, scale=0.05):
        return (scale * jax.random.normal(next(keys), shape)).astype(jnp.float32)

    D, C = HIDDEN_DIM, COND_DIM

    def stack(fn):
        return jnp.stack([fn() for _ in range(DEPTH)], axis=0)

    # NOTE: the PyTorch module zero-initializes adaLN_modulation and the final linear
    # (so a fresh model is an identity/zero map).  We use small random values instead
    # so the kernel compute path is actually exercised; forward semantics are unchanged.
    params = {
        "in_w": nrm((INPUT_DIM, D)), "in_b": nrm((1, D)),
        "t_w1": nrm((FREQ_EMB, C)), "t_b1": nrm((1, C)),
        "t_w2": nrm((C, C)), "t_b2": nrm((1, C)),
        "blocks": {   # all block weights stacked over depth (leading DEPTH axis)
            "adaln_w": stack(lambda: nrm((C, 6 * D))),
            "adaln_b": stack(lambda: nrm((1, 6 * D))),
            "norm1_w": jnp.ones((DEPTH, 1, D), jnp.float32),
            "qkv_w": stack(lambda: nrm((D, 3 * D))),        # bias=False in PyTorch
            "attn_out_w": stack(lambda: nrm((D, D))),       # bias=False in PyTorch
            "norm2_w": jnp.ones((DEPTH, 1, D), jnp.float32),
            "mlp_w1": stack(lambda: nrm((D, MLP_RATIO * D))),
            "mlp_b1": stack(lambda: nrm((1, MLP_RATIO * D))),
            "mlp_w2": stack(lambda: nrm((MLP_RATIO * D, D))),
            "mlp_b2": stack(lambda: nrm((1, D))),
        },
        "final": {
            "adaln_w": nrm((C, 2 * D)), "adaln_b": nrm((1, 2 * D)),
            "norm_w": jnp.ones((1, D), jnp.float32),
            "lin_w": nrm((D, INPUT_DIM)), "lin_b": nrm((1, INPUT_DIM)),
        },
    }
    return params


# ---------------- decoder forward (single fused pallas_call) ----------------
def decoder_forward(params, x, t, model_extras=None):
    # model_extras (set_emb) is unused by the reference forward pass.
    B, S, _ = x.shape
    D, H, hd = HIDDEN_DIM, NUM_HEADS, HEAD_DIM

    # TimestepEmbedder sinusoidal features (glue), row-expanded to (B*S, FREQ_EMB)
    half = FREQ_EMB // 2
    freqs = jnp.exp(-math.log(10000.0) * jnp.arange(half, dtype=jnp.float32) / half)
    args = t[:, None].astype(jnp.float32) * freqs[None, :]
    t_freq = jnp.concatenate([jnp.cos(args), jnp.sin(args)], axis=-1)      # (B, FREQ)
    t_freq_rows = jnp.repeat(t_freq, S, axis=0)                            # (B*S, FREQ)

    # Rotary cos/sin tables (buffers; glue), tiled over heads (lanes) and batch (rows)
    inv_freq = 1.0 / (10000.0 ** (jnp.arange(0, hd, 2, dtype=jnp.float32) / hd))
    pos = jnp.arange(S, dtype=jnp.float32)
    fr = pos[:, None] * inv_freq[None, :]
    emb = jnp.concatenate([fr, fr], axis=-1)                               # (S, hd)
    cosf = jnp.tile(jnp.cos(emb), (B, H))                                  # (B*S, D)
    sinf = jnp.tile(jnp.sin(emb), (B, H))

    # rotate_half as a block-diagonal sign/permutation matrix: rotate_half(u) == u @ rot
    half_hd = hd // 2
    r = jnp.zeros((hd, hd), jnp.float32)
    r = r.at[jnp.arange(half_hd) + half_hd, jnp.arange(half_hd)].set(-1.0)
    r = r.at[jnp.arange(half_hd), jnp.arange(half_hd) + half_hd].set(1.0)
    rot = jnp.kron(jnp.eye(H, dtype=jnp.float32), r)                       # (D, D)

    # block-diagonal attention bias: each row attends only within its own batch element
    blk_mask = jnp.kron(jnp.eye(B, dtype=jnp.float32), jnp.ones((S, S), jnp.float32))
    attn_bias = (blk_mask - 1.0) * 1e30                                    # 0 / -1e30

    blocks = params["blocks"]
    fin = params["final"]

    kernel = functools.partial(_decoder_fwd_kernel, num_heads=H, depth=DEPTH)
    out2d = pl.pallas_call(
        kernel,
        out_shape=jax.ShapeDtypeStruct((B * S, INPUT_DIM), jnp.float32),
    )(
        x.reshape(B * S, INPUT_DIM), t_freq_rows, cosf, sinf, rot, attn_bias,
        params["in_w"], params["in_b"],
        params["t_w1"], params["t_b1"], params["t_w2"], params["t_b2"],
        blocks["adaln_w"], blocks["adaln_b"], blocks["norm1_w"],
        blocks["qkv_w"], blocks["attn_out_w"], blocks["norm2_w"],
        blocks["mlp_w1"], blocks["mlp_b1"], blocks["mlp_w2"], blocks["mlp_b2"],
        fin["adaln_w"], fin["adaln_b"], fin["norm_w"], fin["lin_w"], fin["lin_b"],
    )
    return out2d.reshape(B, S, INPUT_DIM)


if __name__ == "__main__":
    key = jax.random.PRNGKey(0)
    pkey, xkey, tkey = jax.random.split(key, 3)
    params = init_params(pkey)
    x = jax.random.normal(xkey, (BATCH, SEQ, INPUT_DIM), dtype=jnp.float32)
    t = jax.random.uniform(tkey, (BATCH,), dtype=jnp.float32)
    model_extras = None  # set_emb is unused in the reference forward

    out = jax.jit(decoder_forward)(params, x, t, model_extras)
    jax.block_until_ready(out)
    assert out.shape == (BATCH, SEQ, INPUT_DIM), out.shape
    assert bool(jnp.all(jnp.isfinite(out)))
    print("KERNEL_OK")
</pallas_src>

<mosaic_0001>
module attributes {stable_mosaic.version = 11 : i64} {
  func.func @_decoder_fwd_kernel(%arg0: memref<16x16xf32, #tpu.memory_space<vmem>>, %arg1: memref<16x256xf32, #tpu.memory_space<vmem>>, %arg2: memref<16x32xf32, #tpu.memory_space<vmem>>, %arg3: memref<16x32xf32, #tpu.memory_space<vmem>>, %arg4: memref<32x32xf32, #tpu.memory_space<vmem>>, %arg5: memref<16x16xf32, #tpu.memory_space<vmem>>, %arg6: memref<16x32xf32, #tpu.memory_space<vmem>>, %arg7: memref<1x32xf32, #tpu.memory_space<vmem>>, %arg8: memref<256x32xf32, #tpu.memory_space<vmem>>, %arg9: memref<1x32xf32, #tpu.memory_space<vmem>>, %arg10: memref<32x32xf32, #tpu.memory_space<vmem>>, %arg11: memref<1x32xf32, #tpu.memory_space<vmem>>, %arg12: memref<2x32x192xf32, #tpu.memory_space<vmem>>, %arg13: memref<2x1x192xf32, #tpu.memory_space<vmem>>, %arg14: memref<2x1x32xf32, #tpu.memory_space<vmem>>, %arg15: memref<2x32x96xf32, #tpu.memory_space<vmem>>, %arg16: memref<2x32x32xf32, #tpu.memory_space<vmem>>, %arg17: memref<2x1x32xf32, #tpu.memory_space<vmem>>, %arg18: memref<2x32x128xf32, #tpu.memory_space<vmem>>, %arg19: memref<2x1x128xf32, #tpu.memory_space<vmem>>, %arg20: memref<2x128x32xf32, #tpu.memory_space<vmem>>, %arg21: memref<2x1x32xf32, #tpu.memory_space<vmem>>, %arg22: memref<32x64xf32, #tpu.memory_space<vmem>>, %arg23: memref<1x64xf32, #tpu.memory_space<vmem>>, %arg24: memref<1x32xf32, #tpu.memory_space<vmem>>, %arg25: memref<32x16xf32, #tpu.memory_space<vmem>>, %arg26: memref<1x16xf32, #tpu.memory_space<vmem>>, %arg27: memref<16x16xf32, #tpu.memory_space<vmem>>) attributes {dimension_semantics = [], scalar_prefetch = 0 : i64, scratch_operands = 0 : i64, tpu.core_type = #tpu.core_type<tc>} {
    %c0 = arith.constant 0 : index
    %c0_0 = arith.constant 0 : index
    %0 = vector.load %arg0[%c0, %c0_0] : memref<16x16xf32, #tpu.memory_space<vmem>>, vector<16x16xf32>
    %c0_1 = arith.constant 0 : index
    %c0_2 = arith.constant 0 : index
    %1 = vector.load %arg6[%c0_1, %c0_2] : memref<16x32xf32, #tpu.memory_space<vmem>>, vector<16x32xf32>
    %cst = arith.constant dense<0.000000e+00> : vector<16x32xf32>
    %2 = tpu.matmul %0, %1, %cst {dimension_numbers = #tpu.dot_dimension_numbers<[1], [0], [0], [1], [0, 0, 1, 1], [], []>} : vector<16x16xf32>, vector<16x32xf32>, vector<16x32xf32> -> vector<16x32xf32>
    %c0_3 = arith.constant 0 : index
    %c0_4 = arith.constant 0 : index
    %3 = vector.load %arg7[%c0_3, %c0_4] : memref<1x32xf32, #tpu.memory_space<vmem>>, vector<1x32xf32>
    %4 = vector.broadcast %3 : vector<1x32xf32> to vector<16x32xf32>
    %5 = arith.addf %2, %4 : vector<16x32xf32>
    %c0_5 = arith.constant 0 : index
    %c0_6 = arith.constant 0 : index
    %6 = vector.load %arg1[%c0_5, %c0_6] : memref<16x256xf32, #tpu.memory_space<vmem>>, vector<16x256xf32>
    %c0_7 = arith.constant 0 : index
    %c0_8 = arith.constant 0 : index
    %7 = vector.load %arg8[%c0_7, %c0_8] : memref<256x32xf32, #tpu.memory_space<vmem>>, vector<256x32xf32>
    %cst_9 = arith.constant dense<0.000000e+00> : vector<16x32xf32>
    %8 = tpu.matmul %6, %7, %cst_9 {dimension_numbers = #tpu.dot_dimension_numbers<[1], [0], [0], [1], [0, 0, 1, 1], [], []>} : vector<16x256xf32>, vector<256x32xf32>, vector<16x32xf32> -> vector<16x32xf32>
    %c0_10 = arith.constant 0 : index
    %c0_11 = arith.constant 0 : index
    %9 = vector.load %arg9[%c0_10, %c0_11] : memref<1x32xf32, #tpu.memory_space<vmem>>, vector<1x32xf32>
    %10 = vector.broadcast %9 : vector<1x32xf32> to vector<16x32xf32>
    %11 = arith.addf %8, %10 : vector<16x32xf32>
    %cst_12 = arith.constant 0.000000e+00 : f32
    %12 = vector.broadcast %cst_12 : f32 to vector<16x32xf32>
    %13 = arith.subf %12, %11 : vector<16x32xf32>
    %14 = math.exp %13 : vector<16x32xf32>
    %cst_13 = arith.constant 1.000000e+00 : f32
    %15 = vector.broadcast %cst_13 : f32 to vector<16x32xf32>
    %16 = arith.addf %15, %14 : vector<16x32xf32>
    %cst_14 = arith.constant 1.000000e+00 : f32
    %17 = vector.broadcast %cst_14 : f32 to vector<16x32xf32>
    %18 = arith.divf %17, %16 : vector<16x32xf32>
    %19 = arith.mulf %11, %18 : vector<16x32xf32>
    %c0_15 = arith.constant 0 : index
    %c0_16 = arith.constant 0 : index
    %20 = vector.load %arg10[%c0_15, %c0_16] : memref<32x32xf32, #tpu.memory_space<vmem>>, vector<32x32xf32>
    %cst_17 = arith.constant dense<0.000000e+00> : vector<16x32xf32>
    %21 = tpu.matmul %19, %20, %cst_17 {dimension_numbers = #tpu.dot_dimension_numbers<[1], [0], [0], [1], [0, 0, 1, 1], [], []>} : vector<16x32xf32>, vector<32x32xf32>, vector<16x32xf32> -> vector<16x32xf32>
    %c0_18 = arith.constant 0 : index
    %c0_19 = arith.constant 0 : index
    %22 = vector.load %arg11[%c0_18, %c0_19] : memref<1x32xf32, #tpu.memory_space<vmem>>, vector<1x32xf32>
    %23 = vector.broadcast %22 : vector<1x32xf32> to vector<16x32xf32>
    %24 = arith.addf %21, %23 : vector<16x32xf32>
    %cst_20 = arith.constant 0.000000e+00 : f32
    %25 = vector.broadcast %cst_20 : f32 to vector<16x32xf32>
    %26 = arith.subf %25, %24 : vector<16x32xf32>
    %27 = math.exp %26 : vector<16x32xf32>
    %cst_21 = arith.constant 1.000000e+00 : f32
    %28 = vector.broadcast %cst_21 : f32 to vector<16x32xf32>
    %29 = arith.addf %28, %27 : vector<16x32xf32>
    %cst_22 = arith.constant 1.000000e+00 : f32
    %30 = vector.broadcast %cst_22 : f32 to vector<16x32xf32>
    %31 = arith.divf %30, %29 : vector<16x32xf32>
    %32 = arith.mulf %24, %31 : vector<16x32xf32>
    %c0_23 = arith.constant 0 : index
    %c0_24 = arith.constant 0 : index
    %33 = vector.load %arg2[%c0_23, %c0_24] : memref<16x32xf32, #tpu.memory_space<vmem>>, vector<16x32xf32>
    %c0_25 = arith.constant 0 : index
    %c0_26 = arith.constant 0 : index
    %34 = vector.load %arg3[%c0_25, %c0_26] : memref<16x32xf32, #tpu.memory_space<vmem>>, vector<16x32xf32>
    %c0_27 = arith.constant 0 : index
    %c0_28 = arith.constant 0 : index
    %35 = vector.load %arg4[%c0_27, %c0_28] : memref<32x32xf32, #tpu.memory_space<vmem>>, vector<32x32xf32>
    %c0_29 = arith.constant 0 : index
    %c0_30 = arith.constant 0 : index
    %36 = vector.load %arg5[%c0_29, %c0_30] : memref<16x16xf32, #tpu.memory_space<vmem>>, vector<16x16xf32>
    %c0_31 = arith.constant 0 : index
    %c0_32 = arith.constant 0 : index
    %c0_33 = arith.constant 0 : index
    %37 = vector.load %arg12[%c0_31, %c0_32, %c0_33] : memref<2x32x192xf32, #tpu.memory_space<vmem>>, vector<1x32x192xf32>
    %38 = vector.shape_cast %37 : vector<1x32x192xf32> to vector<32x192xf32>
    %cst_34 = arith.constant dense<0.000000e+00> : vector<16x192xf32>
    %39 = tpu.matmul %32, %38, %cst_34 {dimension_numbers = #tpu.dot_dimension_numbers<[1], [0], [0], [1], [0, 0, 1, 1], [], []>} : vector<16x32xf32>, vector<32x192xf32>, vector<16x192xf32> -> vector<16x192xf32>
    %c0_35 = arith.constant 0 : index
    %c0_36 = arith.constant 0 : index
    %c0_37 = arith.constant 0 : index
    %40 = vector.load %arg13[%c0_35, %c0_36, %c0_37] : memref<2x1x192xf32, #tpu.memory_space<vmem>>, vector<1x1x192xf32>
    %41 = vector.shape_cast %40 : vector<1x1x192xf32> to vector<1x192xf32>
    %42 = vector.broadcast %41 : vector<1x192xf32> to vector<16x192xf32>
    %43 = arith.addf %39, %42 : vector<16x192xf32>
    %44 = vector.extract_strided_slice %43 {offsets = [0, 0], sizes = [16, 32], strides = [1, 1]} : vector<16x192xf32> to vector<16x32xf32>
    %45 = vector.extract_strided_slice %43 {offsets = [0, 32], sizes = [16, 32], strides = [1, 1]} : vector<16x192xf32> to vector<16x32xf32>
    %46 = vector.extract_strided_slice %43 {offsets = [0, 64], sizes = [16, 32], strides = [1, 1]} : vector<16x192xf32> to vector<16x32xf32>
    %47 = vector.extract_strided_slice %43 {offsets = [0, 96], sizes = [16, 32], strides = [1, 1]} : vector<16x192xf32> to vector<16x32xf32>
    %48 = vector.extract_strided_slice %43 {offsets = [0, 128], sizes = [16, 32], strides = [1, 1]} : vector<16x192xf32> to vector<16x32xf32>
    %49 = vector.extract_strided_slice %43 {offsets = [0, 160], sizes = [16, 32], strides = [1, 1]} : vector<16x192xf32> to vector<16x32xf32>
    %c0_38 = arith.constant 0 : index
    %c0_39 = arith.constant 0 : index
    %c0_40 = arith.constant 0 : index
    %50 = vector.load %arg14[%c0_38, %c0_39, %c0_40] : memref<2x1x32xf32, #tpu.memory_space<vmem>>, vector<1x1x32xf32>
    %51 = vector.shape_cast %50 : vector<1x1x32xf32> to vector<1x32xf32>
    %cst_41 = arith.constant dense<0.000000e+00> : vector<16xf32>
    %52 = vector.multi_reduction <add>, %5, %cst_41 [1] : vector<16x32xf32> to vector<16xf32>
    %53 = vector.shape_cast %52 : vector<16xf32> to vector<16x1xf32>
    %cst_42 = arith.constant 3.200000e+01 : f32
    %54 = vector.broadcast %cst_42 : f32 to vector<16x1xf32>
    %55 = arith.divf %53, %54 : vector<16x1xf32>
    %56 = vector.broadcast %55 : vector<16x1xf32> to vector<16x32xf32>
    %57 = arith.subf %5, %56 : vector<16x32xf32>
    %58 = arith.mulf %57, %57 : vector<16x32xf32>
    %cst_43 = arith.constant dense<0.000000e+00> : vector<16xf32>
    %59 = vector.multi_reduction <add>, %58, %cst_43 [1] : vector<16x32xf32> to vector<16xf32>
    %60 = vector.shape_cast %59 : vector<16xf32> to vector<16x1xf32>
    %cst_44 = arith.constant 3.200000e+01 : f32
    %61 = vector.broadcast %cst_44 : f32 to vector<16x1xf32>
    %62 = arith.divf %60, %61 : vector<16x1xf32>
    %63 = vector.broadcast %55 : vector<16x1xf32> to vector<16x32xf32>
    %64 = arith.subf %5, %63 : vector<16x32xf32>
    %cst_45 = arith.constant 9.99999974E-6 : f32
    %65 = vector.broadcast %cst_45 : f32 to vector<16x1xf32>
    %66 = arith.addf %62, %65 : vector<16x1xf32>
    %67 = math.rsqrt %66 : vector<16x1xf32>
    %68 = vector.broadcast %67 : vector<16x1xf32> to vector<16x32xf32>
    %69 = arith.mulf %64, %68 : vector<16x32xf32>
    %70 = vector.broadcast %51 : vector<1x32xf32> to vector<16x32xf32>
    %71 = arith.mulf %69, %70 : vector<16x32xf32>
    %cst_46 = arith.constant 1.000000e+00 : f32
    %72 = vector.broadcast %cst_46 : f32 to vector<16x32xf32>
    %73 = arith.addf %72, %45 : vector<16x32xf32>
    %74 = arith.mulf %71, %73 : vector<16x32xf32>
    %75 = arith.addf %74, %44 : vector<16x32xf32>
    %c0_47 = arith.constant 0 : index
    %c0_48 = arith.constant 0 : index
    %c0_49 = arith.constant 0 : index
    %76 = vector.load %arg15[%c0_47, %c0_48, %c0_49] : memref<2x32x96xf32, #tpu.memory_space<vmem>>, vector<1x32x96xf32>
    %77 = vector.shape_cast %76 : vector<1x32x96xf32> to vector<32x96xf32>
    %cst_50 = arith.constant dense<0.000000e+00> : vector<16x96xf32>
    %78 = tpu.matmul %75, %77, %cst_50 {dimension_numbers = #tpu.dot_dimension_numbers<[1], [0], [0], [1], [0, 0, 1, 1], [], []>} : vector<16x32xf32>, vector<32x96xf32>, vector<16x96xf32> -> vector<16x96xf32>
    %79 = vector.extract_strided_slice %78 {offsets = [0, 0], sizes = [16, 32], strides = [1, 1]} : vector<16x96xf32> to vector<16x32xf32>
    %80 = vector.extract_strided_slice %78 {offsets = [0, 32], sizes = [16, 32], strides = [1, 1]} : vector<16x96xf32> to vector<16x32xf32>
    %81 = vector.extract_strided_slice %78 {offsets = [0, 64], sizes = [16, 32], strides = [1, 1]} : vector<16x96xf32> to vector<16x32xf32>
    %82 = arith.mulf %79, %33 : vector<16x32xf32>
    %cst_51 = arith.constant dense<0.000000e+00> : vector<16x32xf32>
    %83 = tpu.matmul %79, %35, %cst_51 {dimension_numbers = #tpu.dot_dimension_numbers<[1], [0], [0], [1], [0, 0, 1, 1], [], []>} : vector<16x32xf32>, vector<32x32xf32>, vector<16x32xf32> -> vector<16x32xf32>
    %84 = arith.mulf %83, %34 : vector<16x32xf32>
    %85 = arith.addf %82, %84 : vector<16x32xf32>
    %86 = arith.mulf %80, %33 : vector<16x32xf32>
    %cst_52 = arith.constant dense<0.000000e+00> : vector<16x32xf32>
    %87 = tpu.matmul %80, %35, %cst_52 {dimension_numbers = #tpu.dot_dimension_numbers<[1], [0], [0], [1], [0, 0, 1, 1], [], []>} : vector<16x32xf32>, vector<32x32xf32>, vector<16x32xf32> -> vector<16x32xf32>
    %88 = arith.mulf %87, %34 : vector<16x32xf32>
    %89 = arith.addf %86, %88 : vector<16x32xf32>
    %c0_53 = arith.constant 0 : index
    %c0_54 = arith.constant 0 : index
    %c0_55 = arith.constant 0 : index
    %90 = vector.load %arg16[%c0_53, %c0_54, %c0_55] : memref<2x32x32xf32, #tpu.memory_space<vmem>>, vector<1x32x32xf32>
    %91 = vector.shape_cast %90 : vector<1x32x32xf32> to vector<32x32xf32>
    %cst_56 = arith.constant 0.000000e+00 : f32
    %92 = vector.broadcast %cst_56 : f32 to vector<16x32xf32>
    %93 = vector.extract_strided_slice %85 {offsets = [0, 0], sizes = [16, 8], strides = [1, 1]} : vector<16x32xf32> to vector<16x8xf32>
    %94 = vector.extract_strided_slice %89 {offsets = [0, 0], sizes = [16, 8], strides = [1, 1]} : vector<16x32xf32> to vector<16x8xf32>
    %95 = vector.extract_strided_slice %81 {offsets = [0, 0], sizes = [16, 8], strides = [1, 1]} : vector<16x32xf32> to vector<16x8xf32>
    %cst_57 = arith.constant dense<0.000000e+00> : vector<16x16xf32>
    %96 = tpu.matmul %93, %94, %cst_57 {dimension_numbers = #tpu.dot_dimension_numbers<[1], [1], [0], [0], [0, 0, 1, 0], [], []>} : vector<16x8xf32>, vector<16x8xf32>, vector<16x16xf32> -> vector<16x16xf32>
    %cst_58 = arith.constant 0.353553385 : f32
    %97 = vector.broadcast %cst_58 : f32 to vector<16x16xf32>
    %98 = arith.mulf %96, %97 : vector<16x16xf32>
    %99 = arith.addf %98, %36 : vector<16x16xf32>
    %cst_59 = arith.constant dense<0xFF800000> : vector<16xf32>
    %100 = vector.multi_reduction <maximumf>, %99, %cst_59 [1] : vector<16x16xf32> to vector<16xf32>
    %101 = vector.shape_cast %100 : vector<16xf32> to vector<16x1xf32>
    %102 = vector.broadcast %101 : vector<16x1xf32> to vector<16x16xf32>
    %103 = arith.subf %99, %102 : vector<16x16xf32>
    %104 = math.exp %103 : vector<16x16xf32>
    %cst_60 = arith.constant dense<0.000000e+00> : vector<16xf32>
    %105 = vector.multi_reduction <add>, %104, %cst_60 [1] : vector<16x16xf32> to vector<16xf32>
    %106 = vector.shape_cast %105 : vector<16xf32> to vector<16x1xf32>
    %107 = tpu.reciprocal %106 {approx = true} : vector<16x1xf32> -> vector<16x1xf32>
    %108 = vector.broadcast %107 : vector<16x1xf32> to vector<16x16xf32>
    %109 = arith.mulf %104, %108 : vector<16x16xf32>
    %cst_61 = arith.constant dense<0.000000e+00> : vector<16x8xf32>
    %110 = tpu.matmul %109, %95, %cst_61 {dimension_numbers = #tpu.dot_dimension_numbers<[1], [0], [0], [1], [0, 0, 1, 1], [], []>} : vector<16x16xf32>, vector<16x8xf32>, vector<16x8xf32> -> vector<16x8xf32>
    %111 = vector.extract_strided_slice %91 {offsets = [0, 0], sizes = [8, 32], strides = [1, 1]} : vector<32x32xf32> to vector<8x32xf32>
    %cst_62 = arith.constant dense<0.000000e+00> : vector<16x32xf32>
    %112 = tpu.matmul %110, %111, %cst_62 {dimension_numbers = #tpu.dot_dimension_numbers<[1], [0], [0], [1], [0, 0, 1, 1], [], []>} : vector<16x8xf32>, vector<8x32xf32>, vector<16x32xf32> -> vector<16x32xf32>
    %113 = arith.addf %92, %112 : vector<16x32xf32>
    %114 = vector.extract_strided_slice %85 {offsets = [0, 8], sizes = [16, 8], strides = [1, 1]} : vector<16x32xf32> to vector<16x8xf32>
    %115 = vector.extract_strided_slice %89 {offsets = [0, 8], sizes = [16, 8], strides = [1, 1]} : vector<16x32xf32> to vector<16x8xf32>
    %116 = vector.extract_strided_slice %81 {offsets = [0, 8], sizes = [16, 8], strides = [1, 1]} : vector<16x32xf32> to vector<16x8xf32>
    %cst_63 = arith.constant dense<0.000000e+00> : vector<16x16xf32>
    %117 = tpu.matmul %114, %115, %cst_63 {dimension_numbers = #tpu.dot_dimension_numbers<[1], [1], [0], [0], [0, 0, 1, 0], [], []>} : vector<16x8xf32>, vector<16x8xf32>, vector<16x16xf32> -> vector<16x16xf32>
    %cst_64 = arith.constant 0.353553385 : f32
    %118 = vector.broadcast %cst_64 : f32 to vector<16x16xf32>
    %119 = arith.mulf %117, %118 : vector<16x16xf32>
    %120 = arith.addf %119, %36 : vector<16x16xf32>
    %cst_65 = arith.constant dense<0xFF800000> : vector<16xf32>
    %121 = vector.multi_reduction <maximumf>, %120, %cst_65 [1] : vector<16x16xf32> to vector<16xf32>
    %122 = vector.shape_cast %121 : vector<16xf32> to vector<16x1xf32>
    %123 = vector.broadcast %122 : vector<16x1xf32> to vector<16x16xf32>
    %124 = arith.subf %120, %123 : vector<16x16xf32>
    %125 = math.exp %124 : vector<16x16xf32>
    %cst_66 = arith.constant dense<0.000000e+00> : vector<16xf32>
    %126 = vector.multi_reduction <add>, %125, %cst_66 [1] : vector<16x16xf32> to vector<16xf32>
    %127 = vector.shape_cast %126 : vector<16xf32> to vector<16x1xf32>
    %128 = tpu.reciprocal %127 {approx = true} : vector<16x1xf32> -> vector<16x1xf32>
    %129 = vector.broadcast %128 : vector<16x1xf32> to vector<16x16xf32>
    %130 = arith.mulf %125, %129 : vector<16x16xf32>
    %cst_67 = arith.constant dense<0.000000e+00> : vector<16x8xf32>
    %131 = tpu.matmul %130, %116, %cst_67 {dimension_numbers = #tpu.dot_dimension_numbers<[1], [0], [0], [1], [0, 0, 1, 1], [], []>} : vector<16x16xf32>, vector<16x8xf32>, vector<16x8xf32> -> vector<16x8xf32>
    %132 = vector.extract_strided_slice %91 {offsets = [8, 0], sizes = [8, 32], strides = [1, 1]} : vector<32x32xf32> to vector<8x32xf32>
    %cst_68 = arith.constant dense<0.000000e+00> : vector<16x32xf32>
    %133 = tpu.matmul %131, %132, %cst_68 {dimension_numbers = #tpu.dot_dimension_numbers<[1], [0], [0], [1], [0, 0, 1, 1], [], []>} : vector<16x8xf32>, vector<8x32xf32>, vector<16x32xf32> -> vector<16x32xf32>
    %134 = arith.addf %113, %133 : vector<16x32xf32>
    %135 = vector.extract_strided_slice %85 {offsets = [0, 16], sizes = [16, 8], strides = [1, 1]} : vector<16x32xf32> to vector<16x8xf32>
    %136 = vector.extract_strided_slice %89 {offsets = [0, 16], sizes = [16, 8], strides = [1, 1]} : vector<16x32xf32> to vector<16x8xf32>
    %137 = vector.extract_strided_slice %81 {offsets = [0, 16], sizes = [16, 8], strides = [1, 1]} : vector<16x32xf32> to vector<16x8xf32>
    %cst_69 = arith.constant dense<0.000000e+00> : vector<16x16xf32>
    %138 = tpu.matmul %135, %136, %cst_69 {dimension_numbers = #tpu.dot_dimension_numbers<[1], [1], [0], [0], [0, 0, 1, 0], [], []>} : vector<16x8xf32>, vector<16x8xf32>, vector<16x16xf32> -> vector<16x16xf32>
    %cst_70 = arith.constant 0.353553385 : f32
    %139 = vector.broadcast %cst_70 : f32 to vector<16x16xf32>
    %140 = arith.mulf %138, %139 : vector<16x16xf32>
    %141 = arith.addf %140, %36 : vector<16x16xf32>
    %cst_71 = arith.constant dense<0xFF800000> : vector<16xf32>
    %142 = vector.multi_reduction <maximumf>, %141, %cst_71 [1] : vector<16x16xf32> to vector<16xf32>
    %143 = vector.shape_cast %142 : vector<16xf32> to vector<16x1xf32>
    %144 = vector.broadcast %143 : vector<16x1xf32> to vector<16x16xf32>
    %145 = arith.subf %141, %144 : vector<16x16xf32>
    %146 = math.exp %145 : vector<16x16xf32>
    %cst_72 = arith.constant dense<0.000000e+00> : vector<16xf32>
    %147 = vector.multi_reduction <add>, %146, %cst_72 [1] : vector<16x16xf32> to vector<16xf32>
    %148 = vector.shape_cast %147 : vector<16xf32> to vector<16x1xf32>
    %149 = tpu.reciprocal %148 {approx = true} : vector<16x1xf32> -> vector<16x1xf32>
    %150 = vector.broadcast %149 : vector<16x1xf32> to vector<16x16xf32>
    %151 = arith.mulf %146, %150 : vector<16x16xf32>
    %cst_73 = arith.constant dense<0.000000e+00> : vector<16x8xf32>
    %152 = tpu.matmul %151, %137, %cst_73 {dimension_numbers = #tpu.dot_dimension_numbers<[1], [0], [0], [1], [0, 0, 1, 1], [], []>} : vector<16x16xf32>, vector<16x8xf32>, vector<16x8xf32> -> vector<16x8xf32>
    %153 = vector.extract_strided_slice %91 {offsets = [16, 0], sizes = [8, 32], strides = [1, 1]} : vector<32x32xf32> to vector<8x32xf32>
    %cst_74 = arith.constant dense<0.000000e+00> : vector<16x32xf32>
    %154 = tpu.matmul %152, %153, %cst_74 {dimension_numbers = #tpu.dot_dimension_numbers<[1], [0], [0], [1], [0, 0, 1, 1], [], []>} : vector<16x8xf32>, vector<8x32xf32>, vector<16x32xf32> -> vector<16x32xf32>
    %155 = arith.addf %134, %154 : vector<16x32xf32>
    %156 = vector.extract_strided_slice %85 {offsets = [0, 24], sizes = [16, 8], strides = [1, 1]} : vector<16x32xf32> to vector<16x8xf32>
    %157 = vector.extract_strided_slice %89 {offsets = [0, 24], sizes = [16, 8], strides = [1, 1]} : vector<16x32xf32> to vector<16x8xf32>
    %158 = vector.extract_strided_slice %81 {offsets = [0, 24], sizes = [16, 8], strides = [1, 1]} : vector<16x32xf32> to vector<16x8xf32>
    %cst_75 = arith.constant dense<0.000000e+00> : vector<16x16xf32>
    %159 = tpu.matmul %156, %157, %cst_75 {dimension_numbers = #tpu.dot_dimension_numbers<[1], [1], [0], [0], [0, 0, 1, 0], [], []>} : vector<16x8xf32>, vector<16x8xf32>, vector<16x16xf32> -> vector<16x16xf32>
    %cst_76 = arith.constant 0.353553385 : f32
    %160 = vector.broadcast %cst_76 : f32 to vector<16x16xf32>
    %161 = arith.mulf %159, %160 : vector<16x16xf32>
    %162 = arith.addf %161, %36 : vector<16x16xf32>
    %cst_77 = arith.constant dense<0xFF800000> : vector<16xf32>
    %163 = vector.multi_reduction <maximumf>, %162, %cst_77 [1] : vector<16x16xf32> to vector<16xf32>
    %164 = vector.shape_cast %163 : vector<16xf32> to vector<16x1xf32>
    %165 = vector.broadcast %164 : vector<16x1xf32> to vector<16x16xf32>
    %166 = arith.subf %162, %165 : vector<16x16xf32>
    %167 = math.exp %166 : vector<16x16xf32>
    %cst_78 = arith.constant dense<0.000000e+00> : vector<16xf32>
    %168 = vector.multi_reduction <add>, %167, %cst_78 [1] : vector<16x16xf32> to vector<16xf32>
    %169 = vector.shape_cast %168 : vector<16xf32> to vector<16x1xf32>
    %170 = tpu.reciprocal %169 {approx = true} : vector<16x1xf32> -> vector<16x1xf32>
    %171 = vector.broadcast %170 : vector<16x1xf32> to vector<16x16xf32>
    %172 = arith.mulf %167, %171 : vector<16x16xf32>
    %cst_79 = arith.constant dense<0.000000e+00> : vector<16x8xf32>
    %173 = tpu.matmul %172, %158, %cst_79 {dimension_numbers = #tpu.dot_dimension_numbers<[1], [0], [0], [1], [0, 0, 1, 1], [], []>} : vector<16x16xf32>, vector<16x8xf32>, vector<16x8xf32> -> vector<16x8xf32>
    %174 = vector.extract_strided_slice %91 {offsets = [24, 0], sizes = [8, 32], strides = [1, 1]} : vector<32x32xf32> to vector<8x32xf32>
    %cst_80 = arith.constant dense<0.000000e+00> : vector<16x32xf32>
    %175 = tpu.matmul %173, %174, %cst_80 {dimension_numbers = #tpu.dot_dimension_numbers<[1], [0], [0], [1], [0, 0, 1, 1], [], []>} : vector<16x8xf32>, vector<8x32xf32>, vector<16x32xf32> -> vector<16x32xf32>
    %176 = arith.addf %155, %175 : vector<16x32xf32>
    %177 = arith.mulf %46, %176 : vector<16x32xf32>
    %178 = arith.addf %5, %177 : vector<16x32xf32>
    %c0_81 = arith.constant 0 : index
    %c0_82 = arith.constant 0 : index
    %c0_83 = arith.constant 0 : index
    %179 = vector.load %arg17[%c0_81, %c0_82, %c0_83] : memref<2x1x32xf32, #tpu.memory_space<vmem>>, vector<1x1x32xf32>
    %180 = vector.shape_cast %179 : vector<1x1x32xf32> to vector<1x32xf32>
    %cst_84 = arith.constant dense<0.000000e+00> : vector<16xf32>
    %181 = vector.multi_reduction <add>, %178, %cst_84 [1] : vector<16x32xf32> to vector<16xf32>
    %182 = vector.shape_cast %181 : vector<16xf32> to vector<16x1xf32>
    %cst_85 = arith.constant 3.200000e+01 : f32
    %183 = vector.broadcast %cst_85 : f32 to vector<16x1xf32>
    %184 = arith.divf %182, %183 : vector<16x1xf32>
    %185 = vector.broadcast %184 : vector<16x1xf32> to vector<16x32xf32>
    %186 = arith.subf %178, %185 : vector<16x32xf32>
    %187 = arith.mulf %186, %186 : vector<16x32xf32>
    %cst_86 = arith.constant dense<0.000000e+00> : vector<16xf32>
    %188 = vector.multi_reduction <add>, %187, %cst_86 [1] : vector<16x32xf32> to vector<16xf32>
    %189 = vector.shape_cast %188 : vector<16xf32> to vector<16x1xf32>
    %cst_87 = arith.constant 3.200000e+01 : f32
    %190 = vector.broadcast %cst_87 : f32 to vector<16x1xf32>
    %191 = arith.divf %189, %190 : vector<16x1xf32>
    %192 = vector.broadcast %184 : vector<16x1xf32> to vector<16x32xf32>
    %193 = arith.subf %178, %192 : vector<16x32xf32>
    %cst_88 = arith.constant 9.99999974E-6 : f32
    %194 = vector.broadcast %cst_88 : f32 to vector<16x1xf32>
    %195 = arith.addf %191, %194 : vector<16x1xf32>
    %196 = math.rsqrt %195 : vector<16x1xf32>
    %197 = vector.broadcast %196 : vector<16x1xf32> to vector<16x32xf32>
    %198 = arith.mulf %193, %197 : vector<16x32xf32>
    %199 = vector.broadcast %180 : vector<1x32xf32> to vector<16x32xf32>
    %200 = arith.mulf %198, %199 : vector<16x32xf32>
    %cst_89 = arith.constant 1.000000e+00 : f32
    %201 = vector.broadcast %cst_89 : f32 to vector<16x32xf32>
    %202 = arith.addf %201, %48 : vector<16x32xf32>
    %203 = arith.mulf %200, %202 : vector<16x32xf32>
    %204 = arith.addf %203, %47 : vector<16x32xf32>
    %c0_90 = arith.constant 0 : index
    %c0_91 = arith.constant 0 : index
    %c0_92 = arith.constant 0 : index
    %205 = vector.load %arg18[%c0_90, %c0_91, %c0_92] : memref<2x32x128xf32, #tpu.memory_space<vmem>>, vector<1x32x128xf32>
    %206 = vector.shape_cast %205 : vector<1x32x128xf32> to vector<32x128xf32>
    %cst_93 = arith.constant dense<0.000000e+00> : vector<16x128xf32>
    %207 = tpu.matmul %204, %206, %cst_93 {dimension_numbers = #tpu.dot_dimension_numbers<[1], [0], [0], [1], [0, 0, 1, 1], [], []>} : vector<16x32xf32>, vector<32x128xf32>, vector<16x128xf32> -> vector<16x128xf32>
    %c0_94 = arith.constant 0 : index
    %c0_95 = arith.constant 0 : index
    %c0_96 = arith.constant 0 : index
    %208 = vector.load %arg19[%c0_94, %c0_95, %c0_96] : memref<2x1x128xf32, #tpu.memory_space<vmem>>, vector<1x1x128xf32>
    %209 = vector.shape_cast %208 : vector<1x1x128xf32> to vector<1x128xf32>
    %210 = vector.broadcast %209 : vector<1x128xf32> to vector<16x128xf32>
    %211 = arith.addf %207, %210 : vector<16x128xf32>
    %cst_97 = arith.constant 5.000000e-01 : f32
    %212 = vector.broadcast %cst_97 : f32 to vector<16x128xf32>
    %213 = arith.mulf %212, %211 : vector<16x128xf32>
    %cst_98 = arith.constant 4.471500e-02 : f32
    %214 = vector.broadcast %cst_98 : f32 to vector<16x128xf32>
    %215 = arith.mulf %214, %211 : vector<16x128xf32>
    %216 = arith.mulf %215, %211 : vector<16x128xf32>
    %217 = arith.mulf %216, %211 : vector<16x128xf32>
    %218 = arith.addf %211, %217 : vector<16x128xf32>
    %cst_99 = arith.constant 0.797884583 : f32
    %219 = vector.broadcast %cst_99 : f32 to vector<16x128xf32>
    %220 = arith.mulf %219, %218 : vector<16x128xf32>
    %221 = math.tanh %220 : vector<16x128xf32>
    %cst_100 = arith.constant 1.000000e+00 : f32
    %222 = vector.broadcast %cst_100 : f32 to vector<16x128xf32>
    %223 = arith.addf %222, %221 : vector<16x128xf32>
    %224 = arith.mulf %213, %223 : vector<16x128xf32>
    %c0_101 = arith.constant 0 : index
    %c0_102 = arith.constant 0 : index
    %c0_103 = arith.constant 0 : index
    %225 = vector.load %arg20[%c0_101, %c0_102, %c0_103] : memref<2x128x32xf32, #tpu.memory_space<vmem>>, vector<1x128x32xf32>
    %226 = vector.shape_cast %225 : vector<1x128x32xf32> to vector<128x32xf32>
    %cst_104 = arith.constant dense<0.000000e+00> : vector<16x32xf32>
    %227 = tpu.matmul %224, %226, %cst_104 {dimension_numbers = #tpu.dot_dimension_numbers<[1], [0], [0], [1], [0, 0, 1, 1], [], []>} : vector<16x128xf32>, vector<128x32xf32>, vector<16x32xf32> -> vector<16x32xf32>
    %c0_105 = arith.constant 0 : index
    %c0_106 = arith.constant 0 : index
    %c0_107 = arith.constant 0 : index
    %228 = vector.load %arg21[%c0_105, %c0_106, %c0_107] : memref<2x1x32xf32, #tpu.memory_space<vmem>>, vector<1x1x32xf32>
    %229 = vector.shape_cast %228 : vector<1x1x32xf32> to vector<1x32xf32>
    %230 = vector.broadcast %229 : vector<1x32xf32> to vector<16x32xf32>
    %231 = arith.addf %227, %230 : vector<16x32xf32>
    %232 = arith.mulf %49, %231 : vector<16x32xf32>
    %233 = arith.addf %178, %232 : vector<16x32xf32>
    %c1 = arith.constant 1 : index
    %c0_108 = arith.constant 0 : index
    %c0_109 = arith.constant 0 : index
    %234 = vector.load %arg12[%c1, %c0_108, %c0_109] : memref<2x32x192xf32, #tpu.memory_space<vmem>>, vector<1x32x192xf32>
    %235 = vector.shape_cast %234 : vector<1x32x192xf32> to vector<32x192xf32>
    %cst_110 = arith.constant dense<0.000000e+00> : vector<16x192xf32>
    %236 = tpu.matmul %32, %235, %cst_110 {dimension_numbers = #tpu.dot_dimension_numbers<[1], [0], [0], [1], [0, 0, 1, 1], [], []>} : vector<16x32xf32>, vector<32x192xf32>, vector<16x192xf32> -> vector<16x192xf32>
    %c1_111 = arith.constant 1 : index
    %c0_112 = arith.constant 0 : index
    %c0_113 = arith.constant 0 : index
    %237 = vector.load %arg13[%c1_111, %c0_112, %c0_113] : memref<2x1x192xf32, #tpu.memory_space<vmem>>, vector<1x1x192xf32>
    %238 = vector.shape_cast %237 : vector<1x1x192xf32> to vector<1x192xf32>
    %239 = vector.broadcast %238 : vector<1x192xf32> to vector<16x192xf32>
    %240 = arith.addf %236, %239 : vector<16x192xf32>
    %241 = vector.extract_strided_slice %240 {offsets = [0, 0], sizes = [16, 32], strides = [1, 1]} : vector<16x192xf32> to vector<16x32xf32>
    %242 = vector.extract_strided_slice %240 {offsets = [0, 32], sizes = [16, 32], strides = [1, 1]} : vector<16x192xf32> to vector<16x32xf32>
    %243 = vector.extract_strided_slice %240 {offsets = [0, 64], sizes = [16, 32], strides = [1, 1]} : vector<16x192xf32> to vector<16x32xf32>
    %244 = vector.extract_strided_slice %240 {offsets = [0, 96], sizes = [16, 32], strides = [1, 1]} : vector<16x192xf32> to vector<16x32xf32>
    %245 = vector.extract_strided_slice %240 {offsets = [0, 128], sizes = [16, 32], strides = [1, 1]} : vector<16x192xf32> to vector<16x32xf32>
    %246 = vector.extract_strided_slice %240 {offsets = [0, 160], sizes = [16, 32], strides = [1, 1]} : vector<16x192xf32> to vector<16x32xf32>
    %c1_114 = arith.constant 1 : index
    %c0_115 = arith.constant 0 : index
    %c0_116 = arith.constant 0 : index
    %247 = vector.load %arg14[%c1_114, %c0_115, %c0_116] : memref<2x1x32xf32, #tpu.memory_space<vmem>>, vector<1x1x32xf32>
    %248 = vector.shape_cast %247 : vector<1x1x32xf32> to vector<1x32xf32>
    %cst_117 = arith.constant dense<0.000000e+00> : vector<16xf32>
    %249 = vector.multi_reduction <add>, %233, %cst_117 [1] : vector<16x32xf32> to vector<16xf32>
    %250 = vector.shape_cast %249 : vector<16xf32> to vector<16x1xf32>
    %cst_118 = arith.constant 3.200000e+01 : f32
    %251 = vector.broadcast %cst_118 : f32 to vector<16x1xf32>
    %252 = arith.divf %250, %251 : vector<16x1xf32>
    %253 = vector.broadcast %252 : vector<16x1xf32> to vector<16x32xf32>
    %254 = arith.subf %233, %253 : vector<16x32xf32>
    %255 = arith.mulf %254, %254 : vector<16x32xf32>
    %cst_119 = arith.constant dense<0.000000e+00> : vector<16xf32>
    %256 = vector.multi_reduction <add>, %255, %cst_119 [1] : vector<16x32xf32> to vector<16xf32>
    %257 = vector.shape_cast %256 : vector<16xf32> to vector<16x1xf32>
    %cst_120 = arith.constant 3.200000e+01 : f32
    %258 = vector.broadcast %cst_120 : f32 to vector<16x1xf32>
    %259 = arith.divf %257, %258 : vector<16x1xf32>
    %260 = vector.broadcast %252 : vector<16x1xf32> to vector<16x32xf32>
    %261 = arith.subf %233, %260 : vector<16x32xf32>
    %cst_121 = arith.constant 9.99999974E-6 : f32
    %262 = vector.broadcast %cst_121 : f32 to vector<16x1xf32>
    %263 = arith.addf %259, %262 : vector<16x1xf32>
    %264 = math.rsqrt %263 : vector<16x1xf32>
    %265 = vector.broadcast %264 : vector<16x1xf32> to vector<16x32xf32>
    %266 = arith.mulf %261, %265 : vector<16x32xf32>
    %267 = vector.broadcast %248 : vector<1x32xf32> to vector<16x32xf32>
    %268 = arith.mulf %266, %267 : vector<16x32xf32>
    %cst_122 = arith.constant 1.000000e+00 : f32
    %269 = vector.broadcast %cst_122 : f32 to vector<16x32xf32>
    %270 = arith.addf %269, %242 : vector<16x32xf32>
    %271 = arith.mulf %268, %270 : vector<16x32xf32>
    %272 = arith.addf %271, %241 : vector<16x32xf32>
    %c1_123 = arith.constant 1 : index
    %c0_124 = arith.constant 0 : index
    %c0_125 = arith.constant 0 : index
    %273 = vector.load %arg15[%c1_123, %c0_124, %c0_125] : memref<2x32x96xf32, #tpu.memory_space<vmem>>, vector<1x32x96xf32>
    %274 = vector.shape_cast %273 : vector<1x32x96xf32> to vector<32x96xf32>
    %cst_126 = arith.constant dense<0.000000e+00> : vector<16x96xf32>
    %275 = tpu.matmul %272, %274, %cst_126 {dimension_numbers = #tpu.dot_dimension_numbers<[1], [0], [0], [1], [0, 0, 1, 1], [], []>} : vector<16x32xf32>, vector<32x96xf32>, vector<16x96xf32> -> vector<16x96xf32>
    %276 = vector.extract_strided_slice %275 {offsets = [0, 0], sizes = [16, 32], strides = [1, 1]} : vector<16x96xf32> to vector<16x32xf32>
    %277 = vector.extract_strided_slice %275 {offsets = [0, 32], sizes = [16, 32], strides = [1, 1]} : vector<16x96xf32> to vector<16x32xf32>
    %278 = vector.extract_strided_slice %275 {offsets = [0, 64], sizes = [16, 32], strides = [1, 1]} : vector<16x96xf32> to vector<16x32xf32>
    %279 = arith.mulf %276, %33 : vector<16x32xf32>
    %cst_127 = arith.constant dense<0.000000e+00> : vector<16x32xf32>
    %280 = tpu.matmul %276, %35, %cst_127 {dimension_numbers = #tpu.dot_dimension_numbers<[1], [0], [0], [1], [0, 0, 1, 1], [], []>} : vector<16x32xf32>, vector<32x32xf32>, vector<16x32xf32> -> vector<16x32xf32>
    %281 = arith.mulf %280, %34 : vector<16x32xf32>
    %282 = arith.addf %279, %281 : vector<16x32xf32>
    %283 = arith.mulf %277, %33 : vector<16x32xf32>
    %cst_128 = arith.constant dense<0.000000e+00> : vector<16x32xf32>
    %284 = tpu.matmul %277, %35, %cst_128 {dimension_numbers = #tpu.dot_dimension_numbers<[1], [0], [0], [1], [0, 0, 1, 1], [], []>} : vector<16x32xf32>, vector<32x32xf32>, vector<16x32xf32> -> vector<16x32xf32>
    %285 = arith.mulf %284, %34 : vector<16x32xf32>
    %286 = arith.addf %283, %285 : vector<16x32xf32>
    %c1_129 = arith.constant 1 : index
    %c0_130 = arith.constant 0 : index
    %c0_131 = arith.constant 0 : index
    %287 = vector.load %arg16[%c1_129, %c0_130, %c0_131] : memref<2x32x32xf32, #tpu.memory_space<vmem>>, vector<1x32x32xf32>
    %288 = vector.shape_cast %287 : vector<1x32x32xf32> to vector<32x32xf32>
    %cst_132 = arith.constant 0.000000e+00 : f32
    %289 = vector.broadcast %cst_132 : f32 to vector<16x32xf32>
    %290 = vector.extract_strided_slice %282 {offsets = [0, 0], sizes = [16, 8], strides = [1, 1]} : vector<16x32xf32> to vector<16x8xf32>
    %291 = vector.extract_strided_slice %286 {offsets = [0, 0], sizes = [16, 8], strides = [1, 1]} : vector<16x32xf32> to vector<16x8xf32>
    %292 = vector.extract_strided_slice %278 {offsets = [0, 0], sizes = [16, 8], strides = [1, 1]} : vector<16x32xf32> to vector<16x8xf32>
    %cst_133 = arith.constant dense<0.000000e+00> : vector<16x16xf32>
    %293 = tpu.matmul %290, %291, %cst_133 {dimension_numbers = #tpu.dot_dimension_numbers<[1], [1], [0], [0], [0, 0, 1, 0], [], []>} : vector<16x8xf32>, vector<16x8xf32>, vector<16x16xf32> -> vector<16x16xf32>
    %cst_134 = arith.constant 0.353553385 : f32
    %294 = vector.broadcast %cst_134 : f32 to vector<16x16xf32>
    %295 = arith.mulf %293, %294 : vector<16x16xf32>
    %296 = arith.addf %295, %36 : vector<16x16xf32>
    %cst_135 = arith.constant dense<0xFF800000> : vector<16xf32>
    %297 = vector.multi_reduction <maximumf>, %296, %cst_135 [1] : vector<16x16xf32> to vector<16xf32>
    %298 = vector.shape_cast %297 : vector<16xf32> to vector<16x1xf32>
    %299 = vector.broadcast %298 : vector<16x1xf32> to vector<16x16xf32>
    %300 = arith.subf %296, %299 : vector<16x16xf32>
    %301 = math.exp %300 : vector<16x16xf32>
    %cst_136 = arith.constant dense<0.000000e+00> : vector<16xf32>
    %302 = vector.multi_reduction <add>, %301, %cst_136 [1] : vector<16x16xf32> to vector<16xf32>
    %303 = vector.shape_cast %302 : vector<16xf32> to vector<16x1xf32>
    %304 = tpu.reciprocal %303 {approx = true} : vector<16x1xf32> -> vector<16x1xf32>
    %305 = vector.broadcast %304 : vector<16x1xf32> to vector<16x16xf32>
    %306 = arith.mulf %301, %305 : vector<16x16xf32>
    %cst_137 = arith.constant dense<0.000000e+00> : vector<16x8xf32>
    %307 = tpu.matmul %306, %292, %cst_137 {dimension_numbers = #tpu.dot_dimension_numbers<[1], [0], [0], [1], [0, 0, 1, 1], [], []>} : vector<16x16xf32>, vector<16x8xf32>, vector<16x8xf32> -> vector<16x8xf32>
    %308 = vector.extract_strided_slice %288 {offsets = [0, 0], sizes = [8, 32], strides = [1, 1]} : vector<32x32xf32> to vector<8x32xf32>
    %cst_138 = arith.constant dense<0.000000e+00> : vector<16x32xf32>
    %309 = tpu.matmul %307, %308, %cst_138 {dimension_numbers = #tpu.dot_dimension_numbers<[1], [0], [0], [1], [0, 0, 1, 1], [], []>} : vector<16x8xf32>, vector<8x32xf32>, vector<16x32xf32> -> vector<16x32xf32>
    %310 = arith.addf %289, %309 : vector<16x32xf32>
    %311 = vector.extract_strided_slice %282 {offsets = [0, 8], sizes = [16, 8], strides = [1, 1]} : vector<16x32xf32> to vector<16x8xf32>
    %312 = vector.extract_strided_slice %286 {offsets = [0, 8], sizes = [16, 8], strides = [1, 1]} : vector<16x32xf32> to vector<16x8xf32>
    %313 = vector.extract_strided_slice %278 {offsets = [0, 8], sizes = [16, 8], strides = [1, 1]} : vector<16x32xf32> to vector<16x8xf32>
    %cst_139 = arith.constant dense<0.000000e+00> : vector<16x16xf32>
    %314 = tpu.matmul %311, %312, %cst_139 {dimension_numbers = #tpu.dot_dimension_numbers<[1], [1], [0], [0], [0, 0, 1, 0], [], []>} : vector<16x8xf32>, vector<16x8xf32>, vector<16x16xf32> -> vector<16x16xf32>
    %cst_140 = arith.constant 0.353553385 : f32
    %315 = vector.broadcast %cst_140 : f32 to vector<16x16xf32>
    %316 = arith.mulf %314, %315 : vector<16x16xf32>
    %317 = arith.addf %316, %36 : vector<16x16xf32>
    %cst_141 = arith.constant dense<0xFF800000> : vector<16xf32>
    %318 = vector.multi_reduction <maximumf>, %317, %cst_141 [1] : vector<16x16xf32> to vector<16xf32>
    %319 = vector.shape_cast %318 : vector<16xf32> to vector<16x1xf32>
    %320 = vector.broadcast %319 : vector<16x1xf32> to vector<16x16xf32>
    %321 = arith.subf %317, %320 : vector<16x16xf32>
    %322 = math.exp %321 : vector<16x16xf32>
    %cst_142 = arith.constant dense<0.000000e+00> : vector<16xf32>
    %323 = vector.multi_reduction <add>, %322, %cst_142 [1] : vector<16x16xf32> to vector<16xf32>
    %324 = vector.shape_cast %323 : vector<16xf32> to vector<16x1xf32>
    %325 = tpu.reciprocal %324 {approx = true} : vector<16x1xf32> -> vector<16x1xf32>
    %326 = vector.broadcast %325 : vector<16x1xf32> to vector<16x16xf32>
    %327 = arith.mulf %322, %326 : vector<16x16xf32>
    %cst_143 = arith.constant dense<0.000000e+00> : vector<16x8xf32>
    %328 = tpu.matmul %327, %313, %cst_143 {dimension_numbers = #tpu.dot_dimension_numbers<[1], [0], [0], [1], [0, 0, 1, 1], [], []>} : vector<16x16xf32>, vector<16x8xf32>, vector<16x8xf32> -> vector<16x8xf32>
    %329 = vector.extract_strided_slice %288 {offsets = [8, 0], sizes = [8, 32], strides = [1, 1]} : vector<32x32xf32> to vector<8x32xf32>
    %cst_144 = arith.constant dense<0.000000e+00> : vector<16x32xf32>
    %330 = tpu.matmul %328, %329, %cst_144 {dimension_numbers = #tpu.dot_dimension_numbers<[1], [0], [0], [1], [0, 0, 1, 1], [], []>} : vector<16x8xf32>, vector<8x32xf32>, vector<16x32xf32> -> vector<16x32xf32>
    %331 = arith.addf %310, %330 : vector<16x32xf32>
    %332 = vector.extract_strided_slice %282 {offsets = [0, 16], sizes = [16, 8], strides = [1, 1]} : vector<16x32xf32> to vector<16x8xf32>
    %333 = vector.extract_strided_slice %286 {offsets = [0, 16], sizes = [16, 8], strides = [1, 1]} : vector<16x32xf32> to vector<16x8xf32>
    %334 = vector.extract_strided_slice %278 {offsets = [0, 16], sizes = [16, 8], strides = [1, 1]} : vector<16x32xf32> to vector<16x8xf32>
    %cst_145 = arith.constant dense<0.000000e+00> : vector<16x16xf32>
    %335 = tpu.matmul %332, %333, %cst_145 {dimension_numbers = #tpu.dot_dimension_numbers<[1], [1], [0], [0], [0, 0, 1, 0], [], []>} : vector<16x8xf32>, vector<16x8xf32>, vector<16x16xf32> -> vector<16x16xf32>
    %cst_146 = arith.constant 0.353553385 : f32
    %336 = vector.broadcast %cst_146 : f32 to vector<16x16xf32>
    %337 = arith.mulf %335, %336 : vector<16x16xf32>
    %338 = arith.addf %337, %36 : vector<16x16xf32>
    %cst_147 = arith.constant dense<0xFF800000> : vector<16xf32>
    %339 = vector.multi_reduction <maximumf>, %338, %cst_147 [1] : vector<16x16xf32> to vector<16xf32>
    %340 = vector.shape_cast %339 : vector<16xf32> to vector<16x1xf32>
    %341 = vector.broadcast %340 : vector<16x1xf32> to vector<16x16xf32>
    %342 = arith.subf %338, %341 : vector<16x16xf32>
    %343 = math.exp %342 : vector<16x16xf32>
    %cst_148 = arith.constant dense<0.000000e+00> : vector<16xf32>
    %344 = vector.multi_reduction <add>, %343, %cst_148 [1] : vector<16x16xf32> to vector<16xf32>
    %345 = vector.shape_cast %344 : vector<16xf32> to vector<16x1xf32>
    %346 = tpu.reciprocal %345 {approx = true} : vector<16x1xf32> -> vector<16x1xf32>
    %347 = vector.broadcast %346 : vector<16x1xf32> to vector<16x16xf32>
    %348 = arith.mulf %343, %347 : vector<16x16xf32>
    %cst_149 = arith.constant dense<0.000000e+00> : vector<16x8xf32>
    %349 = tpu.matmul %348, %334, %cst_149 {dimension_numbers = #tpu.dot_dimension_numbers<[1], [0], [0], [1], [0, 0, 1, 1], [], []>} : vector<16x16xf32>, vector<16x8xf32>, vector<16x8xf32> -> vector<16x8xf32>
    %350 = vector.extract_strided_slice %288 {offsets = [16, 0], sizes = [8, 32], strides = [1, 1]} : vector<32x32xf32> to vector<8x32xf32>
    %cst_150 = arith.constant dense<0.000000e+00> : vector<16x32xf32>
    %351 = tpu.matmul %349, %350, %cst_150 {dimension_numbers = #tpu.dot_dimension_numbers<[1], [0], [0], [1], [0, 0, 1, 1], [], []>} : vector<16x8xf32>, vector<8x32xf32>, vector<16x32xf32> -> vector<16x32xf32>
    %352 = arith.addf %331, %351 : vector<16x32xf32>
    %353 = vector.extract_strided_slice %282 {offsets = [0, 24], sizes = [16, 8], strides = [1, 1]} : vector<16x32xf32> to vector<16x8xf32>
    %354 = vector.extract_strided_slice %286 {offsets = [0, 24], sizes = [16, 8], strides = [1, 1]} : vector<16x32xf32> to vector<16x8xf32>
    %355 = vector.extract_strided_slice %278 {offsets = [0, 24], sizes = [16, 8], strides = [1, 1]} : vector<16x32xf32> to vector<16x8xf32>
    %cst_151 = arith.constant dense<0.000000e+00> : vector<16x16xf32>
    %356 = tpu.matmul %353, %354, %cst_151 {dimension_numbers = #tpu.dot_dimension_numbers<[1], [1], [0], [0], [0, 0, 1, 0], [], []>} : vector<16x8xf32>, vector<16x8xf32>, vector<16x16xf32> -> vector<16x16xf32>
    %cst_152 = arith.constant 0.353553385 : f32
    %357 = vector.broadcast %cst_152 : f32 to vector<16x16xf32>
    %358 = arith.mulf %356, %357 : vector<16x16xf32>
    %359 = arith.addf %358, %36 : vector<16x16xf32>
    %cst_153 = arith.constant dense<0xFF800000> : vector<16xf32>
    %360 = vector.multi_reduction <maximumf>, %359, %cst_153 [1] : vector<16x16xf32> to vector<16xf32>
    %361 = vector.shape_cast %360 : vector<16xf32> to vector<16x1xf32>
    %362 = vector.broadcast %361 : vector<16x1xf32> to vector<16x16xf32>
    %363 = arith.subf %359, %362 : vector<16x16xf32>
    %364 = math.exp %363 : vector<16x16xf32>
    %cst_154 = arith.constant dense<0.000000e+00> : vector<16xf32>
    %365 = vector.multi_reduction <add>, %364, %cst_154 [1] : vector<16x16xf32> to vector<16xf32>
    %366 = vector.shape_cast %365 : vector<16xf32> to vector<16x1xf32>
    %367 = tpu.reciprocal %366 {approx = true} : vector<16x1xf32> -> vector<16x1xf32>
    %368 = vector.broadcast %367 : vector<16x1xf32> to vector<16x16xf32>
    %369 = arith.mulf %364, %368 : vector<16x16xf32>
    %cst_155 = arith.constant dense<0.000000e+00> : vector<16x8xf32>
    %370 = tpu.matmul %369, %355, %cst_155 {dimension_numbers = #tpu.dot_dimension_numbers<[1], [0], [0], [1], [0, 0, 1, 1], [], []>} : vector<16x16xf32>, vector<16x8xf32>, vector<16x8xf32> -> vector<16x8xf32>
    %371 = vector.extract_strided_slice %288 {offsets = [24, 0], sizes = [8, 32], strides = [1, 1]} : vector<32x32xf32> to vector<8x32xf32>
    %cst_156 = arith.constant dense<0.000000e+00> : vector<16x32xf32>
    %372 = tpu.matmul %370, %371, %cst_156 {dimension_numbers = #tpu.dot_dimension_numbers<[1], [0], [0], [1], [0, 0, 1, 1], [], []>} : vector<16x8xf32>, vector<8x32xf32>, vector<16x32xf32> -> vector<16x32xf32>
    %373 = arith.addf %352, %372 : vector<16x32xf32>
    %374 = arith.mulf %243, %373 : vector<16x32xf32>
    %375 = arith.addf %233, %374 : vector<16x32xf32>
    %c1_157 = arith.constant 1 : index
    %c0_158 = arith.constant 0 : index
    %c0_159 = arith.constant 0 : index
    %376 = vector.load %arg17[%c1_157, %c0_158, %c0_159] : memref<2x1x32xf32, #tpu.memory_space<vmem>>, vector<1x1x32xf32>
    %377 = vector.shape_cast %376 : vector<1x1x32xf32> to vector<1x32xf32>
    %cst_160 = arith.constant dense<0.000000e+00> : vector<16xf32>
    %378 = vector.multi_reduction <add>, %375, %cst_160 [1] : vector<16x32xf32> to vector<16xf32>
    %379 = vector.shape_cast %378 : vector<16xf32> to vector<16x1xf32>
    %cst_161 = arith.constant 3.200000e+01 : f32
    %380 = vector.broadcast %cst_161 : f32 to vector<16x1xf32>
    %381 = arith.divf %379, %380 : vector<16x1xf32>
    %382 = vector.broadcast %381 : vector<16x1xf32> to vector<16x32xf32>
    %383 = arith.subf %375, %382 : vector<16x32xf32>
    %384 = arith.mulf %383, %383 : vector<16x32xf32>
    %cst_162 = arith.constant dense<0.000000e+00> : vector<16xf32>
    %385 = vector.multi_reduction <add>, %384, %cst_162 [1] : vector<16x32xf32> to vector<16xf32>
    %386 = vector.shape_cast %385 : vector<16xf32> to vector<16x1xf32>
    %cst_163 = arith.constant 3.200000e+01 : f32
    %387 = vector.broadcast %cst_163 : f32 to vector<16x1xf32>
    %388 = arith.divf %386, %387 : vector<16x1xf32>
    %389 = vector.broadcast %381 : vector<16x1xf32> to vector<16x32xf32>
    %390 = arith.subf %375, %389 : vector<16x32xf32>
    %cst_164 = arith.constant 9.99999974E-6 : f32
    %391 = vector.broadcast %cst_164 : f32 to vector<16x1xf32>
    %392 = arith.addf %388, %391 : vector<16x1xf32>
    %393 = math.rsqrt %392 : vector<16x1xf32>
    %394 = vector.broadcast %393 : vector<16x1xf32> to vector<16x32xf32>
    %395 = arith.mulf %390, %394 : vector<16x32xf32>
    %396 = vector.broadcast %377 : vector<1x32xf32> to vector<16x32xf32>
    %397 = arith.mulf %395, %396 : vector<16x32xf32>
    %cst_165 = arith.constant 1.000000e+00 : f32
    %398 = vector.broadcast %cst_165 : f32 to vector<16x32xf32>
    %399 = arith.addf %398, %245 : vector<16x32xf32>
    %400 = arith.mulf %397, %399 : vector<16x32xf32>
    %401 = arith.addf %400, %244 : vector<16x32xf32>
    %c1_166 = arith.constant 1 : index
    %c0_167 = arith.constant 0 : index
    %c0_168 = arith.constant 0 : index
    %402 = vector.load %arg18[%c1_166, %c0_167, %c0_168] : memref<2x32x128xf32, #tpu.memory_space<vmem>>, vector<1x32x128xf32>
    %403 = vector.shape_cast %402 : vector<1x32x128xf32> to vector<32x128xf32>
    %cst_169 = arith.constant dense<0.000000e+00> : vector<16x128xf32>
    %404 = tpu.matmul %401, %403, %cst_169 {dimension_numbers = #tpu.dot_dimension_numbers<[1], [0], [0], [1], [0, 0, 1, 1], [], []>} : vector<16x32xf32>, vector<32x128xf32>, vector<16x128xf32> -> vector<16x128xf32>
    %c1_170 = arith.constant 1 : index
    %c0_171 = arith.constant 0 : index
    %c0_172 = arith.constant 0 : index
    %405 = vector.load %arg19[%c1_170, %c0_171, %c0_172] : memref<2x1x128xf32, #tpu.memory_space<vmem>>, vector<1x1x128xf32>
    %406 = vector.shape_cast %405 : vector<1x1x128xf32> to vector<1x128xf32>
    %407 = vector.broadcast %406 : vector<1x128xf32> to vector<16x128xf32>
    %408 = arith.addf %404, %407 : vector<16x128xf32>
    %cst_173 = arith.constant 5.000000e-01 : f32
    %409 = vector.broadcast %cst_173 : f32 to vector<16x128xf32>
    %410 = arith.mulf %409, %408 : vector<16x128xf32>
    %cst_174 = arith.constant 4.471500e-02 : f32
    %411 = vector.broadcast %cst_174 : f32 to vector<16x128xf32>
    %412 = arith.mulf %411, %408 : vector<16x128xf32>
    %413 = arith.mulf %412, %408 : vector<16x128xf32>
    %414 = arith.mulf %413, %408 : vector<16x128xf32>
    %415 = arith.addf %408, %414 : vector<16x128xf32>
    %cst_175 = arith.constant 0.797884583 : f32
    %416 = vector.broadcast %cst_175 : f32 to vector<16x128xf32>
    %417 = arith.mulf %416, %415 : vector<16x128xf32>
    %418 = math.tanh %417 : vector<16x128xf32>
    %cst_176 = arith.constant 1.000000e+00 : f32
    %419 = vector.broadcast %cst_176 : f32 to vector<16x128xf32>
    %420 = arith.addf %419, %418 : vector<16x128xf32>
    %421 = arith.mulf %410, %420 : vector<16x128xf32>
    %c1_177 = arith.constant 1 : index
    %c0_178 = arith.constant 0 : index
    %c0_179 = arith.constant 0 : index
    %422 = vector.load %arg20[%c1_177, %c0_178, %c0_179] : memref<2x128x32xf32, #tpu.memory_space<vmem>>, vector<1x128x32xf32>
    %423 = vector.shape_cast %422 : vector<1x128x32xf32> to vector<128x32xf32>
    %cst_180 = arith.constant dense<0.000000e+00> : vector<16x32xf32>
    %424 = tpu.matmul %421, %423, %cst_180 {dimension_numbers = #tpu.dot_dimension_numbers<[1], [0], [0], [1], [0, 0, 1, 1], [], []>} : vector<16x128xf32>, vector<128x32xf32>, vector<16x32xf32> -> vector<16x32xf32>
    %c1_181 = arith.constant 1 : index
    %c0_182 = arith.constant 0 : index
    %c0_183 = arith.constant 0 : index
    %425 = vector.load %arg21[%c1_181, %c0_182, %c0_183] : memref<2x1x32xf32, #tpu.memory_space<vmem>>, vector<1x1x32xf32>
    %426 = vector.shape_cast %425 : vector<1x1x32xf32> to vector<1x32xf32>
    %427 = vector.broadcast %426 : vector<1x32xf32> to vector<16x32xf32>
    %428 = arith.addf %424, %427 : vector<16x32xf32>
    %429 = arith.mulf %246, %428 : vector<16x32xf32>
    %430 = arith.addf %375, %429 : vector<16x32xf32>
    %c0_184 = arith.constant 0 : index
    %c0_185 = arith.constant 0 : index
    %431 = vector.load %arg22[%c0_184, %c0_185] : memref<32x64xf32, #tpu.memory_space<vmem>>, vector<32x64xf32>
    %cst_186 = arith.constant dense<0.000000e+00> : vector<16x64xf32>
    %432 = tpu.matmul %32, %431, %cst_186 {dimension_numbers = #tpu.dot_dimension_numbers<[1], [0], [0], [1], [0, 0, 1, 1], [], []>} : vector<16x32xf32>, vector<32x64xf32>, vector<16x64xf32> -> vector<16x64xf32>
    %c0_187 = arith.constant 0 : index
    %c0_188 = arith.constant 0 : index
    %433 = vector.load %arg23[%c0_187, %c0_188] : memref<1x64xf32, #tpu.memory_space<vmem>>, vector<1x64xf32>
    %434 = vector.broadcast %433 : vector<1x64xf32> to vector<16x64xf32>
    %435 = arith.addf %432, %434 : vector<16x64xf32>
    %436 = vector.extract_strided_slice %435 {offsets = [0, 0], sizes = [16, 32], strides = [1, 1]} : vector<16x64xf32> to vector<16x32xf32>
    %437 = vector.extract_strided_slice %435 {offsets = [0, 32], sizes = [16, 32], strides = [1, 1]} : vector<16x64xf32> to vector<16x32xf32>
    %c0_189 = arith.constant 0 : index
    %c0_190 = arith.constant 0 : index
    %438 = vector.load %arg24[%c0_189, %c0_190] : memref<1x32xf32, #tpu.memory_space<vmem>>, vector<1x32xf32>
    %cst_191 = arith.constant dense<0.000000e+00> : vector<16xf32>
    %439 = vector.multi_reduction <add>, %430, %cst_191 [1] : vector<16x32xf32> to vector<16xf32>
    %440 = vector.shape_cast %439 : vector<16xf32> to vector<16x1xf32>
    %cst_192 = arith.constant 3.200000e+01 : f32
    %441 = vector.broadcast %cst_192 : f32 to vector<16x1xf32>
    %442 = arith.divf %440, %441 : vector<16x1xf32>
    %443 = vector.broadcast %442 : vector<16x1xf32> to vector<16x32xf32>
    %444 = arith.subf %430, %443 : vector<16x32xf32>
    %445 = arith.mulf %444, %444 : vector<16x32xf32>
    %cst_193 = arith.constant dense<0.000000e+00> : vector<16xf32>
    %446 = vector.multi_reduction <add>, %445, %cst_193 [1] : vector<16x32xf32> to vector<16xf32>
    %447 = vector.shape_cast %446 : vector<16xf32> to vector<16x1xf32>
    %cst_194 = arith.constant 3.200000e+01 : f32
    %448 = vector.broadcast %cst_194 : f32 to vector<16x1xf32>
    %449 = arith.divf %447, %448 : vector<16x1xf32>
    %450 = vector.broadcast %442 : vector<16x1xf32> to vector<16x32xf32>
    %451 = arith.subf %430, %450 : vector<16x32xf32>
    %cst_195 = arith.constant 9.99999974E-6 : f32
    %452 = vector.broadcast %cst_195 : f32 to vector<16x1xf32>
    %453 = arith.addf %449, %452 : vector<16x1xf32>
    %454 = math.rsqrt %453 : vector<16x1xf32>
    %455 = vector.broadcast %454 : vector<16x1xf32> to vector<16x32xf32>
    %456 = arith.mulf %451, %455 : vector<16x32xf32>
    %457 = vector.broadcast %438 : vector<1x32xf32> to vector<16x32xf32>
    %458 = arith.mulf %456, %457 : vector<16x32xf32>
    %cst_196 = arith.constant 1.000000e+00 : f32
    %459 = vector.broadcast %cst_196 : f32 to vector<16x32xf32>
    %460 = arith.addf %459, %437 : vector<16x32xf32>
    %461 = arith.mulf %458, %460 : vector<16x32xf32>
    %462 = arith.addf %461, %436 : vector<16x32xf32>
    %c0_197 = arith.constant 0 : index
    %c0_198 = arith.constant 0 : index
    %463 = vector.load %arg25[%c0_197, %c0_198] : memref<32x16xf32, #tpu.memory_space<vmem>>, vector<32x16xf32>
    %cst_199 = arith.constant dense<0.000000e+00> : vector<16x16xf32>
    %464 = tpu.matmul %462, %463, %cst_199 {dimension_numbers = #tpu.dot_dimension_numbers<[1], [0], [0], [1], [0, 0, 1, 1], [], []>} : vector<16x32xf32>, vector<32x16xf32>, vector<16x16xf32> -> vector<16x16xf32>
    %c0_200 = arith.constant 0 : index
    %c0_201 = arith.constant 0 : index
    %465 = vector.load %arg26[%c0_200, %c0_201] : memref<1x16xf32, #tpu.memory_space<vmem>>, vector<1x16xf32>
    %466 = vector.broadcast %465 : vector<1x16xf32> to vector<16x16xf32>
    %467 = arith.addf %464, %466 : vector<16x16xf32>
    %c0_202 = arith.constant 0 : index
    %c0_203 = arith.constant 0 : index
    %468 = vector.load %arg27[%c0_202, %c0_203] : memref<16x16xf32, #tpu.memory_space<vmem>>, vector<16x16xf32>
    tpu.vector_store %arg27[%c0_202, %c0_203], %467 {strides = array<i32>} : memref<16x16xf32, #tpu.memory_space<vmem>>, vector<16x16xf32>,
    return
  }
}

</mosaic_0001>

<llo_original>
// kernel: tile.18
$region0: #{tile.18}
  #allocation0 [shape = 's32[1]{0}', space=sflag, size = 0x4, scoped, tag = 'scoped memory for tile.18']
  %s0 = inlined_call_operand.vmem [shape: f32[8,8], index: 0, kind: input, shape index: {}]
  %s1 = inlined_call_operand.vmem [shape: f32[2,8,4,8], index: 1, kind: output, shape index: {}]
  // Predicated region
  $region2: #{tile.18} parent=0 // pred_check
    _
  $region3: #{tile.18} parent=0 // pred_check_branch
    %3 = sbr.rel (0) target = $region5
  $region4: #{tile.18} parent=0 // pred_region
    _
  $region5: #{tile.18} parent=0 // pred_fallthru
    _
  %v4 = vld [vmem:[%s0] ss:$0 sm:$0xff]
  %5 = vst [vmem:[%s1] sm:$0xf] %v4
  %s6 = scalar_lea.vmem %s1, 32
  %7 = vst [vmem:[%s6] sm:$0xf] %v4
  %s8 = scalar_lea.vmem %s0, 1
  %v9 = vld [vmem:[%s8] ss:$0 sm:$0xff]
  %s10 = scalar_lea.vmem %s1, 4
  %11 = vst [vmem:[%s10] sm:$0xf] %v9
  %s12 = scalar_lea.vmem %s1, 36
  %13 = vst [vmem:[%s12] sm:$0xf] %v9
  %s14 = scalar_lea.vmem %s0, 2
  %v15 = vld [vmem:[%s14] ss:$0 sm:$0xff]
  %s16 = scalar_lea.vmem %s1, 8
  %17 = vst [vmem:[%s16] sm:$0xf] %v15
  %s18 = scalar_lea.vmem %s1, 40
  %19 = vst [vmem:[%s18] sm:$0xf] %v15
  %s20 = scalar_lea.vmem %s0, 3
  %v21 = vld [vmem:[%s20] ss:$0 sm:$0xff]
  %s22 = scalar_lea.vmem %s1, 12
  %23 = vst [vmem:[%s22] sm:$0xf] %v21
  %s24 = scalar_lea.vmem %s1, 44
  %25 = vst [vmem:[%s24] sm:$0xf] %v21
  %s26 = scalar_lea.vmem %s0, 4
  %v27 = vld [vmem:[%s26] ss:$0 sm:$0xff]
  %s28 = scalar_lea.vmem %s1, 16
  %29 = vst [vmem:[%s28] sm:$0xf] %v27
  %s30 = scalar_lea.vmem %s1, 48
  %31 = vst [vmem:[%s30] sm:$0xf] %v27
  %s32 = scalar_lea.vmem %s0, 5
  %v33 = vld [vmem:[%s32] ss:$0 sm:$0xff]
  %s34 = scalar_lea.vmem %s1, 20
  %35 = vst [vmem:[%s34] sm:$0xf] %v33
  %s36 = scalar_lea.vmem %s1, 52
  %37 = vst [vmem:[%s36] sm:$0xf] %v33
  %s38 = scalar_lea.vmem %s0, 6
  %v39 = vld [vmem:[%s38] ss:$0 sm:$0xff]
  %s40 = scalar_lea.vmem %s1, 24
  %41 = vst [vmem:[%s40] sm:$0xf] %v39
  %s42 = scalar_lea.vmem %s1, 56
  %43 = vst [vmem:[%s42] sm:$0xf] %v39
  %s44 = scalar_lea.vmem %s0, 7
  %v45 = vld [vmem:[%s44] ss:$0 sm:$0xff]
  %s46 = scalar_lea.vmem %s1, 28
  %47 = vst [vmem:[%s46] sm:$0xf] %v45
  %s48 = scalar_lea.vmem %s1, 60
  %49 = vst [vmem:[%s48] sm:$0xf] %v45

// kernel: tile.19
$region0: #{tile.19}
  %s0 = inlined_call_operand.vmem [shape: f32[2,8,4,8], index: 0, kind: input, shape index: {}]
  %s1 = inlined_call_operand.vmem [shape: f32[16,32], index: 1, kind: output, shape index: {}]
  $region1: #{tile.19} parent=0
    #allocation0 [shape = 'u8[65536]{0}', space=vmem, size = 0x10000, scoped, tag = 'scoped mem for input reshape']
    %s3 = sshll.u32 1, 4
    %s4 = ssub.s32 %s3, 1
    %s5 = smul.addr 4, 15
    %s6 = scalar_lea.vmem %s0, %s5
    %v7 = vld [vmem:[%s6] sm:%s4]
    %s8 = scalar_lea.vmem [#allocation0], 120
    %9 = vst [vmem:[%s8] sm:%s4] %v7
    %s10 = smul.addr 4, 14
    %s11 = scalar_lea.vmem %s0, %s10
    %v12 = vld [vmem:[%s11] sm:%s4]
    %s13 = scalar_lea.vmem [#allocation0], 112
    %14 = vst [vmem:[%s13] sm:%s4] %v12
    %s15 = smul.addr 4, 13
    %s16 = scalar_lea.vmem %s0, %s15
    %v17 = vld [vmem:[%s16] sm:%s4]
    %s18 = scalar_lea.vmem [#allocation0], 104
    %19 = vst [vmem:[%s18] sm:%s4] %v17
    %s20 = smul.addr 4, 12
    %s21 = scalar_lea.vmem %s0, %s20
    %v22 = vld [vmem:[%s21] sm:%s4]
    %s23 = scalar_lea.vmem [#allocation0], 96
    %24 = vst [vmem:[%s23] sm:%s4] %v22
    %s25 = smul.addr 4, 11
    %s26 = scalar_lea.vmem %s0, %s25
    %v27 = vld [vmem:[%s26] sm:%s4]
    %s28 = scalar_lea.vmem [#allocation0], 88
    %29 = vst [vmem:[%s28] sm:%s4] %v27
    %s30 = smul.addr 4, 10
    %s31 = scalar_lea.vmem %s0, %s30
    %v32 = vld [vmem:[%s31] sm:%s4]
    %s33 = scalar_lea.vmem [#allocation0], 80
    %34 = vst [vmem:[%s33] sm:%s4] %v32
    %s35 = smul.addr 4, 9
    %s36 = scalar_lea.vmem %s0, %s35
    %v37 = vld [vmem:[%s36] sm:%s4]
    %s38 = scalar_lea.vmem [#allocation0], 72
    %39 = vst [vmem:[%s38] sm:%s4] %v37
    %s40 = smul.addr 4, 8
    %s41 = scalar_lea.vmem %s0, %s40
    %v42 = vld [vmem:[%s41] sm:%s4]
    %s43 = scalar_lea.vmem [#allocation0], 64
    %44 = vst [vmem:[%s43] sm:%s4] %v42
    %s45 = smul.addr 4, 7
    %s46 = scalar_lea.vmem %s0, %s45
    %v47 = vld [vmem:[%s46] sm:%s4]
    %s48 = scalar_lea.vmem [#allocation0], 56
    %49 = vst [vmem:[%s48] sm:%s4] %v47
    %s50 = smul.addr 4, 6
    %s51 = scalar_lea.vmem %s0, %s50
    %v52 = vld [vmem:[%s51] sm:%s4]
    %s53 = scalar_lea.vmem [#allocation0], 48
    %54 = vst [vmem:[%s53] sm:%s4] %v52
    %s55 = smul.addr 4, 5
    %s56 = scalar_lea.vmem %s0, %s55
    %v57 = vld [vmem:[%s56] sm:%s4]
    %s58 = scalar_lea.vmem [#allocation0], 40
    %59 = vst [vmem:[%s58] sm:%s4] %v57
    %s60 = smul.addr 4, 4
    %s61 = scalar_lea.vmem %s0, %s60
    %v62 = vld [vmem:[%s61] sm:%s4]
    %s63 = scalar_lea.vmem [#allocation0], 32
    %64 = vst [vmem:[%s63] sm:%s4] %v62
    %s65 = smul.addr 4, 3
    %s66 = scalar_lea.vmem %s0, %s65
    %v67 = vld [vmem:[%s66] sm:%s4]
    %s68 = scalar_lea.vmem [#allocation0], 24
    %69 = vst [vmem:[%s68] sm:%s4] %v67
    %s70 = smul.addr 4, 2
    %s71 = scalar_lea.vmem %s0, %s70
    %v72 = vld [vmem:[%s71] sm:%s4]
    %s73 = scalar_lea.vmem [#allocation0], 16
    %74 = vst [vmem:[%s73] sm:%s4] %v72
    %s75 = scalar_lea.vmem %s0, 4
    %v76 = vld [vmem:[%s75] sm:%s4]
    %s77 = scalar_lea.vmem [#allocation0], 8
    %78 = vst [vmem:[%s77] sm:%s4] %v76
    %v79 = vld [vmem:[%s0] sm:%s4]
    %80 = vst [vmem:[#allocation0] sm:%s4] %v79
    %v81 = vld [vmem:[#allocation0] ss:$8 sm:$0xf]
    %v82 = vld [vmem:[#allocation0] ss:$8 sm:$0xf0]
    %vm83 = vcmask 1047556
    %v84 = vsel %vm83, %v82, %v81
    %vm85 = vcmask 64512
    %86 = vst.msk [vmem:[%s1] sm:$0xff] %vm85, %v84
    %s87 = scalar_lea.vmem [#allocation0], 64
    %v88 = vld [vmem:[%s87] ss:$8 sm:$0xf]
    %s89 = scalar_lea.vmem [#allocation0], 64
    %v90 = vld [vmem:[%s89] ss:$8 sm:$0xf0]
    %vm91 = vcmask 1047556
    %v92 = vsel %vm91, %v90, %v88
    %vm93 = vcmask 64512
    %s94 = scalar_lea.vmem %s1, 8
    %95 = vst.msk [vmem:[%s94] sm:$0xff] %vm93, %v92
    %s96 = scalar_lea.vmem [#allocation0], 3
    %v97 = vld [vmem:[%s96] ss:$8 sm:$0xf]
    %s98 = scalar_lea.vmem [#allocation0], 3
    %v99 = vld [vmem:[%s98] ss:$8 sm:$0xf0]
    %vm100 = vcmask 1047556
    %v101 = vsel %vm100, %v99, %v97
    %102 = vrot.lane.b32.xlu0 %v101, 24
    %v103 = vpop.permute.xlu0 %102
    %vm104 = vcmask 261312
    %105 = vst.msk [vmem:[%s1] sm:$0xff] %vm104, %v103
    %s106 = scalar_lea.vmem [#allocation0], 67
    %v107 = vld [vmem:[%s106] ss:$8 sm:$0xf]
    %s108 = scalar_lea.vmem [#allocation0], 67
    %v109 = vld [vmem:[%s108] ss:$8 sm:$0xf0]
    %vm110 = vcmask 1047556
    %v111 = vsel %vm110, %v109, %v107
    %112 = vrot.lane.b32.xlu0 %v111, 24
    %v113 = vpop.permute.xlu0 %112
    %vm114 = vcmask 261312
    %s115 = scalar_lea.vmem %s1, 8
    %116 = vst.msk [vmem:[%s115] sm:$0xff] %vm114, %v113
    %s117 = scalar_lea.vmem [#allocation0], 2
    %v118 = vld [vmem:[%s117] ss:$8 sm:$0xf]
    %s119 = scalar_lea.vmem [#allocation0], 2
    %v120 = vld [vmem:[%s119] ss:$8 sm:$0xf0]
    %vm121 = vcmask 1047556
    %v122 = vsel %vm121, %v120, %v118
    %123 = vrot.lane.b32.xlu0 %v122, 16
    %v124 = vpop.permute.xlu0 %123
    %vm125 = vcmask 195712
    %126 = vst.msk [vmem:[%s1] sm:$0xff] %vm125, %v124
    %s127 = scalar_lea.vmem [#allocation0], 66
    %v128 = vld [vmem:[%s127] ss:$8 sm:$0xf]
    %s129 = scalar_lea.vmem [#allocation0], 66
    %v130 = vld [vmem:[%s129] ss:$8 sm:$0xf0]
    %vm131 = vcmask 1047556
    %v132 = vsel %vm131, %v130, %v128
    %133 = vrot.lane.b32.xlu0 %v132, 16
    %v134 = vpop.permute.xlu0 %133
    %vm135 = vcmask 195712
    %s136 = scalar_lea.vmem %s1, 8
    %137 = vst.msk [vmem:[%s136] sm:$0xff] %vm135, %v134
    %s138 = scalar_lea.vmem [#allocation0], 1
    %v139 = vld [vmem:[%s138] ss:$8 sm:$0xf]
    %s140 = scalar_lea.vmem [#allocation0], 1
    %v141 = vld [vmem:[%s140] ss:$8 sm:$0xf0]
    %vm142 = vcmask 1047556
    %v143 = vsel %vm142, %v141, %v139
    %144 = vrot.lane.b32.xlu0 %v143, 8
    %v145 = vpop.permute.xlu0 %144
    %vm146 = vcmask 130112
    %147 = vst.msk [vmem:[%s1] sm:$0xff] %vm146, %v145
    %s148 = scalar_lea.vmem [#allocation0], 65
    %v149 = vld [vmem:[%s148] ss:$8 sm:$0xf]
    %s150 = scalar_lea.vmem [#allocation0], 65
    %v151 = vld [vmem:[%s150] ss:$8 sm:$0xf0]
    %vm152 = vcmask 1047556
    %v153 = vsel %vm152, %v151, %v149
    %154 = vrot.lane.b32.xlu0 %v153, 8
    %v155 = vpop.permute.xlu0 %154
    %vm156 = vcmask 130112
    %s157 = scalar_lea.vmem %s1, 8
    %158 = vst.msk [vmem:[%s157] sm:$0xff] %vm156, %v155

// kernel: decoder_forward.1
$region0: #{decoder_forward.1}
  #allocation0 [shape = 'u32[]', space=smem, size = 0x4, offset = 0x4, fixed_abs, tag = 'smem constant byte address 0x4 - core index']
  #allocation1 [shape = 'u32[144,128]{1,0:T(1,128)}', space=vmem, size = 0x12000, scoped, tag = 'internal scratch']
  %s0 = inlined_call_operand.vmem [shape: f32[16,16], index: 0, kind: input, shape index: {}]
  %s1 = inlined_call_operand.vmem [shape: f32[16,256], index: 1, kind: input, shape index: {}]
  %s2 = inlined_call_operand.vmem [shape: f32[16,32], index: 2, kind: input, shape index: {}]
  %s3 = inlined_call_operand.vmem [shape: f32[16,32], index: 3, kind: input, shape index: {}]
  %s4 = inlined_call_operand.vmem [shape: f32[32,32], index: 4, kind: input, shape index: {}]
  %s5 = inlined_call_operand.vmem [shape: f32[16,16], index: 5, kind: input, shape index: {}]
  %s6 = inlined_call_operand.vmem [shape: f32[16,32], index: 6, kind: input, shape index: {}]
  %s7 = inlined_call_operand.vmem [shape: f32[1,32], index: 7, kind: input, shape index: {}]
  %s8 = inlined_call_operand.vmem [shape: f32[256,32], index: 8, kind: input, shape index: {}]
  %s9 = inlined_call_operand.vmem [shape: f32[1,32], index: 9, kind: input, shape index: {}]
  %s10 = inlined_call_operand.vmem [shape: f32[32,32], index: 10, kind: input, shape index: {}]
  %s11 = inlined_call_operand.vmem [shape: f32[1,32], index: 11, kind: input, shape index: {}]
  %s12 = inlined_call_operand.vmem [shape: f32[2,32,192], index: 12, kind: input, shape index: {}]
  %s13 = inlined_call_operand.vmem [shape: f32[2,1,192], index: 13, kind: input, shape index: {}]
  %s14 = inlined_call_operand.vmem [shape: f32[2,1,32], index: 14, kind: input, shape index: {}]
  %s15 = inlined_call_operand.vmem [shape: f32[2,32,96], index: 15, kind: input, shape index: {}]
  %s16 = inlined_call_operand.vmem [shape: f32[2,32,32], index: 16, kind: input, shape index: {}]
  %s17 = inlined_call_operand.vmem [shape: f32[2,1,32], index: 17, kind: input, shape index: {}]
  %s18 = inlined_call_operand.vmem [shape: f32[2,32,128], index: 18, kind: input, shape index: {}]
  %s19 = inlined_call_operand.vmem [shape: f32[2,1,128], index: 19, kind: input, shape index: {}]
  %s20 = inlined_call_operand.vmem [shape: f32[2,128,32], index: 20, kind: input, shape index: {}]
  %s21 = inlined_call_operand.vmem [shape: f32[2,1,32], index: 21, kind: input, shape index: {}]
  %s22 = inlined_call_operand.vmem [shape: f32[32,64], index: 22, kind: input, shape index: {}]
  %s23 = inlined_call_operand.vmem [shape: f32[1,64], index: 23, kind: input, shape index: {}]
  %s24 = inlined_call_operand.vmem [shape: f32[1,32], index: 24, kind: input, shape index: {}]
  %s25 = inlined_call_operand.vmem [shape: f32[32,16], index: 25, kind: input, shape index: {}]
  %s26 = inlined_call_operand.vmem [shape: f32[1,16], index: 26, kind: input, shape index: {}]
  %s27 = inlined_call_operand.hbm [shape: f32[16,16], index: 27, kind: output, shape index: {}]
  %s28 = sld [smem:[#allocation0]]
  $region118: #{decoder_forward.1} parent=0
    _
  %s30 = ssub.s32 1, %s28
  %s31 = scalar_select 0, %s30, %s28
  $region1: #{decoder_forward.1} parent=0
    #allocation2 [shape = 'u8[8192]{0}', space=vmem, size = 0x2000, scoped, tag = 'output window, operand 0, single buffered']
    #allocation3 [shape = 's32[1]{0}', space=sflag, size = 0x4, scoped, tag = 'scoped memory for decoder_forward.1']
    %32 = vsyncpa [#allocation3], 0
    // Predicated region
    $region2: #{decoder_forward.1} parent=1 // pred_check
      _
    $region3: #{decoder_forward.1} parent=1 // pred_check_branch
      %34 = sbr.rel (0) target = $region5
    $region4: #{decoder_forward.1} parent=1 // pred_region
      _
    $region5: #{decoder_forward.1} parent=1 // pred_fallthru
      _
    // Predicated region
    $region6: #{decoder_forward.1} parent=1 // pred_check
      _
    $region7: #{decoder_forward.1} parent=1 // pred_check_branch
      %36 = sbr.rel (0) target = $region9
    $region8: #{decoder_forward.1} parent=1 // pred_region
      _
    $region9: #{decoder_forward.1} parent=1 // pred_fallthru
      _
    // Predicated region
    $region10: #{decoder_forward.1} parent=1 // pred_check
      _
    $region11: #{decoder_forward.1} parent=1 // pred_check_branch
      %38 = sbr.rel (0) target = $region13
    $region12: #{decoder_forward.1} parent=1 // pred_region
      _
    $region13: #{decoder_forward.1} parent=1 // pred_fallthru
      _
    // Predicated region
    $region14: #{decoder_forward.1} parent=1 // pred_check
      _
    $region15: #{decoder_forward.1} parent=1 // pred_check_branch
      %40 = sbr.rel (0) target = $region17
    $region16: #{decoder_forward.1} parent=1 // pred_region
      _
    $region17: #{decoder_forward.1} parent=1 // pred_fallthru
      _
    // Predicated region
    $region18: #{decoder_forward.1} parent=1 // pred_check
      _
    $region19: #{decoder_forward.1} parent=1 // pred_check_branch
      %42 = sbr.rel (0) target = $region21
    $region20: #{decoder_forward.1} parent=1 // pred_region
      _
    $region21: #{decoder_forward.1} parent=1 // pred_fallthru
      _
    // Predicated region
    $region22: #{decoder_forward.1} parent=1 // pred_check
      _
    $region23: #{decoder_forward.1} parent=1 // pred_check_branch
      %44 = sbr.rel (0) target = $region25
    $region24: #{decoder_forward.1} parent=1 // pred_region
      _
    $region25: #{decoder_forward.1} parent=1 // pred_fallthru
      _
    // Predicated region
    $region26: #{decoder_forward.1} parent=1 // pred_check
      _
    $region27: #{decoder_forward.1} parent=1 // pred_check_branch
      %46 = sbr.rel (0) target = $region29
    $region28: #{decoder_forward.1} parent=1 // pred_region
      _
    $region29: #{decoder_forward.1} parent=1 // pred_fallthru
      _
    // Predicated region
    $region30: #{decoder_forward.1} parent=1 // pred_check
      _
    $region31: #{decoder_forward.1} parent=1 // pred_check_branch
      %48 = sbr.rel (0) target = $region33
    $region32: #{decoder_forward.1} parent=1 // pred_region
      _
    $region33: #{decoder_forward.1} parent=1 // pred_fallthru
      _
    // Predicated region
    $region34: #{decoder_forward.1} parent=1 // pred_check
      _
    $region35: #{decoder_forward.1} parent=1 // pred_check_branch
      %50 = sbr.rel (0) target = $region37
    $region36: #{decoder_forward.1} parent=1 // pred_region
      _
    $region37: #{decoder_forward.1} parent=1 // pred_fallthru
      _
    // Predicated region
    $region38: #{decoder_forward.1} parent=1 // pred_check
      _
    $region39: #{decoder_forward.1} parent=1 // pred_check_branch
      %52 = sbr.rel (0) target = $region41
    $region40: #{decoder_forward.1} parent=1 // pred_region
      _
    $region41: #{decoder_forward.1} parent=1 // pred_fallthru
      _
    // Predicated region
    $region42: #{decoder_forward.1} parent=1 // pred_check
      _
    $region43: #{decoder_forward.1} parent=1 // pred_check_branch
      %54 = sbr.rel (0) target = $region45
    $region44: #{decoder_forward.1} parent=1 // pred_region
      _
    $region45: #{decoder_forward.1} parent=1 // pred_fallthru
      _
    // Predicated region
    $region46: #{decoder_forward.1} parent=1 // pred_check
      _
    $region47: #{decoder_forward.1} parent=1 // pred_check_branch
      %56 = sbr.rel (0) target = $region49
    $region48: #{decoder_forward.1} parent=1 // pred_region
      _
    $region49: #{decoder_forward.1} parent=1 // pred_fallthru
      _
    // Predicated region
    $region50: #{decoder_forward.1} parent=1 // pred_check
      _
    $region51: #{decoder_forward.1} parent=1 // pred_check_branch
      %58 = sbr.rel (0) target = $region53
    $region52: #{decoder_forward.1} parent=1 // pred_region
      _
    $region53: #{decoder_forward.1} parent=1 // pred_fallthru
      _
    // Predicated region
    $region54: #{decoder_forward.1} parent=1 // pred_check
      _
    $region55: #{decoder_forward.1} parent=1 // pred_check_branch
      %60 = sbr.rel (0) target = $region57
    $region56: #{decoder_forward.1} parent=1 // pred_region
      _
    $region57: #{decoder_forward.1} parent=1 // pred_fallthru
      _
    // Predicated region
    $region58: #{decoder_forward.1} parent=1 // pred_check
      _
    $region59: #{decoder_forward.1} parent=1 // pred_check_branch
      %62 = sbr.rel (0) target = $region61
    $region60: #{decoder_forward.1} parent=1 // pred_region
      _
    $region61: #{decoder_forward.1} parent=1 // pred_fallthru
      _
    // Predicated region
    $region62: #{decoder_forward.1} parent=1 // pred_check
      _
    $region63: #{decoder_forward.1} parent=1 // pred_check_branch
      %64 = sbr.rel (0) target = $region65
    $region64: #{decoder_forward.1} parent=1 // pred_region
      _
    $region65: #{decoder_forward.1} parent=1 // pred_fallthru
      _
    // Predicated region
    $region66: #{decoder_forward.1} parent=1 // pred_check
      _
    $region67: #{decoder_forward.1} parent=1 // pred_check_branch
      %66 = sbr.rel (0) target = $region69
    $region68: #{decoder_forward.1} parent=1 // pred_region
      _
    $region69: #{decoder_forward.1} parent=1 // pred_fallthru
      _
    // Predicated region
    $region70: #{decoder_forward.1} parent=1 // pred_check
      _
    $region71: #{decoder_forward.1} parent=1 // pred_check_branch
      %68 = sbr.rel (0) target = $region73
    $region72: #{decoder_forward.1} parent=1 // pred_region
      _
    $region73: #{decoder_forward.1} parent=1 // pred_fallthru
      _
    // Predicated region
    $region74: #{decoder_forward.1} parent=1 // pred_check
      _
    $region75: #{decoder_forward.1} parent=1 // pred_check_branch
      %70 = sbr.rel (0) target = $region77
    $region76: #{decoder_forward.1} parent=1 // pred_region
      _
    $region77: #{decoder_forward.1} parent=1 // pred_fallthru
      _
    // Predicated region
    $region78: #{decoder_forward.1} parent=1 // pred_check
      _
    $region79: #{decoder_forward.1} parent=1 // pred_check_branch
      %72 = sbr.rel (0) target = $region81
    $region80: #{decoder_forward.1} parent=1 // pred_region
      _
    $region81: #{decoder_forward.1} parent=1 // pred_fallthru
      _
    // Predicated region
    $region82: #{decoder_forward.1} parent=1 // pred_check
      _
    $region83: #{decoder_forward.1} parent=1 // pred_check_branch
      %74 = sbr.rel (0) target = $region85
    $region84: #{decoder_forward.1} parent=1 // pred_region
      _
    $region85: #{decoder_forward.1} parent=1 // pred_fallthru
      _
    // Predicated region
    $region86: #{decoder_forward.1} parent=1 // pred_check
      _
    $region87: #{decoder_forward.1} parent=1 // pred_check_branch
      %76 = sbr.rel (0) target = $region89
    $region88: #{decoder_forward.1} parent=1 // pred_region
      _
    $region89: #{decoder_forward.1} parent=1 // pred_fallthru
      _
    // Predicated region
    $region90: #{decoder_forward.1} parent=1 // pred_check
      _
    $region91: #{decoder_forward.1} parent=1 // pred_check_branch
      %78 = sbr.rel (0) target = $region93
    $region92: #{decoder_forward.1} parent=1 // pred_region
      _
    $region93: #{decoder_forward.1} parent=1 // pred_fallthru
      _
    // Predicated region
    $region94: #{decoder_forward.1} parent=1 // pred_check
      _
    $region95: #{decoder_forward.1} parent=1 // pred_check_branch
      %80 = sbr.rel (0) target = $region97
    $region96: #{decoder_forward.1} parent=1 // pred_region
      _
    $region97: #{decoder_forward.1} parent=1 // pred_fallthru
      _
    // Predicated region
    $region98: #{decoder_forward.1} parent=1 // pred_check
      _
    $region99: #{decoder_forward.1} parent=1 // pred_check_branch
      %82 = sbr.rel (0) target = $region101
    $region100: #{decoder_forward.1} parent=1 // pred_region
      _
    $region101: #{decoder_forward.1} parent=1 // pred_fallthru
      _
    // Predicated region
    $region102: #{decoder_forward.1} parent=1 // pred_check
      _
    $region103: #{decoder_forward.1} parent=1 // pred_check_branch
      %84 = sbr.rel (0) target = $region105
    $region104: #{decoder_forward.1} parent=1 // pred_region
      _
    $region105: #{decoder_forward.1} parent=1 // pred_fallthru
      _
    // Predicated region
    $region106: #{decoder_forward.1} parent=1 // pred_check
      _
    $region107: #{decoder_forward.1} parent=1 // pred_check_branch
      %86 = sbr.rel (0) target = $region109
    $region108: #{decoder_forward.1} parent=1 // pred_region
      _
    $region109: #{decoder_forward.1} parent=1 // pred_fallthru
      _
    %v87 = vld [vmem:[%s0] sm:$0xff]
    %v88 = vld [vmem:[%s0 + $0x8] sm:$0xff]
    %v89 = vld [vmem:[%s6] sm:$0xff]
    %v90 = vld [vmem:[%s6 + $0x8] sm:$0xff]
    %v91 = vld [vmem:[%s7] sm:$0x1]
    %v93 = vlaneseq
    %v94 = vshrl.u32 %v93, 7
    %v95 = vsub.s32 0, %v94
    %v96 = vrot.slane %v91, %v95
    %vm98 = vcmask 130048
    %v100 = vsel %vm98, %v87, 0
    %v103 = vsel %vm98, %v88, 0
    %105 = vmatprep.subr.mxu0 0.0
    %106 = vmatpush1.msra.mxu0 0.0
    %107 = vmatprep.subr.mxu0 0.0
    %108 = vmatpush1.msra.mxu0 0.0
    %109 = vmatprep.subr.mxu0 0.0
    %110 = vmatpush1.msra.mxu0 0.0
    %111 = vmatprep.subr.mxu0 0.0
    %112 = vmatpush1.msra.mxu0 0.0
    %113 = vmatprep.subr.mxu0 0.0
    %114 = vmatpush1.msra.mxu0 0.0
    %115 = vmatprep.subr.mxu0 0.0
    %116 = vmatpush1.msra.mxu0 0.0
    %117 = vmatprep.subr.mxu0 0.0
    %118 = vmatpush1.msra.mxu0 0.0
    %119 = vmatprep.subr.mxu0 0.0
    %120 = vmatpush1.msra.mxu0 0.0
    %121 = vmatprep.subr.mxu0 0.0
    %122 = vmatpush1.msra.mxu0 0.0
    %123 = vmatprep.subr.mxu0 0.0
    %124 = vmatpush1.msra.mxu0 0.0
    %125 = vmatprep.subr.mxu0 0.0
    %126 = vmatpush1.msra.mxu0 0.0
    %127 = vmatprep.subr.mxu0 0.0
    %128 = vmatpush1.msra.mxu0 0.0
    %129 = vmatprep.subr.mxu0 0.0
    %130 = vmatpush1.msra.mxu0 0.0
    %131 = vmatprep.subr.mxu0 0.0
    %132 = vmatpush1.msra.mxu0 0.0
    %133 = vmatprep.subr.mxu0 0.0
    %134 = vmatpush1.msra.mxu0 %v90
    %135 = vmatprep.subr.mxu0 0.0
    %136 = vmatpush1.msra.mxu0 %v89
    %137 = vmatprep.subr.mxu0 0.0
    %138 = vmatpush2.msra.mxu0 0.0
    %139 = vmatprep.subr.mxu0 0.0
    %140 = vmatpush2.msra.mxu0 0.0
    %141 = vmatprep.subr.mxu0 0.0
    %142 = vmatpush2.msra.mxu0 0.0
    %143 = vmatprep.subr.mxu0 0.0
    %144 = vmatpush2.msra.mxu0 0.0
    %145 = vmatprep.subr.mxu0 0.0
    %146 = vmatpush2.msra.mxu0 0.0
    %147 = vmatprep.subr.mxu0 0.0
    %148 = vmatpush2.msra.mxu0 0.0
    %149 = vmatprep.subr.mxu0 0.0
    %150 = vmatpush2.msra.mxu0 0.0
    %151 = vmatprep.subr.mxu0 0.0
    %152 = vmatpush2.msra.mxu0 0.0
    %153 = vmatprep.subr.mxu0 0.0
    %154 = vmatpush2.msra.mxu0 0.0
    %155 = vmatprep.subr.mxu0 0.0
    %156 = vmatpush2.msra.mxu0 0.0
    %157 = vmatprep.subr.mxu0 0.0
    %158 = vmatpush2.msra.mxu0 0.0
    %159 = vmatprep.subr.mxu0 0.0
    %160 = vmatpush2.msra.mxu0 0.0
    %161 = vmatprep.subr.mxu0 0.0
    %162 = vmatpush2.msra.mxu0 0.0
    %163 = vmatprep.subr.mxu0 0.0
    %164 = vmatpush2.msra.mxu0 0.0
    %165 = vmatprep.subr.mxu0 0.0
    %166 = vmatpush2.msra.mxu0 0.0
    %167 = vmatprep.subr.mxu0 0.0
    %168 = vmatpush2.msra.mxu0 0.0
    %169 = vmatprep.mubr.f32.mxu0 0.0
    %170 = vmatmul.mubr.f32.gmra.mxu0 %v100
    %v171 = vpop.f32.mrf.mxu0
    %v172 = vadd.f32 %v96, %v171
    %v173 = vpop.f32.mrf.mxu0
    %174 = vmatprep.mubr.f32.mxu0 0.0
    %175 = vmatmul.mubr.f32.gmra.mxu0 %v103
    %v176 = vpop.f32.mrf.mxu0
    %v177 = vadd.f32 %v96, %v176
    %v178 = vpop.f32.mrf.mxu0
    %179 = vdwg.mxu0
    %v180 = vld [vmem:[%s1] sm:$0xff]
    %v181 = vld [vmem:[%s1 + $0x8] sm:$0xff]
    %v182 = vld [vmem:[%s1 + $0x10] sm:$0xff]
    %v183 = vld [vmem:[%s1 + $0x18] sm:$0xff]
    %v184 = vld [vmem:[%s8] sm:$0xff]
    %v185 = vld [vmem:[%s8 + $0x8] sm:$0xff]
    %v186 = vld [vmem:[%s8 + $0x10] sm:$0xff]
    %v187 = vld [vmem:[%s8 + $0x18] sm:$0xff]
    %v188 = vld [vmem:[%s8 + $0x20] sm:$0xff]
    %v189 = vld [vmem:[%s8 + $0x28] sm:$0xff]
    %v190 = vld [vmem:[%s8 + $0x30] sm:$0xff]
    %v191 = vld [vmem:[%s8 + $0x38] sm:$0xff]
    %v192 = vld [vmem:[%s8 + $0x40] sm:$0xff]
    %v193 = vld [vmem:[%s8 + $0x48] sm:$0xff]
    %v194 = vld [vmem:[%s8 + $0x50] sm:$0xff]
    %v195 = vld [vmem:[%s8 + $0x58] sm:$0xff]
    %v196 = vld [vmem:[%s8 + $0x60] sm:$0xff]
    %v197 = vld [vmem:[%s8 + $0x68] sm:$0xff]
    %v198 = vld [vmem:[%s8 + $0x70] sm:$0xff]
    %v199 = vld [vmem:[%s8 + $0x78] sm:$0xff]
    %v200 = vld [vmem:[%s8 + $0x80] sm:$0xff]
    %v201 = vld [vmem:[%s8 + $0x88] sm:$0xff]
    %v202 = vld [vmem:[%s8 + $0x90] sm:$0xff]
    %v203 = vld [vmem:[%s8 + $0x98] sm:$0xff]
    %v204 = vld [vmem:[%s8 + $0xa0] sm:$0xff]
    %v205 = vld [vmem:[%s8 + $0xa8] sm:$0xff]
    %v206 = vld [vmem:[%s8 + $0xb0] sm:$0xff]
    %v207 = vld [vmem:[%s8 + $0xb8] sm:$0xff]
    %v208 = vld [vmem:[%s8 + $0xc0] sm:$0xff]
    %v209 = vld [vmem:[%s8 + $0xc8] sm:$0xff]
    %v210 = vld [vmem:[%s8 + $0xd0] sm:$0xff]
    %v211 = vld [vmem:[%s8 + $0xd8] sm:$0xff]
    %v212 = vld [vmem:[%s8 + $0xe0] sm:$0xff]
    %v213 = vld [vmem:[%s8 + $0xe8] sm:$0xff]
    %v214 = vld [vmem:[%s8 + $0xf0] sm:$0xff]
    %v215 = vld [vmem:[%s8 + $0xf8] sm:$0xff]
    %v216 = vld [vmem:[%s9] sm:$0x1]
    %v218 = vlaneseq
    %v219 = vshrl.u32 %v218, 7
    %v220 = vsub.s32 0, %v219
    %v221 = vrot.slane %v216, %v220
    %223 = vmatprep.subr.mxu0 0.0
    %224 = vmatpush1.msra.mxu0 %v199
    %225 = vmatprep.subr.mxu0 0.0
    %226 = vmatpush1.msra.mxu0 %v198
    %227 = vmatprep.subr.mxu0 0.0
    %228 = vmatpush1.msra.mxu0 %v197
    %229 = vmatprep.subr.mxu0 0.0
    %230 = vmatpush1.msra.mxu0 %v196
    %231 = vmatprep.subr.mxu0 0.0
    %232 = vmatpush1.msra.mxu0 %v195
    %233 = vmatprep.subr.mxu0 0.0
    %234 = vmatpush1.msra.mxu0 %v194
    %235 = vmatprep.subr.mxu0 0.0
    %236 = vmatpush1.msra.mxu0 %v193
    %237 = vmatprep.subr.mxu0 0.0
    %238 = vmatpush1.msra.mxu0 %v192
    %239 = vmatprep.subr.mxu0 0.0
    %240 = vmatpush1.msra.mxu0 %v191
    %241 = vmatprep.subr.mxu0 0.0
    %242 = vmatpush1.msra.mxu0 %v190
    %243 = vmatprep.subr.mxu0 0.0
    %244 = vmatpush1.msra.mxu0 %v189
    %245 = vmatprep.subr.mxu0 0.0
    %246 = vmatpush1.msra.mxu0 %v188
    %247 = vmatprep.subr.mxu0 0.0
    %248 = vmatpush1.msra.mxu0 %v187
    %249 = vmatprep.subr.mxu0 0.0
    %250 = vmatpush1.msra.mxu0 %v186
    %251 = vmatprep.subr.mxu0 0.0
    %252 = vmatpush1.msra.mxu0 %v185
    %253 = vmatprep.subr.mxu0 0.0
    %254 = vmatpush1.msra.mxu0 %v184
    %255 = vmatprep.subr.mxu0 0.0
    %256 = vmatpush2.msra.mxu0 %v215
    %257 = vmatprep.subr.mxu0 0.0
    %258 = vmatpush2.msra.mxu0 %v214
    %259 = vmatprep.subr.mxu0 0.0
    %260 = vmatpush2.msra.mxu0 %v213
    %261 = vmatprep.subr.mxu0 0.0
    %262 = vmatpush2.msra.mxu0 %v212
    %263 = vmatprep.subr.mxu0 0.0
    %264 = vmatpush2.msra.mxu0 %v211
    %265 = vmatprep.subr.mxu0 0.0
    %266 = vmatpush2.msra.mxu0 %v210
    %267 = vmatprep.subr.mxu0 0.0
    %268 = vmatpush2.msra.mxu0 %v209
    %269 = vmatprep.subr.mxu0 0.0
    %270 = vmatpush2.msra.mxu0 %v208
    %271 = vmatprep.subr.mxu0 0.0
    %272 = vmatpush2.msra.mxu0 %v207
    %273 = vmatprep.subr.mxu0 0.0
    %274 = vmatpush2.msra.mxu0 %v206
    %275 = vmatprep.subr.mxu0 0.0
    %276 = vmatpush2.msra.mxu0 %v205
    %277 = vmatprep.subr.mxu0 0.0
    %278 = vmatpush2.msra.mxu0 %v204
    %279 = vmatprep.subr.mxu0 0.0
    %280 = vmatpush2.msra.mxu0 %v203
    %281 = vmatprep.subr.mxu0 0.0
    %282 = vmatpush2.msra.mxu0 %v202
    %283 = vmatprep.subr.mxu0 0.0
    %284 = vmatpush2.msra.mxu0 %v201
    %285 = vmatprep.subr.mxu0 0.0
    %286 = vmatpush2.msra.mxu0 %v200
    %287 = vmatprep.mubr.f32.mxu0 %v181
    %288 = vmatmul.mubr.f32.gmra.mxu0 %v180
    %v289 = vpop.f32.mrf.mxu0
    %v290 = vadd.f32 %v221, %v289
    %v291 = vpop.f32.mrf.mxu0
    %292 = vmatprep.mubr.f32.mxu0 %v183
    %293 = vmatmul.mubr.f32.gmra.mxu0 %v182
    %v294 = vpop.f32.mrf.mxu0
    %v295 = vadd.f32 %v221, %v294
    %v296 = vpop.f32.mrf.mxu0
    %297 = vdwg.mxu0
    %v298 = vsub.f32 0.0, %v290
    %v299 = vsub.f32 0.0, %v295
    %v300 = vmul.f32 %v298, 1.442695
    %v301 = vpow.pop %v300
    %v302 = vmul.f32 %v299, 1.442695
    %v303 = vpow.pop %v302
    %v304 = vadd.f32 %v301, 1.0
    %v305 = vadd.f32 %v303, 1.0
    %v306 = vrcp.pop %v304
    %v307 = vmul.f32 1.0, %v306
    %v308 = vrcp.pop %v305
    %v309 = vmul.f32 1.0, %v308
    %v310 = vmul.f32 %v290, %v307
    %v311 = vmul.f32 %v295, %v309
    %v312 = vld [vmem:[%s10] sm:$0xff]
    %v313 = vld [vmem:[%s10 + $0x8] sm:$0xff]
    %v314 = vld [vmem:[%s10 + $0x10] sm:$0xff]
    %v315 = vld [vmem:[%s10 + $0x18] sm:$0xff]
    %v316 = vld [vmem:[%s11] sm:$0x1]
    %v318 = vlaneseq
    %v319 = vshrl.u32 %v318, 7
    %v320 = vsub.s32 0, %v319
    %v321 = vrot.slane %v316, %v320
    %vm323 = vcmask 261120
    %v325 = vsel %vm323, %v310, 0
    %v328 = vsel %vm323, %v311, 0
    %330 = vmatprep.subr.mxu0 0.0
    %331 = vmatpush1.msra.mxu0 0.0
    %332 = vmatprep.subr.mxu0 0.0
    %333 = vmatpush1.msra.mxu0 0.0
    %334 = vmatprep.subr.mxu0 0.0
    %335 = vmatpush1.msra.mxu0 0.0
    %336 = vmatprep.subr.mxu0 0.0
    %337 = vmatpush1.msra.mxu0 0.0
    %338 = vmatprep.subr.mxu0 0.0
    %339 = vmatpush1.msra.mxu0 0.0
    %340 = vmatprep.subr.mxu0 0.0
    %341 = vmatpush1.msra.mxu0 0.0
    %342 = vmatprep.subr.mxu0 0.0
    %343 = vmatpush1.msra.mxu0 0.0
    %344 = vmatprep.subr.mxu0 0.0
    %345 = vmatpush1.msra.mxu0 0.0
    %346 = vmatprep.subr.mxu0 0.0
    %347 = vmatpush1.msra.mxu0 0.0
    %348 = vmatprep.subr.mxu0 0.0
    %349 = vmatpush1.msra.mxu0 0.0
    %350 = vmatprep.subr.mxu0 0.0
    %351 = vmatpush1.msra.mxu0 0.0
    %352 = vmatprep.subr.mxu0 0.0
    %353 = vmatpush1.msra.mxu0 0.0
    %354 = vmatprep.subr.mxu0 0.0
    %355 = vmatpush1.msra.mxu0 %v315
    %356 = vmatprep.subr.mxu0 0.0
    %357 = vmatpush1.msra.mxu0 %v314
    %358 = vmatprep.subr.mxu0 0.0
    %359 = vmatpush1.msra.mxu0 %v313
    %360 = vmatprep.subr.mxu0 0.0
    %361 = vmatpush1.msra.mxu0 %v312
    %362 = vmatprep.subr.mxu0 0.0
    %363 = vmatpush2.msra.mxu0 0.0
    %364 = vmatprep.subr.mxu0 0.0
    %365 = vmatpush2.msra.mxu0 0.0
    %366 = vmatprep.subr.mxu0 0.0
    %367 = vmatpush2.msra.mxu0 0.0
    %368 = vmatprep.subr.mxu0 0.0
    %369 = vmatpush2.msra.mxu0 0.0
    %370 = vmatprep.subr.mxu0 0.0
    %371 = vmatpush2.msra.mxu0 0.0
    %372 = vmatprep.subr.mxu0 0.0
    %373 = vmatpush2.msra.mxu0 0.0
    %374 = vmatprep.subr.mxu0 0.0
    %375 = vmatpush2.msra.mxu0 0.0
    %376 = vmatprep.subr.mxu0 0.0
    %377 = vmatpush2.msra.mxu0 0.0
    %378 = vmatprep.subr.mxu0 0.0
    %379 = vmatpush2.msra.mxu0 0.0
    %380 = vmatprep.subr.mxu0 0.0
    %381 = vmatpush2.msra.mxu0 0.0
    %382 = vmatprep.subr.mxu0 0.0
    %383 = vmatpush2.msra.mxu0 0.0
    %384 = vmatprep.subr.mxu0 0.0
    %385 = vmatpush2.msra.mxu0 0.0
    %386 = vmatprep.subr.mxu0 0.0
    %387 = vmatpush2.msra.mxu0 0.0
    %388 = vmatprep.subr.mxu0 0.0
    %389 = vmatpush2.msra.mxu0 0.0
    %390 = vmatprep.subr.mxu0 0.0
    %391 = vmatpush2.msra.mxu0 0.0
    %392 = vmatprep.subr.mxu0 0.0
    %393 = vmatpush2.msra.mxu0 0.0
    %394 = vmatprep.mubr.f32.mxu0 0.0
    %395 = vmatmul.mubr.f32.gmra.mxu0 %v325
    %v396 = vpop.f32.mrf.mxu0
    %v397 = vadd.f32 %v321, %v396
    %v398 = vpop.f32.mrf.mxu0
    %399 = vmatprep.mubr.f32.mxu0 0.0
    %400 = vmatmul.mubr.f32.gmra.mxu0 %v328
    %v401 = vpop.f32.mrf.mxu0
    %v402 = vadd.f32 %v321, %v401
    %v403 = vpop.f32.mrf.mxu0
    %404 = vdwg.mxu0
    %v405 = vsub.f32 0.0, %v397
    %v406 = vsub.f32 0.0, %v402
    %v407 = vmul.f32 %v405, 1.442695
    %v408 = vpow.pop %v407
    %v409 = vmul.f32 %v406, 1.442695
    %v410 = vpow.pop %v409
    %v411 = vadd.f32 %v408, 1.0
    %v412 = vadd.f32 %v410, 1.0
    %v413 = vrcp.pop %v411
    %v414 = vmul.f32 1.0, %v413
    %v415 = vrcp.pop %v412
    %v416 = vmul.f32 1.0, %v415
    %v417 = vmul.f32 %v397, %v414
    %v418 = vmul.f32 %v402, %v416
    %v419 = vld [vmem:[%s2] sm:$0xff]
    %v420 = vld [vmem:[%s2 + $0x8] sm:$0xff]
    %v421 = vld [vmem:[%s3] sm:$0xff]
    %v422 = vld [vmem:[%s3 + $0x8] sm:$0xff]
    %v423 = vld [vmem:[%s4] sm:$0xff]
    %v424 = vld [vmem:[%s4 + $0x8] sm:$0xff]
    %v425 = vld [vmem:[%s4 + $0x10] sm:$0xff]
    %v426 = vld [vmem:[%s4 + $0x18] sm:$0xff]
    %v427 = vld [vmem:[%s5] sm:$0xff]
    %v428 = vld [vmem:[%s5 + $0x8] sm:$0xff]
    %v429 = vld [vmem:[%s12] sm:$0xff]
    %v430 = vld [vmem:[%s12 + $0x8] sm:$0xff]
    %v431 = vld [vmem:[%s12 + $0x10] sm:$0xff]
    %v432 = vld [vmem:[%s12 + $0x18] sm:$0xff]
    %v433 = vld [vmem:[%s12 + $0x20] sm:$0xff]
    %v434 = vld [vmem:[%s12 + $0x28] sm:$0xff]
    %v435 = vld [vmem:[%s12 + $0x30] sm:$0xff]
    %v436 = vld [vmem:[%s12 + $0x38] sm:$0xff]
    %v437 = vld [vmem:[%s13] sm:$0x3]
    %v439 = vlaneseq
    %v440 = vshrl.u32 %v439, 7
    %v441 = vsub.s32 0, %v440
    %v442 = vrot.slane %v437, %v441
    %v443 = vlaneseq
    %v444 = vshrl.u32 %v443, 7
    %v445 = vsub.s32 1, %v444
    %v446 = vrot.slane %v437, %v445
    %v450 = vsel %vm323, %v417, 0
    %v453 = vsel %vm323, %v418, 0
    %455 = vmatprep.subr.mxu0 0.0
    %456 = vmatpush1.msra.mxu0 0.0
    %457 = vmatprep.subr.mxu0 0.0
    %458 = vmatpush1.msra.mxu0 0.0
    %459 = vmatprep.subr.mxu0 0.0
    %460 = vmatpush1.msra.mxu0 0.0
    %461 = vmatprep.subr.mxu0 0.0
    %462 = vmatpush1.msra.mxu0 0.0
    %463 = vmatprep.subr.mxu0 0.0
    %464 = vmatpush1.msra.mxu0 0.0
    %465 = vmatprep.subr.mxu0 0.0
    %466 = vmatpush1.msra.mxu0 0.0
    %467 = vmatprep.subr.mxu0 0.0
    %468 = vmatpush1.msra.mxu0 0.0
    %469 = vmatprep.subr.mxu0 0.0
    %470 = vmatpush1.msra.mxu0 0.0
    %471 = vmatprep.subr.mxu0 0.0
    %472 = vmatpush1.msra.mxu0 0.0
    %473 = vmatprep.subr.mxu0 0.0
    %474 = vmatpush1.msra.mxu0 0.0
    %475 = vmatprep.subr.mxu0 0.0
    %476 = vmatpush1.msra.mxu0 0.0
    %477 = vmatprep.subr.mxu0 0.0
    %478 = vmatpush1.msra.mxu0 0.0
    %479 = vmatprep.subr.mxu0 %v436
    %480 = vmatpush1.msra.mxu0 %v435
    %481 = vmatprep.subr.mxu0 %v434
    %482 = vmatpush1.msra.mxu0 %v433
    %483 = vmatprep.subr.mxu0 %v432
    %484 = vmatpush1.msra.mxu0 %v431
    %485 = vmatprep.subr.mxu0 %v430
    %486 = vmatpush1.msra.mxu0 %v429
    %487 = vmatprep.subr.mxu0 0.0
    %488 = vmatpush2.msra.mxu0 0.0
    %489 = vmatprep.subr.mxu0 0.0
    %490 = vmatpush2.msra.mxu0 0.0
    %491 = vmatprep.subr.mxu0 0.0
    %492 = vmatpush2.msra.mxu0 0.0
    %493 = vmatprep.subr.mxu0 0.0
    %494 = vmatpush2.msra.mxu0 0.0
    %495 = vmatprep.subr.mxu0 0.0
    %496 = vmatpush2.msra.mxu0 0.0
    %497 = vmatprep.subr.mxu0 0.0
    %498 = vmatpush2.msra.mxu0 0.0
    %499 = vmatprep.subr.mxu0 0.0
    %500 = vmatpush2.msra.mxu0 0.0
    %501 = vmatprep.subr.mxu0 0.0
    %502 = vmatpush2.msra.mxu0 0.0
    %503 = vmatprep.subr.mxu0 0.0
    %504 = vmatpush2.msra.mxu0 0.0
    %505 = vmatprep.subr.mxu0 0.0
    %506 = vmatpush2.msra.mxu0 0.0
    %507 = vmatprep.subr.mxu0 0.0
    %508 = vmatpush2.msra.mxu0 0.0
    %509 = vmatprep.subr.mxu0 0.0
    %510 = vmatpush2.msra.mxu0 0.0
    %511 = vmatprep.subr.mxu0 0.0
    %512 = vmatpush2.msra.mxu0 0.0
    %513 = vmatprep.subr.mxu0 0.0
    %514 = vmatpush2.msra.mxu0 0.0
    %515 = vmatprep.subr.mxu0 0.0
    %516 = vmatpush2.msra.mxu0 0.0
    %517 = vmatprep.subr.mxu0 0.0
    %518 = vmatpush2.msra.mxu0 0.0
    %519 = vmatprep.mubr.f32.mxu0 0.0
    %520 = vmatmul.mubr.f32.gmra.mxu0 %v450
    %v521 = vpop.f32.mrf.mxu0
    %v522 = vadd.f32 %v442, %v521
    %v523 = vpop.f32.mrf.mxu0
    %v524 = vadd.f32 %v446, %v523
    %525 = vmatprep.mubr.f32.mxu0 0.0
    %526 = vmatmul.mubr.f32.gmra.mxu0 %v453
    %v527 = vpop.f32.mrf.mxu0
    %v528 = vadd.f32 %v442, %v527
    %v529 = vpop.f32.mrf.mxu0
    %v530 = vadd.f32 %v446, %v529
    %531 = vdwg.mxu0
    %v532 = vld [vmem:[%s14] sm:$0x1]
    %v533 = vsel %vm323, %v172, 0.0
    %534 = vadd.xlane.f32.xlu0 %v533
    %v535 = vpop.xlane.xlu0 %534
    %v536 = vsel %vm323, %v177, 0.0
    %537 = vadd.xlane.f32.xlu0 %v536
    %v538 = vpop.xlane.xlu0 %537
    %v539 = vrcp.pop 32.0
    %v540 = vmul.f32 %v535, %v539
    %v541 = vmul.f32 %v538, %v539
    %v542 = vsub.f32 %v172, %v540
    %v543 = vsub.f32 %v177, %v541
    %v544 = vmul.f32 %v542, %v542
    %v545 = vmul.f32 %v543, %v543
    %v546 = vsel %vm323, %v544, 0.0
    %547 = vadd.xlane.f32.xlu0 %v546
    %v548 = vpop.xlane.xlu0 %547
    %v549 = vsel %vm323, %v545, 0.0
    %550 = vadd.xlane.f32.xlu0 %v549
    %v551 = vpop.xlane.xlu0 %550
    %v552 = vmul.f32 %v548, %v539
    %v553 = vmul.f32 %v551, %v539
    %v554 = vadd.f32 %v552, 1e-05
    %v555 = vadd.f32 %v553, 1e-05
    %v556 = vrsqrt.pop %v554
    %v557 = vrsqrt.pop %v555
    %v558 = vmul.f32 %v542, %v556
    %v559 = vmul.f32 %v543, %v557
    %v561 = vlaneseq
    %v562 = vshrl.u32 %v561, 7
    %v563 = vsub.s32 0, %v562
    %v564 = vrot.slane %v532, %v563
    %v566 = vmul.f32 %v558, %v564
    %v567 = vmul.f32 %v559, %v564
    %v568 = vadd.f32 %v522, 1.0
    %v569 = vadd.f32 %v528, 1.0
    %572 = vrot.lane.b32.xlu0 %v568, 96
    %v573 = vpop.permute.xlu0 %572
    %574 = vrot.lane.b32.xlu0 %v569, 96
    %v575 = vpop.permute.xlu0 %574
    %v578 = vmul.f32 %v566, %v573
    %v579 = vmul.f32 %v567, %v575
    %v580 = vadd.f32 %v578, %v522
    %v581 = vadd.f32 %v579, %v528
    %v582 = vld [vmem:[%s15] sm:$0xff]
    %v583 = vld [vmem:[%s15 + $0x8] sm:$0xff]
    %v584 = vld [vmem:[%s15 + $0x10] sm:$0xff]
    %v585 = vld [vmem:[%s15 + $0x18] sm:$0xff]
    %v587 = vsel %vm323, %v580, 0
    %v590 = vsel %vm323, %v581, 0
    %592 = vmatprep.subr.mxu0 0.0
    %593 = vmatpush1.msra.mxu0 0.0
    %594 = vmatprep.subr.mxu0 0.0
    %595 = vmatpush1.msra.mxu0 0.0
    %596 = vmatprep.subr.mxu0 0.0
    %597 = vmatpush1.msra.mxu0 0.0
    %598 = vmatprep.subr.mxu0 0.0
    %599 = vmatpush1.msra.mxu0 0.0
    %600 = vmatprep.subr.mxu0 0.0
    %601 = vmatpush1.msra.mxu0 0.0
    %602 = vmatprep.subr.mxu0 0.0
    %603 = vmatpush1.msra.mxu0 0.0
    %604 = vmatprep.subr.mxu0 0.0
    %605 = vmatpush1.msra.mxu0 0.0
    %606 = vmatprep.subr.mxu0 0.0
    %607 = vmatpush1.msra.mxu0 0.0
    %608 = vmatprep.subr.mxu0 0.0
    %609 = vmatpush1.msra.mxu0 0.0
    %610 = vmatprep.subr.mxu0 0.0
    %611 = vmatpush1.msra.mxu0 0.0
    %612 = vmatprep.subr.mxu0 0.0
    %613 = vmatpush1.msra.mxu0 0.0
    %614 = vmatprep.subr.mxu0 0.0
    %615 = vmatpush1.msra.mxu0 0.0
    %616 = vmatprep.subr.mxu0 0.0
    %617 = vmatpush1.msra.mxu0 %v585
    %618 = vmatprep.subr.mxu0 0.0
    %619 = vmatpush1.msra.mxu0 %v584
    %620 = vmatprep.subr.mxu0 0.0
    %621 = vmatpush1.msra.mxu0 %v583
    %622 = vmatprep.subr.mxu0 0.0
    %623 = vmatpush1.msra.mxu0 %v582
    %624 = vmatprep.subr.mxu0 0.0
    %625 = vmatpush2.msra.mxu0 0.0
    %626 = vmatprep.subr.mxu0 0.0
    %627 = vmatpush2.msra.mxu0 0.0
    %628 = vmatprep.subr.mxu0 0.0
    %629 = vmatpush2.msra.mxu0 0.0
    %630 = vmatprep.subr.mxu0 0.0
    %631 = vmatpush2.msra.mxu0 0.0
    %632 = vmatprep.subr.mxu0 0.0
    %633 = vmatpush2.msra.mxu0 0.0
    %634 = vmatprep.subr.mxu0 0.0
    %635 = vmatpush2.msra.mxu0 0.0
    %636 = vmatprep.subr.mxu0 0.0
    %637 = vmatpush2.msra.mxu0 0.0
    %638 = vmatprep.subr.mxu0 0.0
    %639 = vmatpush2.msra.mxu0 0.0
    %640 = vmatprep.subr.mxu0 0.0
    %641 = vmatpush2.msra.mxu0 0.0
    %642 = vmatprep.subr.mxu0 0.0
    %643 = vmatpush2.msra.mxu0 0.0
    %644 = vmatprep.subr.mxu0 0.0
    %645 = vmatpush2.msra.mxu0 0.0
    %646 = vmatprep.subr.mxu0 0.0
    %647 = vmatpush2.msra.mxu0 0.0
    %648 = vmatprep.subr.mxu0 0.0
    %649 = vmatpush2.msra.mxu0 0.0
    %650 = vmatprep.subr.mxu0 0.0
    %651 = vmatpush2.msra.mxu0 0.0
    %652 = vmatprep.subr.mxu0 0.0
    %653 = vmatpush2.msra.mxu0 0.0
    %654 = vmatprep.subr.mxu0 0.0
    %655 = vmatpush2.msra.mxu0 0.0
    %656 = vmatprep.mubr.f32.mxu0 0.0
    %657 = vmatmul.mubr.f32.gmra.mxu0 %v587
    %v658 = vpop.f32.mrf.mxu0
    %v659 = vadd.f32 0.0, %v658
    %v660 = vpop.f32.mrf.mxu0
    %661 = vmatprep.mubr.f32.mxu0 0.0
    %662 = vmatmul.mubr.f32.gmra.mxu0 %v590
    %v663 = vpop.f32.mrf.mxu0
    %v664 = vadd.f32 0.0, %v663
    %v665 = vpop.f32.mrf.mxu0
    %666 = vdwg.mxu0
    %v667 = vmul.f32 %v659, %v419
    %v668 = vmul.f32 %v664, %v420
    %v670 = vsel %vm323, %v659, 0
    %v673 = vsel %vm323, %v664, 0
    %675 = vmatprep.subr.mxu0 0.0
    %676 = vmatpush1.msra.mxu0 0.0
    %677 = vmatprep.subr.mxu0 0.0
    %678 = vmatpush1.msra.mxu0 0.0
    %679 = vmatprep.subr.mxu0 0.0
    %680 = vmatpush1.msra.mxu0 0.0
    %681 = vmatprep.subr.mxu0 0.0
    %682 = vmatpush1.msra.mxu0 0.0
    %683 = vmatprep.subr.mxu0 0.0
    %684 = vmatpush1.msra.mxu0 0.0
    %685 = vmatprep.subr.mxu0 0.0
    %686 = vmatpush1.msra.mxu0 0.0
    %687 = vmatprep.subr.mxu0 0.0
    %688 = vmatpush1.msra.mxu0 0.0
    %689 = vmatprep.subr.mxu0 0.0
    %690 = vmatpush1.msra.mxu0 0.0
    %691 = vmatprep.subr.mxu0 0.0
    %692 = vmatpush1.msra.mxu0 0.0
    %693 = vmatprep.subr.mxu0 0.0
    %694 = vmatpush1.msra.mxu0 0.0
    %695 = vmatprep.subr.mxu0 0.0
    %696 = vmatpush1.msra.mxu0 0.0
    %697 = vmatprep.subr.mxu0 0.0
    %698 = vmatpush1.msra.mxu0 0.0
    %699 = vmatprep.subr.mxu0 0.0
    %700 = vmatpush1.msra.mxu0 %v426
    %701 = vmatprep.subr.mxu0 0.0
    %702 = vmatpush1.msra.mxu0 %v425
    %703 = vmatprep.subr.mxu0 0.0
    %704 = vmatpush1.msra.mxu0 %v424
    %705 = vmatprep.subr.mxu0 0.0
    %706 = vmatpush1.msra.mxu0 %v423
    %707 = vmatprep.subr.mxu0 0.0
    %708 = vmatpush2.msra.mxu0 0.0
    %709 = vmatprep.subr.mxu0 0.0
    %710 = vmatpush2.msra.mxu0 0.0
    %711 = vmatprep.subr.mxu0 0.0
    %712 = vmatpush2.msra.mxu0 0.0
    %713 = vmatprep.subr.mxu0 0.0
    %714 = vmatpush2.msra.mxu0 0.0
    %715 = vmatprep.subr.mxu0 0.0
    %716 = vmatpush2.msra.mxu0 0.0
    %717 = vmatprep.subr.mxu0 0.0
    %718 = vmatpush2.msra.mxu0 0.0
    %719 = vmatprep.subr.mxu0 0.0
    %720 = vmatpush2.msra.mxu0 0.0
    %721 = vmatprep.subr.mxu0 0.0
    %722 = vmatpush2.msra.mxu0 0.0
    %723 = vmatprep.subr.mxu0 0.0
    %724 = vmatpush2.msra.mxu0 0.0
    %725 = vmatprep.subr.mxu0 0.0
    %726 = vmatpush2.msra.mxu0 0.0
    %727 = vmatprep.subr.mxu0 0.0
    %728 = vmatpush2.msra.mxu0 0.0
    %729 = vmatprep.subr.mxu0 0.0
    %730 = vmatpush2.msra.mxu0 0.0
    %731 = vmatprep.subr.mxu0 0.0
    %732 = vmatpush2.msra.mxu0 0.0
    %733 = vmatprep.subr.mxu0 0.0
    %734 = vmatpush2.msra.mxu0 0.0
    %735 = vmatprep.subr.mxu0 0.0
    %736 = vmatpush2.msra.mxu0 0.0
    %737 = vmatprep.subr.mxu0 0.0
    %738 = vmatpush2.msra.mxu0 0.0
    %739 = vmatprep.mubr.f32.mxu0 0.0
    %740 = vmatmul.mubr.f32.gmra.mxu0 %v670
    %v741 = vpop.f32.mrf.mxu0
    %v742 = vadd.f32 0.0, %v741
    %v743 = vpop.f32.mrf.mxu0
    %744 = vmatprep.mubr.f32.mxu0 0.0
    %745 = vmatmul.mubr.f32.gmra.mxu0 %v673
    %v746 = vpop.f32.mrf.mxu0
    %v747 = vadd.f32 0.0, %v746
    %v748 = vpop.f32.mrf.mxu0
    %749 = vdwg.mxu0
    %v750 = vmul.f32 %v742, %v421
    %v751 = vmul.f32 %v747, %v422
    %v752 = vadd.f32 %v667, %v750
    %v753 = vadd.f32 %v668, %v751
    %756 = vrot.lane.b32.xlu0 %v419, 32
    %v757 = vpop.permute.xlu0 %756
    %758 = vrot.lane.b32.xlu0 %v420, 32
    %v759 = vpop.permute.xlu0 %758
    %v762 = vmul.f32 %v659, %v757
    %v763 = vmul.f32 %v664, %v759
    %764 = vrot.lane.b32.xlu0 %v659, 96
    %v765 = vpop.permute.xlu0 %764
    %766 = vrot.lane.b32.xlu0 %v664, 96
    %v767 = vpop.permute.xlu0 %766
    %v768 = vsel %vm323, %v765, 0
    %v770 = vsel %vm323, %v767, 0
    %772 = vmatprep.subr.mxu0 0.0
    %773 = vmatpush1.msra.mxu0 0.0
    %774 = vmatprep.subr.mxu0 0.0
    %775 = vmatpush1.msra.mxu0 0.0
    %776 = vmatprep.subr.mxu0 0.0
    %777 = vmatpush1.msra.mxu0 0.0
    %778 = vmatprep.subr.mxu0 0.0
    %779 = vmatpush1.msra.mxu0 0.0
    %780 = vmatprep.subr.mxu0 0.0
    %781 = vmatpush1.msra.mxu0 0.0
    %782 = vmatprep.subr.mxu0 0.0
    %783 = vmatpush1.msra.mxu0 0.0
    %784 = vmatprep.subr.mxu0 0.0
    %785 = vmatpush1.msra.mxu0 0.0
    %786 = vmatprep.subr.mxu0 0.0
    %787 = vmatpush1.msra.mxu0 0.0
    %788 = vmatprep.subr.mxu0 0.0
    %789 = vmatpush1.msra.mxu0 0.0
    %790 = vmatprep.subr.mxu0 0.0
    %791 = vmatpush1.msra.mxu0 0.0
    %792 = vmatprep.subr.mxu0 0.0
    %793 = vmatpush1.msra.mxu0 0.0
    %794 = vmatprep.subr.mxu0 0.0
    %795 = vmatpush1.msra.mxu0 0.0
    %796 = vmatprep.subr.mxu0 0.0
    %797 = vmatpush1.msra.mxu0 %v426
    %798 = vmatprep.subr.mxu0 0.0
    %799 = vmatpush1.msra.mxu0 %v425
    %800 = vmatprep.subr.mxu0 0.0
    %801 = vmatpush1.msra.mxu0 %v424
    %802 = vmatprep.subr.mxu0 0.0
    %803 = vmatpush1.msra.mxu0 %v423
    %804 = vmatprep.subr.mxu0 0.0
    %805 = vmatpush2.msra.mxu0 0.0
    %806 = vmatprep.subr.mxu0 0.0
    %807 = vmatpush2.msra.mxu0 0.0
    %808 = vmatprep.subr.mxu0 0.0
    %809 = vmatpush2.msra.mxu0 0.0
    %810 = vmatprep.subr.mxu0 0.0
    %811 = vmatpush2.msra.mxu0 0.0
    %812 = vmatprep.subr.mxu0 0.0
    %813 = vmatpush2.msra.mxu0 0.0
    %814 = vmatprep.subr.mxu0 0.0
    %815 = vmatpush2.msra.mxu0 0.0
    %816 = vmatprep.subr.mxu0 0.0
    %817 = vmatpush2.msra.mxu0 0.0
    %818 = vmatprep.subr.mxu0 0.0
    %819 = vmatpush2.msra.mxu0 0.0
    %820 = vmatprep.subr.mxu0 0.0
    %821 = vmatpush2.msra.mxu0 0.0
    %822 = vmatprep.subr.mxu0 0.0
    %823 = vmatpush2.msra.mxu0 0.0
    %824 = vmatprep.subr.mxu0 0.0
    %825 = vmatpush2.msra.mxu0 0.0
    %826 = vmatprep.subr.mxu0 0.0
    %827 = vmatpush2.msra.mxu0 0.0
    %828 = vmatprep.subr.mxu0 0.0
    %829 = vmatpush2.msra.mxu0 0.0
    %830 = vmatprep.subr.mxu0 0.0
    %831 = vmatpush2.msra.mxu0 0.0
    %832 = vmatprep.subr.mxu0 0.0
    %833 = vmatpush2.msra.mxu0 0.0
    %834 = vmatprep.subr.mxu0 0.0
    %835 = vmatpush2.msra.mxu0 0.0
    %836 = vmatprep.mubr.f32.mxu0 0.0
    %837 = vmatmul.mubr.f32.gmra.mxu0 %v768
    %v838 = vpop.f32.mrf.mxu0
    %v839 = vadd.f32 0.0, %v838
    %v840 = vpop.f32.mrf.mxu0
    %841 = vmatprep.mubr.f32.mxu0 0.0
    %842 = vmatmul.mubr.f32.gmra.mxu0 %v770
    %v843 = vpop.f32.mrf.mxu0
    %v844 = vadd.f32 0.0, %v843
    %v845 = vpop.f32.mrf.mxu0
    %846 = vdwg.mxu0
    %v847 = vmul.f32 %v839, %v421
    %v848 = vmul.f32 %v844, %v422
    %851 = vrot.lane.b32.xlu0 %v847, 32
    %v852 = vpop.permute.xlu0 %851
    %853 = vrot.lane.b32.xlu0 %v848, 32
    %v854 = vpop.permute.xlu0 %853
    %v857 = vadd.f32 %v762, %v852
    %v858 = vadd.f32 %v763, %v854
    %v859 = vld [vmem:[%s16] sm:$0xff]
    %v860 = vld [vmem:[%s16 + $0x8] sm:$0xff]
    %v861 = vld [vmem:[%s16 + $0x10] sm:$0xff]
    %v862 = vld [vmem:[%s16 + $0x18] sm:$0xff]
    %865 = vrot.lane.b32.xlu0 %v857, 96
    %v866 = vpop.permute.xlu0 %865
    %867 = vrot.lane.b32.xlu0 %v858, 96
    %v868 = vpop.permute.xlu0 %867
    %vm869 = vcmask 64512
    %v871 = vsel %vm869, %v752, 0
    %v874 = vsel %vm869, %v753, 0
    %v876 = vsel %vm869, %v866, 0
    %v878 = vsel %vm869, %v868, 0
    %880 = vmatprep.subr.mxu0 0.0
    %881 = vmatpush1.xpose.msra.mxu0 0.0
    %882 = vmatprep.subr.mxu0 0.0
    %883 = vmatpush1.xpose.msra.mxu0 0.0
    %884 = vmatprep.subr.mxu0 0.0
    %885 = vmatpush1.xpose.msra.mxu0 0.0
    %886 = vmatprep.subr.mxu0 0.0
    %887 = vmatpush1.xpose.msra.mxu0 0.0
    %888 = vmatprep.subr.mxu0 0.0
    %889 = vmatpush1.xpose.msra.mxu0 0.0
    %890 = vmatprep.subr.mxu0 0.0
    %891 = vmatpush1.xpose.msra.mxu0 0.0
    %892 = vmatprep.subr.mxu0 0.0
    %893 = vmatpush1.xpose.msra.mxu0 0.0
    %894 = vmatprep.subr.mxu0 0.0
    %895 = vmatpush1.xpose.msra.mxu0 0.0
    %896 = vmatprep.subr.mxu0 0.0
    %897 = vmatpush1.xpose.msra.mxu0 0.0
    %898 = vmatprep.subr.mxu0 0.0
    %899 = vmatpush1.xpose.msra.mxu0 0.0
    %900 = vmatprep.subr.mxu0 0.0
    %901 = vmatpush1.xpose.msra.mxu0 0.0
    %902 = vmatprep.subr.mxu0 0.0
    %903 = vmatpush1.xpose.msra.mxu0 0.0
    %904 = vmatprep.subr.mxu0 0.0
    %905 = vmatpush1.xpose.msra.mxu0 0.0
    %906 = vmatprep.subr.mxu0 0.0
    %907 = vmatpush1.xpose.msra.mxu0 0.0
    %908 = vmatprep.subr.mxu0 0.0
    %909 = vmatpush1.xpose.msra.mxu0 %v878
    %910 = vmatprep.subr.mxu0 0.0
    %911 = vmatpush1.xpose.msra.mxu0 %v876
    %912 = vmatprep.subr.mxu0 0.0
    %913 = vmatpush2.xpose.msra.mxu0 0.0
    %914 = vmatprep.subr.mxu0 0.0
    %915 = vmatpush2.xpose.msra.mxu0 0.0
    %916 = vmatprep.subr.mxu0 0.0
    %917 = vmatpush2.xpose.msra.mxu0 0.0
    %918 = vmatprep.subr.mxu0 0.0
    %919 = vmatpush2.xpose.msra.mxu0 0.0
    %920 = vmatprep.subr.mxu0 0.0
    %921 = vmatpush2.xpose.msra.mxu0 0.0
    %922 = vmatprep.subr.mxu0 0.0
    %923 = vmatpush2.xpose.msra.mxu0 0.0
    %924 = vmatprep.subr.mxu0 0.0
    %925 = vmatpush2.xpose.msra.mxu0 0.0
    %926 = vmatprep.subr.mxu0 0.0
    %927 = vmatpush2.xpose.msra.mxu0 0.0
    %928 = vmatprep.subr.mxu0 0.0
    %929 = vmatpush2.xpose.msra.mxu0 0.0
    %930 = vmatprep.subr.mxu0 0.0
    %931 = vmatpush2.xpose.msra.mxu0 0.0
    %932 = vmatprep.subr.mxu0 0.0
    %933 = vmatpush2.xpose.msra.mxu0 0.0
    %934 = vmatprep.subr.mxu0 0.0
    %935 = vmatpush2.xpose.msra.mxu0 0.0
    %936 = vmatprep.subr.mxu0 0.0
    %937 = vmatpush2.xpose.msra.mxu0 0.0
    %938 = vmatprep.subr.mxu0 0.0
    %939 = vmatpush2.xpose.msra.mxu0 0.0
    %940 = vmatprep.subr.mxu0 0.0
    %941 = vmatpush2.xpose.msra.mxu0 0.0
    %942 = vmatprep.subr.mxu0 0.0
    %943 = vmatpush2.xpose.msra.mxu0 0.0
    %944 = vmatprep.mubr.f32.mxu0 0.0
    %945 = vmatmul.mubr.f32.gmra.mxu0 %v871
    %v946 = vpop.f32.mrf.mxu0
    %v947 = vadd.f32 0.0, %v946
    %v948 = vpop.f32.mrf.mxu0
    %949 = vmatprep.mubr.f32.mxu0 0.0
    %950 = vmatmul.mubr.f32.gmra.mxu0 %v874
    %v951 = vpop.f32.mrf.mxu0
    %v952 = vadd.f32 0.0, %v951
    %v953 = vpop.f32.mrf.mxu0
    %954 = vdwg.mxu0
    %v955 = vmul.f32 %v947, 0.35355338
    %v956 = vmul.f32 %v952, 0.35355338
    %v957 = vadd.f32 %v955, %v427
    %v958 = vadd.f32 %v956, %v428
    %v959 = vsel %vm98, %v957, -inf
    %960 = vmax.xlane.f32.xlu0 %v959
    %v961 = vpop.xlane.xlu0 %960
    %v962 = vsel %vm98, %v958, -inf
    %963 = vmax.xlane.f32.xlu0 %v962
    %v964 = vpop.xlane.xlu0 %963
    %v965 = vsub.f32 %v957, %v961
    %v966 = vsub.f32 %v958, %v964
    %v967 = vmul.f32 %v965, 1.442695
    %v968 = vpow.pop %v967
    %v969 = vmul.f32 %v966, 1.442695
    %v970 = vpow.pop %v969
    %v971 = vsel %vm98, %v968, 0.0
    %972 = vadd.xlane.f32.xlu0 %v971
    %v973 = vpop.xlane.xlu0 %972
    %v974 = vsel %vm98, %v970, 0.0
    %975 = vadd.xlane.f32.xlu0 %v974
    %v976 = vpop.xlane.xlu0 %975
    %v977 = vrcp.pop %v973
    %v978 = vrcp.pop %v976
    %v979 = vmul.f32 %v968, %v977
    %v980 = vmul.f32 %v970, %v978
    %981 = vrot.lane.b32.xlu0 %v659, 64
    %v982 = vpop.permute.xlu0 %981
    %983 = vrot.lane.b32.xlu0 %v664, 64
    %v984 = vpop.permute.xlu0 %983
    %v988 = vsel %vm98, %v979, 0
    %v991 = vsel %vm98, %v980, 0
    %993 = vmatprep.subr.mxu0 0.0
    %994 = vmatpush1.msra.mxu0 0.0
    %995 = vmatprep.subr.mxu0 0.0
    %996 = vmatpush1.msra.mxu0 0.0
    %997 = vmatprep.subr.mxu0 0.0
    %998 = vmatpush1.msra.mxu0 0.0
    %999 = vmatprep.subr.mxu0 0.0
    %1000 = vmatpush1.msra.mxu0 0.0
    %1001 = vmatprep.subr.mxu0 0.0
    %1002 = vmatpush1.msra.mxu0 0.0
    %1003 = vmatprep.subr.mxu0 0.0
    %1004 = vmatpush1.msra.mxu0 0.0
    %1005 = vmatprep.subr.mxu0 0.0
    %1006 = vmatpush1.msra.mxu0 0.0
    %1007 = vmatprep.subr.mxu0 0.0
    %1008 = vmatpush1.msra.mxu0 0.0
    %1009 = vmatprep.subr.mxu0 0.0
    %1010 = vmatpush1.msra.mxu0 0.0
    %1011 = vmatprep.subr.mxu0 0.0
    %1012 = vmatpush1.msra.mxu0 0.0
    %1013 = vmatprep.subr.mxu0 0.0
    %1014 = vmatpush1.msra.mxu0 0.0
    %1015 = vmatprep.subr.mxu0 0.0
    %1016 = vmatpush1.msra.mxu0 0.0
    %1017 = vmatprep.subr.mxu0 0.0
    %1018 = vmatpush1.msra.mxu0 0.0
    %1019 = vmatprep.subr.mxu0 0.0
    %1020 = vmatpush1.msra.mxu0 0.0
    %1021 = vmatprep.subr.mxu0 0.0
    %1022 = vmatpush1.msra.mxu0 %v984
    %1023 = vmatprep.subr.mxu0 0.0
    %1024 = vmatpush1.msra.mxu0 %v982
    %1025 = vmatprep.subr.mxu0 0.0
    %1026 = vmatpush2.msra.mxu0 0.0
    %1027 = vmatprep.subr.mxu0 0.0
    %1028 = vmatpush2.msra.mxu0 0.0
    %1029 = vmatprep.subr.mxu0 0.0
    %1030 = vmatpush2.msra.mxu0 0.0
    %1031 = vmatprep.subr.mxu0 0.0
    %1032 = vmatpush2.msra.mxu0 0.0
    %1033 = vmatprep.subr.mxu0 0.0
    %1034 = vmatpush2.msra.mxu0 0.0
    %1035 = vmatprep.subr.mxu0 0.0
    %1036 = vmatpush2.msra.mxu0 0.0
    %1037 = vmatprep.subr.mxu0 0.0
    %1038 = vmatpush2.msra.mxu0 0.0
    %1039 = vmatprep.subr.mxu0 0.0
    %1040 = vmatpush2.msra.mxu0 0.0
    %1041 = vmatprep.subr.mxu0 0.0
    %1042 = vmatpush2.msra.mxu0 0.0
    %1043 = vmatprep.subr.mxu0 0.0
    %1044 = vmatpush2.msra.mxu0 0.0
    %1045 = vmatprep.subr.mxu0 0.0
    %1046 = vmatpush2.msra.mxu0 0.0
    %1047 = vmatprep.subr.mxu0 0.0
    %1048 = vmatpush2.msra.mxu0 0.0
    %1049 = vmatprep.subr.mxu0 0.0
    %1050 = vmatpush2.msra.mxu0 0.0
    %1051 = vmatprep.subr.mxu0 0.0
    %1052 = vmatpush2.msra.mxu0 0.0
    %1053 = vmatprep.subr.mxu0 0.0
    %1054 = vmatpush2.msra.mxu0 0.0
    %1055 = vmatprep.subr.mxu0 0.0
    %1056 = vmatpush2.msra.mxu0 0.0
    %1057 = vmatprep.mubr.f32.mxu0 0.0
    %1058 = vmatmul.mubr.f32.gmra.mxu0 %v988
    %v1059 = vpop.f32.mrf.mxu0
    %v1060 = vadd.f32 0.0, %v1059
    %v1061 = vpop.f32.mrf.mxu0
    %1062 = vmatprep.mubr.f32.mxu0 0.0
    %1063 = vmatmul.mubr.f32.gmra.mxu0 %v991
    %v1064 = vpop.f32.mrf.mxu0
    %v1065 = vadd.f32 0.0, %v1064
    %v1066 = vpop.f32.mrf.mxu0
    %1067 = vdwg.mxu0
    %1068 = vrot.lane.b32.xlu0 %v752, 120
    %v1069 = vpop.permute.xlu0 %1068
    %1070 = vrot.lane.b32.xlu0 %v753, 120
    %v1071 = vpop.permute.xlu0 %1070
    %1072 = vrot.lane.b32.xlu0 %v857, 88
    %v1073 = vpop.permute.xlu0 %1072
    %1074 = vrot.lane.b32.xlu0 %v858, 88
    %v1075 = vpop.permute.xlu0 %1074
    %v1076 = vsel %vm869, %v1069, 0
    %v1078 = vsel %vm869, %v1071, 0
    %v1080 = vsel %vm869, %v1073, 0
    %v1082 = vsel %vm869, %v1075, 0
    %1084 = vmatprep.subr.mxu0 0.0
    %1085 = vmatpush1.xpose.msra.mxu0 0.0
    %1086 = vmatprep.subr.mxu0 0.0
    %1087 = vmatpush1.xpose.msra.mxu0 0.0
    %1088 = vmatprep.subr.mxu0 0.0
    %1089 = vmatpush1.xpose.msra.mxu0 0.0
    %1090 = vmatprep.subr.mxu0 0.0
    %1091 = vmatpush1.xpose.msra.mxu0 0.0
    %1092 = vmatprep.subr.mxu0 0.0
    %1093 = vmatpush1.xpose.msra.mxu0 0.0
    %1094 = vmatprep.subr.mxu0 0.0
    %1095 = vmatpush1.xpose.msra.mxu0 0.0
    %1096 = vmatprep.subr.mxu0 0.0
    %1097 = vmatpush1.xpose.msra.mxu0 0.0
    %1098 = vmatprep.subr.mxu0 0.0
    %1099 = vmatpush1.xpose.msra.mxu0 0.0
    %1100 = vmatprep.subr.mxu0 0.0
    %1101 = vmatpush1.xpose.msra.mxu0 0.0
    %1102 = vmatprep.subr.mxu0 0.0
    %1103 = vmatpush1.xpose.msra.mxu0 0.0
    %1104 = vmatprep.subr.mxu0 0.0
    %1105 = vmatpush1.xpose.msra.mxu0 0.0
    %1106 = vmatprep.subr.mxu0 0.0
    %1107 = vmatpush1.xpose.msra.mxu0 0.0
    %1108 = vmatprep.subr.mxu0 0.0
    %1109 = vmatpush1.xpose.msra.mxu0 0.0
    %1110 = vmatprep.subr.mxu0 0.0
    %1111 = vmatpush1.xpose.msra.mxu0 0.0
    %1112 = vmatprep.subr.mxu0 0.0
    %1113 = vmatpush1.xpose.msra.mxu0 %v1082
    %1114 = vmatprep.subr.mxu0 0.0
    %1115 = vmatpush1.xpose.msra.mxu0 %v1080
    %1116 = vmatprep.subr.mxu0 0.0
    %1117 = vmatpush2.xpose.msra.mxu0 0.0
    %1118 = vmatprep.subr.mxu0 0.0
    %1119 = vmatpush2.xpose.msra.mxu0 0.0
    %1120 = vmatprep.subr.mxu0 0.0
    %1121 = vmatpush2.xpose.msra.mxu0 0.0
    %1122 = vmatprep.subr.mxu0 0.0
    %1123 = vmatpush2.xpose.msra.mxu0 0.0
    %1124 = vmatprep.subr.mxu0 0.0
    %1125 = vmatpush2.xpose.msra.mxu0 0.0
    %1126 = vmatprep.subr.mxu0 0.0
    %1127 = vmatpush2.xpose.msra.mxu0 0.0
    %1128 = vmatprep.subr.mxu0 0.0
    %1129 = vmatpush2.xpose.msra.mxu0 0.0
    %1130 = vmatprep.subr.mxu0 0.0
    %1131 = vmatpush2.xpose.msra.mxu0 0.0
    %1132 = vmatprep.subr.mxu0 0.0
    %1133 = vmatpush2.xpose.msra.mxu0 0.0
    %1134 = vmatprep.subr.mxu0 0.0
    %1135 = vmatpush2.xpose.msra.mxu0 0.0
    %1136 = vmatprep.subr.mxu0 0.0
    %1137 = vmatpush2.xpose.msra.mxu0 0.0
    %1138 = vmatprep.subr.mxu0 0.0
    %1139 = vmatpush2.xpose.msra.mxu0 0.0
    %1140 = vmatprep.subr.mxu0 0.0
    %1141 = vmatpush2.xpose.msra.mxu0 0.0
    %1142 = vmatprep.subr.mxu0 0.0
    %1143 = vmatpush2.xpose.msra.mxu0 0.0
    %1144 = vmatprep.subr.mxu0 0.0
    %1145 = vmatpush2.xpose.msra.mxu0 0.0
    %1146 = vmatprep.subr.mxu0 0.0
    %1147 = vmatpush2.xpose.msra.mxu0 0.0
    %1148 = vmatprep.mubr.f32.mxu0 0.0
    %1149 = vmatmul.mubr.f32.gmra.mxu0 %v1076
    %v1150 = vpop.f32.mrf.mxu0
    %v1151 = vadd.f32 0.0, %v1150
    %v1152 = vpop.f32.mrf.mxu0
    %1153 = vmatprep.mubr.f32.mxu0 0.0
    %1154 = vmatmul.mubr.f32.gmra.mxu0 %v1078
    %v1155 = vpop.f32.mrf.mxu0
    %v1156 = vadd.f32 0.0, %v1155
    %v1157 = vpop.f32.mrf.mxu0
    %1158 = vdwg.mxu0
    %v1159 = vmul.f32 %v1151, 0.35355338
    %v1160 = vmul.f32 %v1156, 0.35355338
    %v1161 = vadd.f32 %v1159, %v427
    %v1162 = vadd.f32 %v1160, %v428
    %v1163 = vsel %vm98, %v1161, -inf
    %1164 = vmax.xlane.f32.xlu0 %v1163
    %v1165 = vpop.xlane.xlu0 %1164
    %v1166 = vsel %vm98, %v1162, -inf
    %1167 = vmax.xlane.f32.xlu0 %v1166
    %v1168 = vpop.xlane.xlu0 %1167
    %v1169 = vsub.f32 %v1161, %v1165
    %v1170 = vsub.f32 %v1162, %v1168
    %v1171 = vmul.f32 %v1169, 1.442695
    %v1172 = vpow.pop %v1171
    %v1173 = vmul.f32 %v1170, 1.442695
    %v1174 = vpow.pop %v1173
    %v1175 = vsel %vm98, %v1172, 0.0
    %1176 = vadd.xlane.f32.xlu0 %v1175
    %v1177 = vpop.xlane.xlu0 %1176
    %v1178 = vsel %vm98, %v1174, 0.0
    %1179 = vadd.xlane.f32.xlu0 %v1178
    %v1180 = vpop.xlane.xlu0 %1179
    %v1181 = vrcp.pop %v1177
    %v1182 = vrcp.pop %v1180
    %v1183 = vmul.f32 %v1172, %v1181
    %v1184 = vmul.f32 %v1174, %v1182
    %1185 = vrot.lane.b32.xlu0 %v659, 56
    %v1186 = vpop.permute.xlu0 %1185
    %1187 = vrot.lane.b32.xlu0 %v664, 56
    %v1188 = vpop.permute.xlu0 %1187
    %v1192 = vsel %vm98, %v1183, 0
    %v1195 = vsel %vm98, %v1184, 0
    %1197 = vmatprep.subr.mxu0 0.0
    %1198 = vmatpush1.msra.mxu0 0.0
    %1199 = vmatprep.subr.mxu0 0.0
    %1200 = vmatpush1.msra.mxu0 0.0
    %1201 = vmatprep.subr.mxu0 0.0
    %1202 = vmatpush1.msra.mxu0 0.0
    %1203 = vmatprep.subr.mxu0 0.0
    %1204 = vmatpush1.msra.mxu0 0.0
    %1205 = vmatprep.subr.mxu0 0.0
    %1206 = vmatpush1.msra.mxu0 0.0
    %1207 = vmatprep.subr.mxu0 0.0
    %1208 = vmatpush1.msra.mxu0 0.0
    %1209 = vmatprep.subr.mxu0 0.0
    %1210 = vmatpush1.msra.mxu0 0.0
    %1211 = vmatprep.subr.mxu0 0.0
    %1212 = vmatpush1.msra.mxu0 0.0
    %1213 = vmatprep.subr.mxu0 0.0
    %1214 = vmatpush1.msra.mxu0 0.0
    %1215 = vmatprep.subr.mxu0 0.0
    %1216 = vmatpush1.msra.mxu0 0.0
    %1217 = vmatprep.subr.mxu0 0.0
    %1218 = vmatpush1.msra.mxu0 0.0
    %1219 = vmatprep.subr.mxu0 0.0
    %1220 = vmatpush1.msra.mxu0 0.0
    %1221 = vmatprep.subr.mxu0 0.0
    %1222 = vmatpush1.msra.mxu0 0.0
    %1223 = vmatprep.subr.mxu0 0.0
    %1224 = vmatpush1.msra.mxu0 0.0
    %1225 = vmatprep.subr.mxu0 0.0
    %1226 = vmatpush1.msra.mxu0 %v1188
    %1227 = vmatprep.subr.mxu0 0.0
    %1228 = vmatpush1.msra.mxu0 %v1186
    %1229 = vmatprep.subr.mxu0 0.0
    %1230 = vmatpush2.msra.mxu0 0.0
    %1231 = vmatprep.subr.mxu0 0.0
    %1232 = vmatpush2.msra.mxu0 0.0
    %1233 = vmatprep.subr.mxu0 0.0
    %1234 = vmatpush2.msra.mxu0 0.0
    %1235 = vmatprep.subr.mxu0 0.0
    %1236 = vmatpush2.msra.mxu0 0.0
    %1237 = vmatprep.subr.mxu0 0.0
    %1238 = vmatpush2.msra.mxu0 0.0
    %1239 = vmatprep.subr.mxu0 0.0
    %1240 = vmatpush2.msra.mxu0 0.0
    %1241 = vmatprep.subr.mxu0 0.0
    %1242 = vmatpush2.msra.mxu0 0.0
    %1243 = vmatprep.subr.mxu0 0.0
    %1244 = vmatpush2.msra.mxu0 0.0
    %1245 = vmatprep.subr.mxu0 0.0
    %1246 = vmatpush2.msra.mxu0 0.0
    %1247 = vmatprep.subr.mxu0 0.0
    %1248 = vmatpush2.msra.mxu0 0.0
    %1249 = vmatprep.subr.mxu0 0.0
    %1250 = vmatpush2.msra.mxu0 0.0
    %1251 = vmatprep.subr.mxu0 0.0
    %1252 = vmatpush2.msra.mxu0 0.0
    %1253 = vmatprep.subr.mxu0 0.0
    %1254 = vmatpush2.msra.mxu0 0.0
    %1255 = vmatprep.subr.mxu0 0.0
    %1256 = vmatpush2.msra.mxu0 0.0
    %1257 = vmatprep.subr.mxu0 0.0
    %1258 = vmatpush2.msra.mxu0 0.0
    %1259 = vmatprep.subr.mxu0 0.0
    %1260 = vmatpush2.msra.mxu0 0.0
    %1261 = vmatprep.mubr.f32.mxu0 0.0
    %1262 = vmatmul.mubr.f32.gmra.mxu0 %v1192
    %v1263 = vpop.f32.mrf.mxu0
    %v1264 = vadd.f32 0.0, %v1263
    %v1265 = vpop.f32.mrf.mxu0
    %1266 = vmatprep.mubr.f32.mxu0 0.0
    %1267 = vmatmul.mubr.f32.gmra.mxu0 %v1195
    %v1268 = vpop.f32.mrf.mxu0
    %v1269 = vadd.f32 0.0, %v1268
    %v1270 = vpop.f32.mrf.mxu0
    %1271 = vdwg.mxu0
    %v1273 = vsel %vm869, %v1264, 0
    %v1276 = vsel %vm869, %v1269, 0
    %1278 = vmatprep.subr.mxu0 0.0
    %1279 = vmatpush1.msra.mxu0 0.0
    %1280 = vmatprep.subr.mxu0 0.0
    %1281 = vmatpush1.msra.mxu0 0.0
    %1282 = vmatprep.subr.mxu0 0.0
    %1283 = vmatpush1.msra.mxu0 0.0
    %1284 = vmatprep.subr.mxu0 0.0
    %1285 = vmatpush1.msra.mxu0 0.0
    %1286 = vmatprep.subr.mxu0 0.0
    %1287 = vmatpush1.msra.mxu0 0.0
    %1288 = vmatprep.subr.mxu0 0.0
    %1289 = vmatpush1.msra.mxu0 0.0
    %1290 = vmatprep.subr.mxu0 0.0
    %1291 = vmatpush1.msra.mxu0 0.0
    %1292 = vmatprep.subr.mxu0 0.0
    %1293 = vmatpush1.msra.mxu0 0.0
    %1294 = vmatprep.subr.mxu0 0.0
    %1295 = vmatpush1.msra.mxu0 0.0
    %1296 = vmatprep.subr.mxu0 0.0
    %1297 = vmatpush1.msra.mxu0 0.0
    %1298 = vmatprep.subr.mxu0 0.0
    %1299 = vmatpush1.msra.mxu0 0.0
    %1300 = vmatprep.subr.mxu0 0.0
    %1301 = vmatpush1.msra.mxu0 0.0
    %1302 = vmatprep.subr.mxu0 0.0
    %1303 = vmatpush1.msra.mxu0 0.0
    %1304 = vmatprep.subr.mxu0 0.0
    %1305 = vmatpush1.msra.mxu0 0.0
    %1306 = vmatprep.subr.mxu0 0.0
    %1307 = vmatpush1.msra.mxu0 0.0
    %1308 = vmatprep.subr.mxu0 0.0
    %1309 = vmatpush1.msra.mxu0 %v860
    %1310 = vmatprep.subr.mxu0 0.0
    %1311 = vmatpush2.msra.mxu0 0.0
    %1312 = vmatprep.subr.mxu0 0.0
    %1313 = vmatpush2.msra.mxu0 0.0
    %1314 = vmatprep.subr.mxu0 0.0
    %1315 = vmatpush2.msra.mxu0 0.0
    %1316 = vmatprep.subr.mxu0 0.0
    %1317 = vmatpush2.msra.mxu0 0.0
    %1318 = vmatprep.subr.mxu0 0.0
    %1319 = vmatpush2.msra.mxu0 0.0
    %1320 = vmatprep.subr.mxu0 0.0
    %1321 = vmatpush2.msra.mxu0 0.0
    %1322 = vmatprep.subr.mxu0 0.0
    %1323 = vmatpush2.msra.mxu0 0.0
    %1324 = vmatprep.subr.mxu0 0.0
    %1325 = vmatpush2.msra.mxu0 0.0
    %1326 = vmatprep.subr.mxu0 0.0
    %1327 = vmatpush2.msra.mxu0 0.0
    %1328 = vmatprep.subr.mxu0 0.0
    %1329 = vmatpush2.msra.mxu0 0.0
    %1330 = vmatprep.subr.mxu0 0.0
    %1331 = vmatpush2.msra.mxu0 0.0
    %1332 = vmatprep.subr.mxu0 0.0
    %1333 = vmatpush2.msra.mxu0 0.0
    %1334 = vmatprep.subr.mxu0 0.0
    %1335 = vmatpush2.msra.mxu0 0.0
    %1336 = vmatprep.subr.mxu0 0.0
    %1337 = vmatpush2.msra.mxu0 0.0
    %1338 = vmatprep.subr.mxu0 0.0
    %1339 = vmatpush2.msra.mxu0 0.0
    %1340 = vmatprep.subr.mxu0 0.0
    %1341 = vmatpush2.msra.mxu0 0.0
    %1342 = vmatprep.mubr.f32.mxu0 0.0
    %1343 = vmatmul.mubr.f32.gmra.mxu0 %v1273
    %v1344 = vpop.f32.mrf.mxu0
    %v1345 = vadd.f32 0.0, %v1344
    %v1346 = vpop.f32.mrf.mxu0
    %1347 = vmatprep.mubr.f32.mxu0 0.0
    %1348 = vmatmul.mubr.f32.gmra.mxu0 %v1276
    %v1349 = vpop.f32.mrf.mxu0
    %v1350 = vadd.f32 0.0, %v1349
    %v1351 = vpop.f32.mrf.mxu0
    %1352 = vdwg.mxu0
    %v1354 = vsel %vm869, %v1060, 0
    %v1357 = vsel %vm869, %v1065, 0
    %1359 = vmatprep.subr.mxu0 0.0
    %1360 = vmatpush1.msra.mxu0 0.0
    %1361 = vmatprep.subr.mxu0 0.0
    %1362 = vmatpush1.msra.mxu0 0.0
    %1363 = vmatprep.subr.mxu0 0.0
    %1364 = vmatpush1.msra.mxu0 0.0
    %1365 = vmatprep.subr.mxu0 0.0
    %1366 = vmatpush1.msra.mxu0 0.0
    %1367 = vmatprep.subr.mxu0 0.0
    %1368 = vmatpush1.msra.mxu0 0.0
    %1369 = vmatprep.subr.mxu0 0.0
    %1370 = vmatpush1.msra.mxu0 0.0
    %1371 = vmatprep.subr.mxu0 0.0
    %1372 = vmatpush1.msra.mxu0 0.0
    %1373 = vmatprep.subr.mxu0 0.0
    %1374 = vmatpush1.msra.mxu0 0.0
    %1375 = vmatprep.subr.mxu0 0.0
    %1376 = vmatpush1.msra.mxu0 0.0
    %1377 = vmatprep.subr.mxu0 0.0
    %1378 = vmatpush1.msra.mxu0 0.0
    %1379 = vmatprep.subr.mxu0 0.0
    %1380 = vmatpush1.msra.mxu0 0.0
    %1381 = vmatprep.subr.mxu0 0.0
    %1382 = vmatpush1.msra.mxu0 0.0
    %1383 = vmatprep.subr.mxu0 0.0
    %1384 = vmatpush1.msra.mxu0 0.0
    %1385 = vmatprep.subr.mxu0 0.0
    %1386 = vmatpush1.msra.mxu0 0.0
    %1387 = vmatprep.subr.mxu0 0.0
    %1388 = vmatpush1.msra.mxu0 0.0
    %1389 = vmatprep.subr.mxu0 0.0
    %1390 = vmatpush1.msra.mxu0 %v859
    %1391 = vmatprep.subr.mxu0 0.0
    %1392 = vmatpush2.msra.mxu0 0.0
    %1393 = vmatprep.subr.mxu0 0.0
    %1394 = vmatpush2.msra.mxu0 0.0
    %1395 = vmatprep.subr.mxu0 0.0
    %1396 = vmatpush2.msra.mxu0 0.0
    %1397 = vmatprep.subr.mxu0 0.0
    %1398 = vmatpush2.msra.mxu0 0.0
    %1399 = vmatprep.subr.mxu0 0.0
    %1400 = vmatpush2.msra.mxu0 0.0
    %1401 = vmatprep.subr.mxu0 0.0
    %1402 = vmatpush2.msra.mxu0 0.0
    %1403 = vmatprep.subr.mxu0 0.0
    %1404 = vmatpush2.msra.mxu0 0.0
    %1405 = vmatprep.subr.mxu0 0.0
    %1406 = vmatpush2.msra.mxu0 0.0
    %1407 = vmatprep.subr.mxu0 0.0
    %1408 = vmatpush2.msra.mxu0 0.0
    %1409 = vmatprep.subr.mxu0 0.0
    %1410 = vmatpush2.msra.mxu0 0.0
    %1411 = vmatprep.subr.mxu0 0.0
    %1412 = vmatpush2.msra.mxu0 0.0
    %1413 = vmatprep.subr.mxu0 0.0
    %1414 = vmatpush2.msra.mxu0 0.0
    %1415 = vmatprep.subr.mxu0 0.0
    %1416 = vmatpush2.msra.mxu0 0.0
    %1417 = vmatprep.subr.mxu0 0.0
    %1418 = vmatpush2.msra.mxu0 0.0
    %1419 = vmatprep.subr.mxu0 0.0
    %1420 = vmatpush2.msra.mxu0 0.0
    %1421 = vmatprep.subr.mxu0 0.0
    %1422 = vmatpush2.msra.mxu0 0.0
    %1423 = vmatprep.mubr.f32.mxu0 0.0
    %1424 = vmatmul.mubr.f32.gmra.mxu0 %v1354
    %v1425 = vpop.f32.mrf.mxu0
    %v1426 = vadd.f32 %v1345, %v1425
    %v1427 = vpop.f32.mrf.mxu0
    %1428 = vmatprep.mubr.f32.mxu0 0.0
    %1429 = vmatmul.mubr.f32.gmra.mxu0 %v1357
    %v1430 = vpop.f32.mrf.mxu0
    %v1431 = vadd.f32 %v1350, %v1430
    %v1432 = vpop.f32.mrf.mxu0
    %1433 = vdwg.mxu0
    %1434 = vrot.lane.b32.xlu0 %v752, 112
    %v1435 = vpop.permute.xlu0 %1434
    %1436 = vrot.lane.b32.xlu0 %v753, 112
    %v1437 = vpop.permute.xlu0 %1436
    %1438 = vrot.lane.b32.xlu0 %v857, 80
    %v1439 = vpop.permute.xlu0 %1438
    %1440 = vrot.lane.b32.xlu0 %v858, 80
    %v1441 = vpop.permute.xlu0 %1440
    %v1442 = vsel %vm869, %v1435, 0
    %v1444 = vsel %vm869, %v1437, 0
    %v1446 = vsel %vm869, %v1439, 0
    %v1448 = vsel %vm869, %v1441, 0
    %1450 = vmatprep.subr.mxu0 0.0
    %1451 = vmatpush1.xpose.msra.mxu0 0.0
    %1452 = vmatprep.subr.mxu0 0.0
    %1453 = vmatpush1.xpose.msra.mxu0 0.0
    %1454 = vmatprep.subr.mxu0 0.0
    %1455 = vmatpush1.xpose.msra.mxu0 0.0
    %1456 = vmatprep.subr.mxu0 0.0
    %1457 = vmatpush1.xpose.msra.mxu0 0.0
    %1458 = vmatprep.subr.mxu0 0.0
    %1459 = vmatpush1.xpose.msra.mxu0 0.0
    %1460 = vmatprep.subr.mxu0 0.0
    %1461 = vmatpush1.xpose.msra.mxu0 0.0
    %1462 = vmatprep.subr.mxu0 0.0
    %1463 = vmatpush1.xpose.msra.mxu0 0.0
    %1464 = vmatprep.subr.mxu0 0.0
    %1465 = vmatpush1.xpose.msra.mxu0 0.0
    %1466 = vmatprep.subr.mxu0 0.0
    %1467 = vmatpush1.xpose.msra.mxu0 0.0
    %1468 = vmatprep.subr.mxu0 0.0
    %1469 = vmatpush1.xpose.msra.mxu0 0.0
    %1470 = vmatprep.subr.mxu0 0.0
    %1471 = vmatpush1.xpose.msra.mxu0 0.0
    %1472 = vmatprep.subr.mxu0 0.0
    %1473 = vmatpush1.xpose.msra.mxu0 0.0
    %1474 = vmatprep.subr.mxu0 0.0
    %1475 = vmatpush1.xpose.msra.mxu0 0.0
    %1476 = vmatprep.subr.mxu0 0.0
    %1477 = vmatpush1.xpose.msra.mxu0 0.0
    %1478 = vmatprep.subr.mxu0 0.0
    %1479 = vmatpush1.xpose.msra.mxu0 %v1448
    %1480 = vmatprep.subr.mxu0 0.0
    %1481 = vmatpush1.xpose.msra.mxu0 %v1446
    %1482 = vmatprep.subr.mxu0 0.0
    %1483 = vmatpush2.xpose.msra.mxu0 0.0
    %1484 = vmatprep.subr.mxu0 0.0
    %1485 = vmatpush2.xpose.msra.mxu0 0.0
    %1486 = vmatprep.subr.mxu0 0.0
    %1487 = vmatpush2.xpose.msra.mxu0 0.0
    %1488 = vmatprep.subr.mxu0 0.0
    %1489 = vmatpush2.xpose.msra.mxu0 0.0
    %1490 = vmatprep.subr.mxu0 0.0
    %1491 = vmatpush2.xpose.msra.mxu0 0.0
    %1492 = vmatprep.subr.mxu0 0.0
    %1493 = vmatpush2.xpose.msra.mxu0 0.0
    %1494 = vmatprep.subr.mxu0 0.0
    %1495 = vmatpush2.xpose.msra.mxu0 0.0
    %1496 = vmatprep.subr.mxu0 0.0
    %1497 = vmatpush2.xpose.msra.mxu0 0.0
    %1498 = vmatprep.subr.mxu0 0.0
    %1499 = vmatpush2.xpose.msra.mxu0 0.0
    %1500 = vmatprep.subr.mxu0 0.0
    %1501 = vmatpush2.xpose.msra.mxu0 0.0
    %1502 = vmatprep.subr.mxu0 0.0
    %1503 = vmatpush2.xpose.msra.mxu0 0.0
    %1504 = vmatprep.subr.mxu0 0.0
    %1505 = vmatpush2.xpose.msra.mxu0 0.0
    %1506 = vmatprep.subr.mxu0 0.0
    %1507 = vmatpush2.xpose.msra.mxu0 0.0
    %1508 = vmatprep.subr.mxu0 0.0
    %1509 = vmatpush2.xpose.msra.mxu0 0.0
    %1510 = vmatprep.subr.mxu0 0.0
    %1511 = vmatpush2.xpose.msra.mxu0 0.0
    %1512 = vmatprep.subr.mxu0 0.0
    %1513 = vmatpush2.xpose.msra.mxu0 0.0
    %1514 = vmatprep.mubr.f32.mxu0 0.0
    %1515 = vmatmul.mubr.f32.gmra.mxu0 %v1442
    %v1516 = vpop.f32.mrf.mxu0
    %v1517 = vadd.f32 0.0, %v1516
    %v1518 = vpop.f32.mrf.mxu0
    %1519 = vmatprep.mubr.f32.mxu0 0.0
    %1520 = vmatmul.mubr.f32.gmra.mxu0 %v1444
    %v1521 = vpop.f32.mrf.mxu0
    %v1522 = vadd.f32 0.0, %v1521
    %v1523 = vpop.f32.mrf.mxu0
    %1524 = vdwg.mxu0
    %v1525 = vmul.f32 %v1517, 0.35355338
    %v1526 = vmul.f32 %v1522, 0.35355338
    %v1527 = vadd.f32 %v1525, %v427
    %v1528 = vadd.f32 %v1526, %v428
    %v1529 = vsel %vm98, %v1527, -inf
    %1530 = vmax.xlane.f32.xlu0 %v1529
    %v1531 = vpop.xlane.xlu0 %1530
    %v1532 = vsel %vm98, %v1528, -inf
    %1533 = vmax.xlane.f32.xlu0 %v1532
    %v1534 = vpop.xlane.xlu0 %1533
    %v1535 = vsub.f32 %v1527, %v1531
    %v1536 = vsub.f32 %v1528, %v1534
    %v1537 = vmul.f32 %v1535, 1.442695
    %v1538 = vpow.pop %v1537
    %v1539 = vmul.f32 %v1536, 1.442695
    %v1540 = vpow.pop %v1539
    %v1541 = vsel %vm98, %v1538, 0.0
    %1542 = vadd.xlane.f32.xlu0 %v1541
    %v1543 = vpop.xlane.xlu0 %1542
    %v1544 = vsel %vm98, %v1540, 0.0
    %1545 = vadd.xlane.f32.xlu0 %v1544
    %v1546 = vpop.xlane.xlu0 %1545
    %v1547 = vrcp.pop %v1543
    %v1548 = vrcp.pop %v1546
    %v1549 = vmul.f32 %v1538, %v1547
    %v1550 = vmul.f32 %v1540, %v1548
    %1551 = vrot.lane.b32.xlu0 %v659, 48
    %v1552 = vpop.permute.xlu0 %1551
    %1553 = vrot.lane.b32.xlu0 %v664, 48
    %v1554 = vpop.permute.xlu0 %1553
    %v1558 = vsel %vm98, %v1549, 0
    %v1561 = vsel %vm98, %v1550, 0
    %1563 = vmatprep.subr.mxu0 0.0
    %1564 = vmatpush1.msra.mxu0 0.0
    %1565 = vmatprep.subr.mxu0 0.0
    %1566 = vmatpush1.msra.mxu0 0.0
    %1567 = vmatprep.subr.mxu0 0.0
    %1568 = vmatpush1.msra.mxu0 0.0
    %1569 = vmatprep.subr.mxu0 0.0
    %1570 = vmatpush1.msra.mxu0 0.0
    %1571 = vmatprep.subr.mxu0 0.0
    %1572 = vmatpush1.msra.mxu0 0.0
    %1573 = vmatprep.subr.mxu0 0.0
    %1574 = vmatpush1.msra.mxu0 0.0
    %1575 = vmatprep.subr.mxu0 0.0
    %1576 = vmatpush1.msra.mxu0 0.0
    %1577 = vmatprep.subr.mxu0 0.0
    %1578 = vmatpush1.msra.mxu0 0.0
    %1579 = vmatprep.subr.mxu0 0.0
    %1580 = vmatpush1.msra.mxu0 0.0
    %1581 = vmatprep.subr.mxu0 0.0
    %1582 = vmatpush1.msra.mxu0 0.0
    %1583 = vmatprep.subr.mxu0 0.0
    %1584 = vmatpush1.msra.mxu0 0.0
    %1585 = vmatprep.subr.mxu0 0.0
    %1586 = vmatpush1.msra.mxu0 0.0
    %1587 = vmatprep.subr.mxu0 0.0
    %1588 = vmatpush1.msra.mxu0 0.0
    %1589 = vmatprep.subr.mxu0 0.0
    %1590 = vmatpush1.msra.mxu0 0.0
    %1591 = vmatprep.subr.mxu0 0.0
    %1592 = vmatpush1.msra.mxu0 %v1554
    %1593 = vmatprep.subr.mxu0 0.0
    %1594 = vmatpush1.msra.mxu0 %v1552
    %1595 = vmatprep.subr.mxu0 0.0
    %1596 = vmatpush2.msra.mxu0 0.0
    %1597 = vmatprep.subr.mxu0 0.0
    %1598 = vmatpush2.msra.mxu0 0.0
    %1599 = vmatprep.subr.mxu0 0.0
    %1600 = vmatpush2.msra.mxu0 0.0
    %1601 = vmatprep.subr.mxu0 0.0
    %1602 = vmatpush2.msra.mxu0 0.0
    %1603 = vmatprep.subr.mxu0 0.0
    %1604 = vmatpush2.msra.mxu0 0.0
    %1605 = vmatprep.subr.mxu0 0.0
    %1606 = vmatpush2.msra.mxu0 0.0
    %1607 = vmatprep.subr.mxu0 0.0
    %1608 = vmatpush2.msra.mxu0 0.0
    %1609 = vmatprep.subr.mxu0 0.0
    %1610 = vmatpush2.msra.mxu0 0.0
    %1611 = vmatprep.subr.mxu0 0.0
    %1612 = vmatpush2.msra.mxu0 0.0
    %1613 = vmatprep.subr.mxu0 0.0
    %1614 = vmatpush2.msra.mxu0 0.0
    %1615 = vmatprep.subr.mxu0 0.0
    %1616 = vmatpush2.msra.mxu0 0.0
    %1617 = vmatprep.subr.mxu0 0.0
    %1618 = vmatpush2.msra.mxu0 0.0
    %1619 = vmatprep.subr.mxu0 0.0
    %1620 = vmatpush2.msra.mxu0 0.0
    %1621 = vmatprep.subr.mxu0 0.0
    %1622 = vmatpush2.msra.mxu0 0.0
    %1623 = vmatprep.subr.mxu0 0.0
    %1624 = vmatpush2.msra.mxu0 0.0
    %1625 = vmatprep.subr.mxu0 0.0
    %1626 = vmatpush2.msra.mxu0 0.0
    %1627 = vmatprep.mubr.f32.mxu0 0.0
    %1628 = vmatmul.mubr.f32.gmra.mxu0 %v1558
    %v1629 = vpop.f32.mrf.mxu0
    %v1630 = vadd.f32 0.0, %v1629
    %v1631 = vpop.f32.mrf.mxu0
    %1632 = vmatprep.mubr.f32.mxu0 0.0
    %1633 = vmatmul.mubr.f32.gmra.mxu0 %v1561
    %v1634 = vpop.f32.mrf.mxu0
    %v1635 = vadd.f32 0.0, %v1634
    %v1636 = vpop.f32.mrf.mxu0
    %1637 = vdwg.mxu0
    %v1639 = vsel %vm869, %v1630, 0
    %v1642 = vsel %vm869, %v1635, 0
    %1644 = vmatprep.subr.mxu0 0.0
    %1645 = vmatpush1.msra.mxu0 0.0
    %1646 = vmatprep.subr.mxu0 0.0
    %1647 = vmatpush1.msra.mxu0 0.0
    %1648 = vmatprep.subr.mxu0 0.0
    %1649 = vmatpush1.msra.mxu0 0.0
    %1650 = vmatprep.subr.mxu0 0.0
    %1651 = vmatpush1.msra.mxu0 0.0
    %1652 = vmatprep.subr.mxu0 0.0
    %1653 = vmatpush1.msra.mxu0 0.0
    %1654 = vmatprep.subr.mxu0 0.0
    %1655 = vmatpush1.msra.mxu0 0.0
    %1656 = vmatprep.subr.mxu0 0.0
    %1657 = vmatpush1.msra.mxu0 0.0
    %1658 = vmatprep.subr.mxu0 0.0
    %1659 = vmatpush1.msra.mxu0 0.0
    %1660 = vmatprep.subr.mxu0 0.0
    %1661 = vmatpush1.msra.mxu0 0.0
    %1662 = vmatprep.subr.mxu0 0.0
    %1663 = vmatpush1.msra.mxu0 0.0
    %1664 = vmatprep.subr.mxu0 0.0
    %1665 = vmatpush1.msra.mxu0 0.0
    %1666 = vmatprep.subr.mxu0 0.0
    %1667 = vmatpush1.msra.mxu0 0.0
    %1668 = vmatprep.subr.mxu0 0.0
    %1669 = vmatpush1.msra.mxu0 0.0
    %1670 = vmatprep.subr.mxu0 0.0
    %1671 = vmatpush1.msra.mxu0 0.0
    %1672 = vmatprep.subr.mxu0 0.0
    %1673 = vmatpush1.msra.mxu0 0.0
    %1674 = vmatprep.subr.mxu0 0.0
    %1675 = vmatpush1.msra.mxu0 %v861
    %1676 = vmatprep.subr.mxu0 0.0
    %1677 = vmatpush2.msra.mxu0 0.0
    %1678 = vmatprep.subr.mxu0 0.0
    %1679 = vmatpush2.msra.mxu0 0.0
    %1680 = vmatprep.subr.mxu0 0.0
    %1681 = vmatpush2.msra.mxu0 0.0
    %1682 = vmatprep.subr.mxu0 0.0
    %1683 = vmatpush2.msra.mxu0 0.0
    %1684 = vmatprep.subr.mxu0 0.0
    %1685 = vmatpush2.msra.mxu0 0.0
    %1686 = vmatprep.subr.mxu0 0.0
    %1687 = vmatpush2.msra.mxu0 0.0
    %1688 = vmatprep.subr.mxu0 0.0
    %1689 = vmatpush2.msra.mxu0 0.0
    %1690 = vmatprep.subr.mxu0 0.0
    %1691 = vmatpush2.msra.mxu0 0.0
    %1692 = vmatprep.subr.mxu0 0.0
    %1693 = vmatpush2.msra.mxu0 0.0
    %1694 = vmatprep.subr.mxu0 0.0
    %1695 = vmatpush2.msra.mxu0 0.0
    %1696 = vmatprep.subr.mxu0 0.0
    %1697 = vmatpush2.msra.mxu0 0.0
    %1698 = vmatprep.subr.mxu0 0.0
    %1699 = vmatpush2.msra.mxu0 0.0
    %1700 = vmatprep.subr.mxu0 0.0
    %1701 = vmatpush2.msra.mxu0 0.0
    %1702 = vmatprep.subr.mxu0 0.0
    %1703 = vmatpush2.msra.mxu0 0.0
    %1704 = vmatprep.subr.mxu0 0.0
    %1705 = vmatpush2.msra.mxu0 0.0
    %1706 = vmatprep.subr.mxu0 0.0
    %1707 = vmatpush2.msra.mxu0 0.0
    %1708 = vmatprep.mubr.f32.mxu0 0.0
    %1709 = vmatmul.mubr.f32.gmra.mxu0 %v1639
    %v1710 = vpop.f32.mrf.mxu0
    %v1711 = vadd.f32 0.0, %v1710
    %v1712 = vpop.f32.mrf.mxu0
    %1713 = vmatprep.mubr.f32.mxu0 0.0
    %1714 = vmatmul.mubr.f32.gmra.mxu0 %v1642
    %v1715 = vpop.f32.mrf.mxu0
    %v1716 = vadd.f32 0.0, %v1715
    %v1717 = vpop.f32.mrf.mxu0
    %1718 = vdwg.mxu0
    %v1719 = vadd.f32 %v1426, %v1711
    %v1720 = vadd.f32 %v1431, %v1716
    %1721 = vrot.lane.b32.xlu0 %v752, 104
    %v1722 = vpop.permute.xlu0 %1721
    %1723 = vrot.lane.b32.xlu0 %v753, 104
    %v1724 = vpop.permute.xlu0 %1723
    %1725 = vrot.lane.b32.xlu0 %v857, 72
    %v1726 = vpop.permute.xlu0 %1725
    %1727 = vrot.lane.b32.xlu0 %v858, 72
    %v1728 = vpop.permute.xlu0 %1727
    %v1729 = vsel %vm869, %v1722, 0
    %v1731 = vsel %vm869, %v1724, 0
    %v1733 = vsel %vm869, %v1726, 0
    %v1735 = vsel %vm869, %v1728, 0
    %1737 = vmatprep.subr.mxu0 0.0
    %1738 = vmatpush1.xpose.msra.mxu0 0.0
    %1739 = vmatprep.subr.mxu0 0.0
    %1740 = vmatpush1.xpose.msra.mxu0 0.0
    %1741 = vmatprep.subr.mxu0 0.0
    %1742 = vmatpush1.xpose.msra.mxu0 0.0
    %1743 = vmatprep.subr.mxu0 0.0
    %1744 = vmatpush1.xpose.msra.mxu0 0.0
    %1745 = vmatprep.subr.mxu0 0.0
    %1746 = vmatpush1.xpose.msra.mxu0 0.0
    %1747 = vmatprep.subr.mxu0 0.0
    %1748 = vmatpush1.xpose.msra.mxu0 0.0
    %1749 = vmatprep.subr.mxu0 0.0
    %1750 = vmatpush1.xpose.msra.mxu0 0.0
    %1751 = vmatprep.subr.mxu0 0.0
    %1752 = vmatpush1.xpose.msra.mxu0 0.0
    %1753 = vmatprep.subr.mxu0 0.0
    %1754 = vmatpush1.xpose.msra.mxu0 0.0
    %1755 = vmatprep.subr.mxu0 0.0
    %1756 = vmatpush1.xpose.msra.mxu0 0.0
    %1757 = vmatprep.subr.mxu0 0.0
    %1758 = vmatpush1.xpose.msra.mxu0 0.0
    %1759 = vmatprep.subr.mxu0 0.0
    %1760 = vmatpush1.xpose.msra.mxu0 0.0
    %1761 = vmatprep.subr.mxu0 0.0
    %1762 = vmatpush1.xpose.msra.mxu0 0.0
    %1763 = vmatprep.subr.mxu0 0.0
    %1764 = vmatpush1.xpose.msra.mxu0 0.0
    %1765 = vmatprep.subr.mxu0 0.0
    %1766 = vmatpush1.xpose.msra.mxu0 %v1735
    %1767 = vmatprep.subr.mxu0 0.0
    %1768 = vmatpush1.xpose.msra.mxu0 %v1733
    %1769 = vmatprep.subr.mxu0 0.0
    %1770 = vmatpush2.xpose.msra.mxu0 0.0
    %1771 = vmatprep.subr.mxu0 0.0
    %1772 = vmatpush2.xpose.msra.mxu0 0.0
    %1773 = vmatprep.subr.mxu0 0.0
    %1774 = vmatpush2.xpose.msra.mxu0 0.0
    %1775 = vmatprep.subr.mxu0 0.0
    %1776 = vmatpush2.xpose.msra.mxu0 0.0
    %1777 = vmatprep.subr.mxu0 0.0
    %1778 = vmatpush2.xpose.msra.mxu0 0.0
    %1779 = vmatprep.subr.mxu0 0.0
    %1780 = vmatpush2.xpose.msra.mxu0 0.0
    %1781 = vmatprep.subr.mxu0 0.0
    %1782 = vmatpush2.xpose.msra.mxu0 0.0
    %1783 = vmatprep.subr.mxu0 0.0
    %1784 = vmatpush2.xpose.msra.mxu0 0.0
    %1785 = vmatprep.subr.mxu0 0.0
    %1786 = vmatpush2.xpose.msra.mxu0 0.0
    %1787 = vmatprep.subr.mxu0 0.0
    %1788 = vmatpush2.xpose.msra.mxu0 0.0
    %1789 = vmatprep.subr.mxu0 0.0
    %1790 = vmatpush2.xpose.msra.mxu0 0.0
    %1791 = vmatprep.subr.mxu0 0.0
    %1792 = vmatpush2.xpose.msra.mxu0 0.0
    %1793 = vmatprep.subr.mxu0 0.0
    %1794 = vmatpush2.xpose.msra.mxu0 0.0
    %1795 = vmatprep.subr.mxu0 0.0
    %1796 = vmatpush2.xpose.msra.mxu0 0.0
    %1797 = vmatprep.subr.mxu0 0.0
    %1798 = vmatpush2.xpose.msra.mxu0 0.0
    %1799 = vmatprep.subr.mxu0 0.0
    %1800 = vmatpush2.xpose.msra.mxu0 0.0
    %1801 = vmatprep.mubr.f32.mxu0 0.0
    %1802 = vmatmul.mubr.f32.gmra.mxu0 %v1729
    %v1803 = vpop.f32.mrf.mxu0
    %v1804 = vadd.f32 0.0, %v1803
    %v1805 = vpop.f32.mrf.mxu0
    %1806 = vmatprep.mubr.f32.mxu0 0.0
    %1807 = vmatmul.mubr.f32.gmra.mxu0 %v1731
    %v1808 = vpop.f32.mrf.mxu0
    %v1809 = vadd.f32 0.0, %v1808
    %v1810 = vpop.f32.mrf.mxu0
    %1811 = vdwg.mxu0
    %v1812 = vmul.f32 %v1804, 0.35355338
    %v1813 = vmul.f32 %v1809, 0.35355338
    %v1814 = vadd.f32 %v1812, %v427
    %v1815 = vadd.f32 %v1813, %v428
    %v1816 = vsel %vm98, %v1814, -inf
    %1817 = vmax.xlane.f32.xlu0 %v1816
    %v1818 = vpop.xlane.xlu0 %1817
    %v1819 = vsel %vm98, %v1815, -inf
    %1820 = vmax.xlane.f32.xlu0 %v1819
    %v1821 = vpop.xlane.xlu0 %1820
    %v1822 = vsub.f32 %v1814, %v1818
    %v1823 = vsub.f32 %v1815, %v1821
    %v1824 = vmul.f32 %v1822, 1.442695
    %v1825 = vpow.pop %v1824
    %v1826 = vmul.f32 %v1823, 1.442695
    %v1827 = vpow.pop %v1826
    %v1828 = vsel %vm98, %v1825, 0.0
    %1829 = vadd.xlane.f32.xlu0 %v1828
    %v1830 = vpop.xlane.xlu0 %1829
    %v1831 = vsel %vm98, %v1827, 0.0
    %1832 = vadd.xlane.f32.xlu0 %v1831
    %v1833 = vpop.xlane.xlu0 %1832
    %v1834 = vrcp.pop %v1830
    %v1835 = vrcp.pop %v1833
    %v1836 = vmul.f32 %v1825, %v1834
    %v1837 = vmul.f32 %v1827, %v1835
    %1838 = vrot.lane.b32.xlu0 %v659, 40
    %v1839 = vpop.permute.xlu0 %1838
    %1840 = vrot.lane.b32.xlu0 %v664, 40
    %v1841 = vpop.permute.xlu0 %1840
    %v1845 = vsel %vm98, %v1836, 0
    %v1848 = vsel %vm98, %v1837, 0
    %1850 = vmatprep.subr.mxu0 0.0
    %1851 = vmatpush1.msra.mxu0 0.0
    %1852 = vmatprep.subr.mxu0 0.0
    %1853 = vmatpush1.msra.mxu0 0.0
    %1854 = vmatprep.subr.mxu0 0.0
    %1855 = vmatpush1.msra.mxu0 0.0
    %1856 = vmatprep.subr.mxu0 0.0
    %1857 = vmatpush1.msra.mxu0 0.0
    %1858 = vmatprep.subr.mxu0 0.0
    %1859 = vmatpush1.msra.mxu0 0.0
    %1860 = vmatprep.subr.mxu0 0.0
    %1861 = vmatpush1.msra.mxu0 0.0
    %1862 = vmatprep.subr.mxu0 0.0
    %1863 = vmatpush1.msra.mxu0 0.0
    %1864 = vmatprep.subr.mxu0 0.0
    %1865 = vmatpush1.msra.mxu0 0.0
    %1866 = vmatprep.subr.mxu0 0.0
    %1867 = vmatpush1.msra.mxu0 0.0
    %1868 = vmatprep.subr.mxu0 0.0
    %1869 = vmatpush1.msra.mxu0 0.0
    %1870 = vmatprep.subr.mxu0 0.0
    %1871 = vmatpush1.msra.mxu0 0.0
    %1872 = vmatprep.subr.mxu0 0.0
    %1873 = vmatpush1.msra.mxu0 0.0
    %1874 = vmatprep.subr.mxu0 0.0
    %1875 = vmatpush1.msra.mxu0 0.0
    %1876 = vmatprep.subr.mxu0 0.0
    %1877 = vmatpush1.msra.mxu0 0.0
    %1878 = vmatprep.subr.mxu0 0.0
    %1879 = vmatpush1.msra.mxu0 %v1841
    %1880 = vmatprep.subr.mxu0 0.0
    %1881 = vmatpush1.msra.mxu0 %v1839
    %1882 = vmatprep.subr.mxu0 0.0
    %1883 = vmatpush2.msra.mxu0 0.0
    %1884 = vmatprep.subr.mxu0 0.0
    %1885 = vmatpush2.msra.mxu0 0.0
    %1886 = vmatprep.subr.mxu0 0.0
    %1887 = vmatpush2.msra.mxu0 0.0
    %1888 = vmatprep.subr.mxu0 0.0
    %1889 = vmatpush2.msra.mxu0 0.0
    %1890 = vmatprep.subr.mxu0 0.0
    %1891 = vmatpush2.msra.mxu0 0.0
    %1892 = vmatprep.subr.mxu0 0.0
    %1893 = vmatpush2.msra.mxu0 0.0
    %1894 = vmatprep.subr.mxu0 0.0
    %1895 = vmatpush2.msra.mxu0 0.0
    %1896 = vmatprep.subr.mxu0 0.0
    %1897 = vmatpush2.msra.mxu0 0.0
    %1898 = vmatprep.subr.mxu0 0.0
    %1899 = vmatpush2.msra.mxu0 0.0
    %1900 = vmatprep.subr.mxu0 0.0
    %1901 = vmatpush2.msra.mxu0 0.0
    %1902 = vmatprep.subr.mxu0 0.0
    %1903 = vmatpush2.msra.mxu0 0.0
    %1904 = vmatprep.subr.mxu0 0.0
    %1905 = vmatpush2.msra.mxu0 0.0
    %1906 = vmatprep.subr.mxu0 0.0
    %1907 = vmatpush2.msra.mxu0 0.0
    %1908 = vmatprep.subr.mxu0 0.0
    %1909 = vmatpush2.msra.mxu0 0.0
    %1910 = vmatprep.subr.mxu0 0.0
    %1911 = vmatpush2.msra.mxu0 0.0
    %1912 = vmatprep.subr.mxu0 0.0
    %1913 = vmatpush2.msra.mxu0 0.0
    %1914 = vmatprep.mubr.f32.mxu0 0.0
    %1915 = vmatmul.mubr.f32.gmra.mxu0 %v1845
    %v1916 = vpop.f32.mrf.mxu0
    %v1917 = vadd.f32 0.0, %v1916
    %v1918 = vpop.f32.mrf.mxu0
    %1919 = vmatprep.mubr.f32.mxu0 0.0
    %1920 = vmatmul.mubr.f32.gmra.mxu0 %v1848
    %v1921 = vpop.f32.mrf.mxu0
    %v1922 = vadd.f32 0.0, %v1921
    %v1923 = vpop.f32.mrf.mxu0
    %1924 = vdwg.mxu0
    %v1926 = vsel %vm869, %v1917, 0
    %v1929 = vsel %vm869, %v1922, 0
    %1931 = vmatprep.subr.mxu0 0.0
    %1932 = vmatpush1.msra.mxu0 0.0
    %1933 = vmatprep.subr.mxu0 0.0
    %1934 = vmatpush1.msra.mxu0 0.0
    %1935 = vmatprep.subr.mxu0 0.0
    %1936 = vmatpush1.msra.mxu0 0.0
    %1937 = vmatprep.subr.mxu0 0.0
    %1938 = vmatpush1.msra.mxu0 0.0
    %1939 = vmatprep.subr.mxu0 0.0
    %1940 = vmatpush1.msra.mxu0 0.0
    %1941 = vmatprep.subr.mxu0 0.0
    %1942 = vmatpush1.msra.mxu0 0.0
    %1943 = vmatprep.subr.mxu0 0.0
    %1944 = vmatpush1.msra.mxu0 0.0
    %1945 = vmatprep.subr.mxu0 0.0
    %1946 = vmatpush1.msra.mxu0 0.0
    %1947 = vmatprep.subr.mxu0 0.0
    %1948 = vmatpush1.msra.mxu0 0.0
    %1949 = vmatprep.subr.mxu0 0.0
    %1950 = vmatpush1.msra.mxu0 0.0
    %1951 = vmatprep.subr.mxu0 0.0
    %1952 = vmatpush1.msra.mxu0 0.0
    %1953 = vmatprep.subr.mxu0 0.0
    %1954 = vmatpush1.msra.mxu0 0.0
    %1955 = vmatprep.subr.mxu0 0.0
    %1956 = vmatpush1.msra.mxu0 0.0
    %1957 = vmatprep.subr.mxu0 0.0
    %1958 = vmatpush1.msra.mxu0 0.0
    %1959 = vmatprep.subr.mxu0 0.0
    %1960 = vmatpush1.msra.mxu0 0.0
    %1961 = vmatprep.subr.mxu0 0.0
    %1962 = vmatpush1.msra.mxu0 %v862
    %1963 = vmatprep.subr.mxu0 0.0
    %1964 = vmatpush2.msra.mxu0 0.0
    %1965 = vmatprep.subr.mxu0 0.0
    %1966 = vmatpush2.msra.mxu0 0.0
    %1967 = vmatprep.subr.mxu0 0.0
    %1968 = vmatpush2.msra.mxu0 0.0
    %1969 = vmatprep.subr.mxu0 0.0
    %1970 = vmatpush2.msra.mxu0 0.0
    %1971 = vmatprep.subr.mxu0 0.0
    %1972 = vmatpush2.msra.mxu0 0.0
    %1973 = vmatprep.subr.mxu0 0.0
    %1974 = vmatpush2.msra.mxu0 0.0
    %1975 = vmatprep.subr.mxu0 0.0
    %1976 = vmatpush2.msra.mxu0 0.0
    %1977 = vmatprep.subr.mxu0 0.0
    %1978 = vmatpush2.msra.mxu0 0.0
    %1979 = vmatprep.subr.mxu0 0.0
    %1980 = vmatpush2.msra.mxu0 0.0
    %1981 = vmatprep.subr.mxu0 0.0
    %1982 = vmatpush2.msra.mxu0 0.0
    %1983 = vmatprep.subr.mxu0 0.0
    %1984 = vmatpush2.msra.mxu0 0.0
    %1985 = vmatprep.subr.mxu0 0.0
    %1986 = vmatpush2.msra.mxu0 0.0
    %1987 = vmatprep.subr.mxu0 0.0
    %1988 = vmatpush2.msra.mxu0 0.0
    %1989 = vmatprep.subr.mxu0 0.0
    %1990 = vmatpush2.msra.mxu0 0.0
    %1991 = vmatprep.subr.mxu0 0.0
    %1992 = vmatpush2.msra.mxu0 0.0
    %1993 = vmatprep.subr.mxu0 0.0
    %1994 = vmatpush2.msra.mxu0 0.0
    %1995 = vmatprep.mubr.f32.mxu0 0.0
    %1996 = vmatmul.mubr.f32.gmra.mxu0 %v1926
    %v1997 = vpop.f32.mrf.mxu0
    %v1998 = vadd.f32 0.0, %v1997
    %v1999 = vpop.f32.mrf.mxu0
    %2000 = vmatprep.mubr.f32.mxu0 0.0
    %2001 = vmatmul.mubr.f32.gmra.mxu0 %v1929
    %v2002 = vpop.f32.mrf.mxu0
    %v2003 = vadd.f32 0.0, %v2002
    %v2004 = vpop.f32.mrf.mxu0
    %2005 = vdwg.mxu0
    %v2006 = vadd.f32 %v1719, %v1998
    %v2007 = vadd.f32 %v1720, %v2003
    %2010 = vrot.lane.b32.xlu0 %v2006, 64
    %v2011 = vpop.permute.xlu0 %2010
    %2012 = vrot.lane.b32.xlu0 %v2007, 64
    %v2013 = vpop.permute.xlu0 %2012
    %v2016 = vmul.f32 %v522, %v2011
    %v2017 = vmul.f32 %v528, %v2013
    %2020 = vrot.lane.b32.xlu0 %v2016, 64
    %v2021 = vpop.permute.xlu0 %2020
    %2022 = vrot.lane.b32.xlu0 %v2017, 64
    %v2023 = vpop.permute.xlu0 %2022
    %v2026 = vadd.f32 %v172, %v2021
    %v2027 = vadd.f32 %v177, %v2023
    %v2028 = vld [vmem:[%s17] sm:$0x1]
    %v2029 = vsel %vm323, %v2026, 0.0
    %2030 = vadd.xlane.f32.xlu0 %v2029
    %v2031 = vpop.xlane.xlu0 %2030
    %v2032 = vsel %vm323, %v2027, 0.0
    %2033 = vadd.xlane.f32.xlu0 %v2032
    %v2034 = vpop.xlane.xlu0 %2033
    %v2035 = vmul.f32 %v2031, %v539
    %v2036 = vmul.f32 %v2034, %v539
    %v2037 = vsub.f32 %v2026, %v2035
    %v2038 = vsub.f32 %v2027, %v2036
    %v2039 = vmul.f32 %v2037, %v2037
    %v2040 = vmul.f32 %v2038, %v2038
    %v2041 = vsel %vm323, %v2039, 0.0
    %2042 = vadd.xlane.f32.xlu0 %v2041
    %v2043 = vpop.xlane.xlu0 %2042
    %v2044 = vsel %vm323, %v2040, 0.0
    %2045 = vadd.xlane.f32.xlu0 %v2044
    %v2046 = vpop.xlane.xlu0 %2045
    %v2047 = vmul.f32 %v2043, %v539
    %v2048 = vmul.f32 %v2046, %v539
    %v2049 = vadd.f32 %v2047, 1e-05
    %v2050 = vadd.f32 %v2048, 1e-05
    %v2051 = vrsqrt.pop %v2049
    %v2052 = vrsqrt.pop %v2050
    %v2053 = vmul.f32 %v2037, %v2051
    %v2054 = vmul.f32 %v2038, %v2052
    %v2056 = vlaneseq
    %v2057 = vshrl.u32 %v2056, 7
    %v2058 = vsub.s32 0, %v2057
    %v2059 = vrot.slane %v2028, %v2058
    %v2061 = vmul.f32 %v2053, %v2059
    %v2062 = vmul.f32 %v2054, %v2059
    %v2063 = vadd.f32 %v524, 1.0
    %v2064 = vadd.f32 %v530, 1.0
    %v2065 = vmul.f32 %v2061, %v2063
    %v2066 = vmul.f32 %v2062, %v2064
    %2069 = vrot.lane.b32.xlu0 %v522, 32
    %v2070 = vpop.permute.xlu0 %2069
    %2071 = vrot.lane.b32.xlu0 %v528, 32
    %v2072 = vpop.permute.xlu0 %2071
    %v2075 = vadd.f32 %v2065, %v2070
    %v2076 = vadd.f32 %v2066, %v2072
    %v2077 = vld [vmem:[%s18] sm:$0xff]
    %v2078 = vld [vmem:[%s18 + $0x8] sm:$0xff]
    %v2079 = vld [vmem:[%s18 + $0x10] sm:$0xff]
    %v2080 = vld [vmem:[%s18 + $0x18] sm:$0xff]
    %v2081 = vld [vmem:[%s19] sm:$0x1]
    %v2083 = vlaneseq
    %v2084 = vshrl.u32 %v2083, 7
    %v2085 = vsub.s32 0, %v2084
    %v2086 = vrot.slane %v2081, %v2085
    %v2089 = vsel %vm323, %v2075, 0
    %v2092 = vsel %vm323, %v2076, 0
    %2094 = vmatprep.subr.mxu0 0.0
    %2095 = vmatpush1.msra.mxu0 0.0
    %2096 = vmatprep.subr.mxu0 0.0
    %2097 = vmatpush1.msra.mxu0 0.0
    %2098 = vmatprep.subr.mxu0 0.0
    %2099 = vmatpush1.msra.mxu0 0.0
    %2100 = vmatprep.subr.mxu0 0.0
    %2101 = vmatpush1.msra.mxu0 0.0
    %2102 = vmatprep.subr.mxu0 0.0
    %2103 = vmatpush1.msra.mxu0 0.0
    %2104 = vmatprep.subr.mxu0 0.0
    %2105 = vmatpush1.msra.mxu0 0.0
    %2106 = vmatprep.subr.mxu0 0.0
    %2107 = vmatpush1.msra.mxu0 0.0
    %2108 = vmatprep.subr.mxu0 0.0
    %2109 = vmatpush1.msra.mxu0 0.0
    %2110 = vmatprep.subr.mxu0 0.0
    %2111 = vmatpush1.msra.mxu0 0.0
    %2112 = vmatprep.subr.mxu0 0.0
    %2113 = vmatpush1.msra.mxu0 0.0
    %2114 = vmatprep.subr.mxu0 0.0
    %2115 = vmatpush1.msra.mxu0 0.0
    %2116 = vmatprep.subr.mxu0 0.0
    %2117 = vmatpush1.msra.mxu0 0.0
    %2118 = vmatprep.subr.mxu0 0.0
    %2119 = vmatpush1.msra.mxu0 %v2080
    %2120 = vmatprep.subr.mxu0 0.0
    %2121 = vmatpush1.msra.mxu0 %v2079
    %2122 = vmatprep.subr.mxu0 0.0
    %2123 = vmatpush1.msra.mxu0 %v2078
    %2124 = vmatprep.subr.mxu0 0.0
    %2125 = vmatpush1.msra.mxu0 %v2077
    %2126 = vmatprep.subr.mxu0 0.0
    %2127 = vmatpush2.msra.mxu0 0.0
    %2128 = vmatprep.subr.mxu0 0.0
    %2129 = vmatpush2.msra.mxu0 0.0
    %2130 = vmatprep.subr.mxu0 0.0
    %2131 = vmatpush2.msra.mxu0 0.0
    %2132 = vmatprep.subr.mxu0 0.0
    %2133 = vmatpush2.msra.mxu0 0.0
    %2134 = vmatprep.subr.mxu0 0.0
    %2135 = vmatpush2.msra.mxu0 0.0
    %2136 = vmatprep.subr.mxu0 0.0
    %2137 = vmatpush2.msra.mxu0 0.0
    %2138 = vmatprep.subr.mxu0 0.0
    %2139 = vmatpush2.msra.mxu0 0.0
    %2140 = vmatprep.subr.mxu0 0.0
    %2141 = vmatpush2.msra.mxu0 0.0
    %2142 = vmatprep.subr.mxu0 0.0
    %2143 = vmatpush2.msra.mxu0 0.0
    %2144 = vmatprep.subr.mxu0 0.0
    %2145 = vmatpush2.msra.mxu0 0.0
    %2146 = vmatprep.subr.mxu0 0.0
    %2147 = vmatpush2.msra.mxu0 0.0
    %2148 = vmatprep.subr.mxu0 0.0
    %2149 = vmatpush2.msra.mxu0 0.0
    %2150 = vmatprep.subr.mxu0 0.0
    %2151 = vmatpush2.msra.mxu0 0.0
    %2152 = vmatprep.subr.mxu0 0.0
    %2153 = vmatpush2.msra.mxu0 0.0
    %2154 = vmatprep.subr.mxu0 0.0
    %2155 = vmatpush2.msra.mxu0 0.0
    %2156 = vmatprep.subr.mxu0 0.0
    %2157 = vmatpush2.msra.mxu0 0.0
    %2158 = vmatprep.mubr.f32.mxu0 0.0
    %2159 = vmatmul.mubr.f32.gmra.mxu0 %v2089
    %v2160 = vpop.f32.mrf.mxu0
    %v2161 = vadd.f32 %v2086, %v2160
    %v2162 = vpop.f32.mrf.mxu0
    %2163 = vmatprep.mubr.f32.mxu0 0.0
    %2164 = vmatmul.mubr.f32.gmra.mxu0 %v2092
    %v2165 = vpop.f32.mrf.mxu0
    %v2166 = vadd.f32 %v2086, %v2165
    %v2167 = vpop.f32.mrf.mxu0
    %2168 = vdwg.mxu0
    %v2169 = vmul.f32 %v2161, 0.5
    %v2170 = vmul.f32 %v2166, 0.5
    %v2171 = vmul.f32 %v2161, 0.044715
    %v2172 = vmul.f32 %v2166, 0.044715
    %v2173 = vmul.f32 %v2171, %v2161
    %v2174 = vmul.f32 %v2172, %v2166
    %v2175 = vmul.f32 %v2173, %v2161
    %v2176 = vmul.f32 %v2174, %v2166
    %v2177 = vadd.f32 %v2161, %v2175
    %v2178 = vadd.f32 %v2166, %v2176
    %v2179 = vmul.f32 %v2177, 0.7978846
    %v2180 = vmul.f32 %v2178, 0.7978846
    %v2181 = vtanh.pop %v2179
    %v2182 = vtanh.pop %v2180
    %v2183 = vadd.f32 %v2181, 1.0
    %v2184 = vadd.f32 %v2182, 1.0
    %v2185 = vmul.f32 %v2169, %v2183
    %v2186 = vmul.f32 %v2170, %v2184
    %v2187 = vld [vmem:[%s20] sm:$0xff]
    %v2188 = vld [vmem:[%s20 + $0x8] sm:$0xff]
    %v2189 = vld [vmem:[%s20 + $0x10] sm:$0xff]
    %v2190 = vld [vmem:[%s20 + $0x18] sm:$0xff]
    %v2191 = vld [vmem:[%s20 + $0x20] sm:$0xff]
    %v2192 = vld [vmem:[%s20 + $0x28] sm:$0xff]
    %v2193 = vld [vmem:[%s20 + $0x30] sm:$0xff]
    %v2194 = vld [vmem:[%s20 + $0x38] sm:$0xff]
    %v2195 = vld [vmem:[%s20 + $0x40] sm:$0xff]
    %v2196 = vld [vmem:[%s20 + $0x48] sm:$0xff]
    %v2197 = vld [vmem:[%s20 + $0x50] sm:$0xff]
    %v2198 = vld [vmem:[%s20 + $0x58] sm:$0xff]
    %v2199 = vld [vmem:[%s20 + $0x60] sm:$0xff]
    %v2200 = vld [vmem:[%s20 + $0x68] sm:$0xff]
    %v2201 = vld [vmem:[%s20 + $0x70] sm:$0xff]
    %v2202 = vld [vmem:[%s20 + $0x78] sm:$0xff]
    %v2203 = vld [vmem:[%s21] sm:$0x1]
    %v2205 = vlaneseq
    %v2206 = vshrl.u32 %v2205, 7
    %v2207 = vsub.s32 0, %v2206
    %v2208 = vrot.slane %v2203, %v2207
    %2210 = vmatprep.subr.mxu0 0.0
    %2211 = vmatpush1.msra.mxu0 %v2202
    %2212 = vmatprep.subr.mxu0 0.0
    %2213 = vmatpush1.msra.mxu0 %v2201
    %2214 = vmatprep.subr.mxu0 0.0
    %2215 = vmatpush1.msra.mxu0 %v2200
    %2216 = vmatprep.subr.mxu0 0.0
    %2217 = vmatpush1.msra.mxu0 %v2199
    %2218 = vmatprep.subr.mxu0 0.0
    %2219 = vmatpush1.msra.mxu0 %v2198
    %2220 = vmatprep.subr.mxu0 0.0
    %2221 = vmatpush1.msra.mxu0 %v2197
    %2222 = vmatprep.subr.mxu0 0.0
    %2223 = vmatpush1.msra.mxu0 %v2196
    %2224 = vmatprep.subr.mxu0 0.0
    %2225 = vmatpush1.msra.mxu0 %v2195
    %2226 = vmatprep.subr.mxu0 0.0
    %2227 = vmatpush1.msra.mxu0 %v2194
    %2228 = vmatprep.subr.mxu0 0.0
    %2229 = vmatpush1.msra.mxu0 %v2193
    %2230 = vmatprep.subr.mxu0 0.0
    %2231 = vmatpush1.msra.mxu0 %v2192
    %2232 = vmatprep.subr.mxu0 0.0
    %2233 = vmatpush1.msra.mxu0 %v2191
    %2234 = vmatprep.subr.mxu0 0.0
    %2235 = vmatpush1.msra.mxu0 %v2190
    %2236 = vmatprep.subr.mxu0 0.0
    %2237 = vmatpush1.msra.mxu0 %v2189
    %2238 = vmatprep.subr.mxu0 0.0
    %2239 = vmatpush1.msra.mxu0 %v2188
    %2240 = vmatprep.subr.mxu0 0.0
    %2241 = vmatpush1.msra.mxu0 %v2187
    %2242 = vmatprep.subr.mxu0 0.0
    %2243 = vmatpush2.msra.mxu0 0.0
    %2244 = vmatprep.subr.mxu0 0.0
    %2245 = vmatpush2.msra.mxu0 0.0
    %2246 = vmatprep.subr.mxu0 0.0
    %2247 = vmatpush2.msra.mxu0 0.0
    %2248 = vmatprep.subr.mxu0 0.0
    %2249 = vmatpush2.msra.mxu0 0.0
    %2250 = vmatprep.subr.mxu0 0.0
    %2251 = vmatpush2.msra.mxu0 0.0
    %2252 = vmatprep.subr.mxu0 0.0
    %2253 = vmatpush2.msra.mxu0 0.0
    %2254 = vmatprep.subr.mxu0 0.0
    %2255 = vmatpush2.msra.mxu0 0.0
    %2256 = vmatprep.subr.mxu0 0.0
    %2257 = vmatpush2.msra.mxu0 0.0
    %2258 = vmatprep.subr.mxu0 0.0
    %2259 = vmatpush2.msra.mxu0 0.0
    %2260 = vmatprep.subr.mxu0 0.0
    %2261 = vmatpush2.msra.mxu0 0.0
    %2262 = vmatprep.subr.mxu0 0.0
    %2263 = vmatpush2.msra.mxu0 0.0
    %2264 = vmatprep.subr.mxu0 0.0
    %2265 = vmatpush2.msra.mxu0 0.0
    %2266 = vmatprep.subr.mxu0 0.0
    %2267 = vmatpush2.msra.mxu0 0.0
    %2268 = vmatprep.subr.mxu0 0.0
    %2269 = vmatpush2.msra.mxu0 0.0
    %2270 = vmatprep.subr.mxu0 0.0
    %2271 = vmatpush2.msra.mxu0 0.0
    %2272 = vmatprep.subr.mxu0 0.0
    %2273 = vmatpush2.msra.mxu0 0.0
    %2274 = vmatprep.mubr.f32.mxu0 0.0
    %2275 = vmatmul.mubr.f32.gmra.mxu0 %v2185
    %v2276 = vpop.f32.mrf.mxu0
    %v2277 = vadd.f32 %v2208, %v2276
    %v2278 = vpop.f32.mrf.mxu0
    %2279 = vmatprep.mubr.f32.mxu0 0.0
    %2280 = vmatmul.mubr.f32.gmra.mxu0 %v2186
    %v2281 = vpop.f32.mrf.mxu0
    %v2282 = vadd.f32 %v2208, %v2281
    %v2283 = vpop.f32.mrf.mxu0
    %2284 = vdwg.mxu0
    %2287 = vrot.lane.b32.xlu0 %v2277, 32
    %v2288 = vpop.permute.xlu0 %2287
    %2289 = vrot.lane.b32.xlu0 %v2282, 32
    %v2290 = vpop.permute.xlu0 %2289
    %v2293 = vmul.f32 %v524, %v2288
    %v2294 = vmul.f32 %v530, %v2290
    %2297 = vrot.lane.b32.xlu0 %v2293, 96
    %v2298 = vpop.permute.xlu0 %2297
    %2299 = vrot.lane.b32.xlu0 %v2294, 96
    %v2300 = vpop.permute.xlu0 %2299
    %v2303 = vadd.f32 %v2026, %v2298
    %v2304 = vadd.f32 %v2027, %v2300
    %s2305 = scalar_lea.vmem %s12, 64
    %v2306 = vld [vmem:[%s2305] sm:$0xff]
    %v2307 = vld [vmem:[%s2305 + $0x8] sm:$0xff]
    %v2308 = vld [vmem:[%s2305 + $0x10] sm:$0xff]
    %v2309 = vld [vmem:[%s2305 + $0x18] sm:$0xff]
    %v2310 = vld [vmem:[%s2305 + $0x20] sm:$0xff]
    %v2311 = vld [vmem:[%s2305 + $0x28] sm:$0xff]
    %v2312 = vld [vmem:[%s2305 + $0x30] sm:$0xff]
    %v2313 = vld [vmem:[%s2305 + $0x38] sm:$0xff]
    %s2314 = scalar_lea.vmem %s13, 2
    %v2315 = vld [vmem:[%s2314] sm:$0x3]
    %v2317 = vlaneseq
    %v2318 = vshrl.u32 %v2317, 7
    %v2319 = vsub.s32 0, %v2318
    %v2320 = vrot.slane %v2315, %v2319
    %v2321 = vlaneseq
    %v2322 = vshrl.u32 %v2321, 7
    %v2323 = vsub.s32 1, %v2322
    %v2324 = vrot.slane %v2315, %v2323
    %2327 = vmatprep.subr.mxu0 0.0
    %2328 = vmatpush1.msra.mxu0 0.0
    %2329 = vmatprep.subr.mxu0 0.0
    %2330 = vmatpush1.msra.mxu0 0.0
    %2331 = vmatprep.subr.mxu0 0.0
    %2332 = vmatpush1.msra.mxu0 0.0
    %2333 = vmatprep.subr.mxu0 0.0
    %2334 = vmatpush1.msra.mxu0 0.0
    %2335 = vmatprep.subr.mxu0 0.0
    %2336 = vmatpush1.msra.mxu0 0.0
    %2337 = vmatprep.subr.mxu0 0.0
    %2338 = vmatpush1.msra.mxu0 0.0
    %2339 = vmatprep.subr.mxu0 0.0
    %2340 = vmatpush1.msra.mxu0 0.0
    %2341 = vmatprep.subr.mxu0 0.0
    %2342 = vmatpush1.msra.mxu0 0.0
    %2343 = vmatprep.subr.mxu0 0.0
    %2344 = vmatpush1.msra.mxu0 0.0
    %2345 = vmatprep.subr.mxu0 0.0
    %2346 = vmatpush1.msra.mxu0 0.0
    %2347 = vmatprep.subr.mxu0 0.0
    %2348 = vmatpush1.msra.mxu0 0.0
    %2349 = vmatprep.subr.mxu0 0.0
    %2350 = vmatpush1.msra.mxu0 0.0
    %2351 = vmatprep.subr.mxu0 %v2313
    %2352 = vmatpush1.msra.mxu0 %v2312
    %2353 = vmatprep.subr.mxu0 %v2311
    %2354 = vmatpush1.msra.mxu0 %v2310
    %2355 = vmatprep.subr.mxu0 %v2309
    %2356 = vmatpush1.msra.mxu0 %v2308
    %2357 = vmatprep.subr.mxu0 %v2307
    %2358 = vmatpush1.msra.mxu0 %v2306
    %2359 = vmatprep.subr.mxu0 0.0
    %2360 = vmatpush2.msra.mxu0 0.0
    %2361 = vmatprep.subr.mxu0 0.0
    %2362 = vmatpush2.msra.mxu0 0.0
    %2363 = vmatprep.subr.mxu0 0.0
    %2364 = vmatpush2.msra.mxu0 0.0
    %2365 = vmatprep.subr.mxu0 0.0
    %2366 = vmatpush2.msra.mxu0 0.0
    %2367 = vmatprep.subr.mxu0 0.0
    %2368 = vmatpush2.msra.mxu0 0.0
    %2369 = vmatprep.subr.mxu0 0.0
    %2370 = vmatpush2.msra.mxu0 0.0
    %2371 = vmatprep.subr.mxu0 0.0
    %2372 = vmatpush2.msra.mxu0 0.0
    %2373 = vmatprep.subr.mxu0 0.0
    %2374 = vmatpush2.msra.mxu0 0.0
    %2375 = vmatprep.subr.mxu0 0.0
    %2376 = vmatpush2.msra.mxu0 0.0
    %2377 = vmatprep.subr.mxu0 0.0
    %2378 = vmatpush2.msra.mxu0 0.0
    %2379 = vmatprep.subr.mxu0 0.0
    %2380 = vmatpush2.msra.mxu0 0.0
    %2381 = vmatprep.subr.mxu0 0.0
    %2382 = vmatpush2.msra.mxu0 0.0
    %2383 = vmatprep.subr.mxu0 0.0
    %2384 = vmatpush2.msra.mxu0 0.0
    %2385 = vmatprep.subr.mxu0 0.0
    %2386 = vmatpush2.msra.mxu0 0.0
    %2387 = vmatprep.subr.mxu0 0.0
    %2388 = vmatpush2.msra.mxu0 0.0
    %2389 = vmatprep.subr.mxu0 0.0
    %2390 = vmatpush2.msra.mxu0 0.0
    %2391 = vmatprep.mubr.f32.mxu0 0.0
    %2392 = vmatmul.mubr.f32.gmra.mxu0 %v450
    %v2393 = vpop.f32.mrf.mxu0
    %v2394 = vadd.f32 %v2320, %v2393
    %v2395 = vpop.f32.mrf.mxu0
    %v2396 = vadd.f32 %v2324, %v2395
    %2397 = vmatprep.mubr.f32.mxu0 0.0
    %2398 = vmatmul.mubr.f32.gmra.mxu0 %v453
    %v2399 = vpop.f32.mrf.mxu0
    %v2400 = vadd.f32 %v2320, %v2399
    %v2401 = vpop.f32.mrf.mxu0
    %v2402 = vadd.f32 %v2324, %v2401
    %2403 = vdwg.mxu0
    %s2404 = scalar_lea.vmem %s14, 1
    %v2405 = vld [vmem:[%s2404] sm:$0x1]
    %v2406 = vsel %vm323, %v2303, 0.0
    %2407 = vadd.xlane.f32.xlu0 %v2406
    %v2408 = vpop.xlane.xlu0 %2407
    %v2409 = vsel %vm323, %v2304, 0.0
    %2410 = vadd.xlane.f32.xlu0 %v2409
    %v2411 = vpop.xlane.xlu0 %2410
    %v2412 = vmul.f32 %v2408, %v539
    %v2413 = vmul.f32 %v2411, %v539
    %v2414 = vsub.f32 %v2303, %v2412
    %v2415 = vsub.f32 %v2304, %v2413
    %v2416 = vmul.f32 %v2414, %v2414
    %v2417 = vmul.f32 %v2415, %v2415
    %v2418 = vsel %vm323, %v2416, 0.0
    %2419 = vadd.xlane.f32.xlu0 %v2418
    %v2420 = vpop.xlane.xlu0 %2419
    %v2421 = vsel %vm323, %v2417, 0.0
    %2422 = vadd.xlane.f32.xlu0 %v2421
    %v2423 = vpop.xlane.xlu0 %2422
    %v2424 = vmul.f32 %v2420, %v539
    %v2425 = vmul.f32 %v2423, %v539
    %v2426 = vadd.f32 %v2424, 1e-05
    %v2427 = vadd.f32 %v2425, 1e-05
    %v2428 = vrsqrt.pop %v2426
    %v2429 = vrsqrt.pop %v2427
    %v2430 = vmul.f32 %v2414, %v2428
    %v2431 = vmul.f32 %v2415, %v2429
    %v2433 = vlaneseq
    %v2434 = vshrl.u32 %v2433, 7
    %v2435 = vsub.s32 0, %v2434
    %v2436 = vrot.slane %v2405, %v2435
    %v2438 = vmul.f32 %v2430, %v2436
    %v2439 = vmul.f32 %v2431, %v2436
    %v2440 = vadd.f32 %v2394, 1.0
    %v2441 = vadd.f32 %v2400, 1.0
    %2444 = vrot.lane.b32.xlu0 %v2440, 96
    %v2445 = vpop.permute.xlu0 %2444
    %2446 = vrot.lane.b32.xlu0 %v2441, 96
    %v2447 = vpop.permute.xlu0 %2446
    %v2450 = vmul.f32 %v2438, %v2445
    %v2451 = vmul.f32 %v2439, %v2447
    %v2452 = vadd.f32 %v2450, %v2394
    %v2453 = vadd.f32 %v2451, %v2400
    %s2454 = scalar_lea.vmem %s15, 32
    %v2455 = vld [vmem:[%s2454] sm:$0xff]
    %v2456 = vld [vmem:[%s2454 + $0x8] sm:$0xff]
    %v2457 = vld [vmem:[%s2454 + $0x10] sm:$0xff]
    %v2458 = vld [vmem:[%s2454 + $0x18] sm:$0xff]
    %v2460 = vsel %vm323, %v2452, 0
    %v2463 = vsel %vm323, %v2453, 0
    %2465 = vmatprep.subr.mxu0 0.0
    %2466 = vmatpush1.msra.mxu0 0.0
    %2467 = vmatprep.subr.mxu0 0.0
    %2468 = vmatpush1.msra.mxu0 0.0
    %2469 = vmatprep.subr.mxu0 0.0
    %2470 = vmatpush1.msra.mxu0 0.0
    %2471 = vmatprep.subr.mxu0 0.0
    %2472 = vmatpush1.msra.mxu0 0.0
    %2473 = vmatprep.subr.mxu0 0.0
    %2474 = vmatpush1.msra.mxu0 0.0
    %2475 = vmatprep.subr.mxu0 0.0
    %2476 = vmatpush1.msra.mxu0 0.0
    %2477 = vmatprep.subr.mxu0 0.0
    %2478 = vmatpush1.msra.mxu0 0.0
    %2479 = vmatprep.subr.mxu0 0.0
    %2480 = vmatpush1.msra.mxu0 0.0
    %2481 = vmatprep.subr.mxu0 0.0
    %2482 = vmatpush1.msra.mxu0 0.0
    %2483 = vmatprep.subr.mxu0 0.0
    %2484 = vmatpush1.msra.mxu0 0.0
    %2485 = vmatprep.subr.mxu0 0.0
    %2486 = vmatpush1.msra.mxu0 0.0
    %2487 = vmatprep.subr.mxu0 0.0
    %2488 = vmatpush1.msra.mxu0 0.0
    %2489 = vmatprep.subr.mxu0 0.0
    %2490 = vmatpush1.msra.mxu0 %v2458
    %2491 = vmatprep.subr.mxu0 0.0
    %2492 = vmatpush1.msra.mxu0 %v2457
    %2493 = vmatprep.subr.mxu0 0.0
    %2494 = vmatpush1.msra.mxu0 %v2456
    %2495 = vmatprep.subr.mxu0 0.0
    %2496 = vmatpush1.msra.mxu0 %v2455
    %2497 = vmatprep.subr.mxu0 0.0
    %2498 = vmatpush2.msra.mxu0 0.0
    %2499 = vmatprep.subr.mxu0 0.0
    %2500 = vmatpush2.msra.mxu0 0.0
    %2501 = vmatprep.subr.mxu0 0.0
    %2502 = vmatpush2.msra.mxu0 0.0
    %2503 = vmatprep.subr.mxu0 0.0
    %2504 = vmatpush2.msra.mxu0 0.0
    %2505 = vmatprep.subr.mxu0 0.0
    %2506 = vmatpush2.msra.mxu0 0.0
    %2507 = vmatprep.subr.mxu0 0.0
    %2508 = vmatpush2.msra.mxu0 0.0
    %2509 = vmatprep.subr.mxu0 0.0
    %2510 = vmatpush2.msra.mxu0 0.0
    %2511 = vmatprep.subr.mxu0 0.0
    %2512 = vmatpush2.msra.mxu0 0.0
    %2513 = vmatprep.subr.mxu0 0.0
    %2514 = vmatpush2.msra.mxu0 0.0
    %2515 = vmatprep.subr.mxu0 0.0
    %2516 = vmatpush2.msra.mxu0 0.0
    %2517 = vmatprep.subr.mxu0 0.0
    %2518 = vmatpush2.msra.mxu0 0.0
    %2519 = vmatprep.subr.mxu0 0.0
    %2520 = vmatpush2.msra.mxu0 0.0
    %2521 = vmatprep.subr.mxu0 0.0
    %2522 = vmatpush2.msra.mxu0 0.0
    %2523 = vmatprep.subr.mxu0 0.0
    %2524 = vmatpush2.msra.mxu0 0.0
    %2525 = vmatprep.subr.mxu0 0.0
    %2526 = vmatpush2.msra.mxu0 0.0
    %2527 = vmatprep.subr.mxu0 0.0
    %2528 = vmatpush2.msra.mxu0 0.0
    %2529 = vmatprep.mubr.f32.mxu0 0.0
    %2530 = vmatmul.mubr.f32.gmra.mxu0 %v2460
    %v2531 = vpop.f32.mrf.mxu0
    %v2532 = vadd.f32 0.0, %v2531
    %v2533 = vpop.f32.mrf.mxu0
    %2534 = vmatprep.mubr.f32.mxu0 0.0
    %2535 = vmatmul.mubr.f32.gmra.mxu0 %v2463
    %v2536 = vpop.f32.mrf.mxu0
    %v2537 = vadd.f32 0.0, %v2536
    %v2538 = vpop.f32.mrf.mxu0
    %2539 = vdwg.mxu0
    %v2540 = vmul.f32 %v2532, %v419
    %v2541 = vmul.f32 %v2537, %v420
    %v2543 = vsel %vm323, %v2532, 0
    %v2546 = vsel %vm323, %v2537, 0
    %2548 = vmatprep.subr.mxu0 0.0
    %2549 = vmatpush1.msra.mxu0 0.0
    %2550 = vmatprep.subr.mxu0 0.0
    %2551 = vmatpush1.msra.mxu0 0.0
    %2552 = vmatprep.subr.mxu0 0.0
    %2553 = vmatpush1.msra.mxu0 0.0
    %2554 = vmatprep.subr.mxu0 0.0
    %2555 = vmatpush1.msra.mxu0 0.0
    %2556 = vmatprep.subr.mxu0 0.0
    %2557 = vmatpush1.msra.mxu0 0.0
    %2558 = vmatprep.subr.mxu0 0.0
    %2559 = vmatpush1.msra.mxu0 0.0
    %2560 = vmatprep.subr.mxu0 0.0
    %2561 = vmatpush1.msra.mxu0 0.0
    %2562 = vmatprep.subr.mxu0 0.0
    %2563 = vmatpush1.msra.mxu0 0.0
    %2564 = vmatprep.subr.mxu0 0.0
    %2565 = vmatpush1.msra.mxu0 0.0
    %2566 = vmatprep.subr.mxu0 0.0
    %2567 = vmatpush1.msra.mxu0 0.0
    %2568 = vmatprep.subr.mxu0 0.0
    %2569 = vmatpush1.msra.mxu0 0.0
    %2570 = vmatprep.subr.mxu0 0.0
    %2571 = vmatpush1.msra.mxu0 0.0
    %2572 = vmatprep.subr.mxu0 0.0
    %2573 = vmatpush1.msra.mxu0 %v426
    %2574 = vmatprep.subr.mxu0 0.0
    %2575 = vmatpush1.msra.mxu0 %v425
    %2576 = vmatprep.subr.mxu0 0.0
    %2577 = vmatpush1.msra.mxu0 %v424
    %2578 = vmatprep.subr.mxu0 0.0
    %2579 = vmatpush1.msra.mxu0 %v423
    %2580 = vmatprep.subr.mxu0 0.0
    %2581 = vmatpush2.msra.mxu0 0.0
    %2582 = vmatprep.subr.mxu0 0.0
    %2583 = vmatpush2.msra.mxu0 0.0
    %2584 = vmatprep.subr.mxu0 0.0
    %2585 = vmatpush2.msra.mxu0 0.0
    %2586 = vmatprep.subr.mxu0 0.0
    %2587 = vmatpush2.msra.mxu0 0.0
    %2588 = vmatprep.subr.mxu0 0.0
    %2589 = vmatpush2.msra.mxu0 0.0
    %2590 = vmatprep.subr.mxu0 0.0
    %2591 = vmatpush2.msra.mxu0 0.0
    %2592 = vmatprep.subr.mxu0 0.0
    %2593 = vmatpush2.msra.mxu0 0.0
    %2594 = vmatprep.subr.mxu0 0.0
    %2595 = vmatpush2.msra.mxu0 0.0
    %2596 = vmatprep.subr.mxu0 0.0
    %2597 = vmatpush2.msra.mxu0 0.0
    %2598 = vmatprep.subr.mxu0 0.0
    %2599 = vmatpush2.msra.mxu0 0.0
    %2600 = vmatprep.subr.mxu0 0.0
    %2601 = vmatpush2.msra.mxu0 0.0
    %2602 = vmatprep.subr.mxu0 0.0
    %2603 = vmatpush2.msra.mxu0 0.0
    %2604 = vmatprep.subr.mxu0 0.0
    %2605 = vmatpush2.msra.mxu0 0.0
    %2606 = vmatprep.subr.mxu0 0.0
    %2607 = vmatpush2.msra.mxu0 0.0
    %2608 = vmatprep.subr.mxu0 0.0
    %2609 = vmatpush2.msra.mxu0 0.0
    %2610 = vmatprep.subr.mxu0 0.0
    %2611 = vmatpush2.msra.mxu0 0.0
    %2612 = vmatprep.mubr.f32.mxu0 0.0
    %2613 = vmatmul.mubr.f32.gmra.mxu0 %v2543
    %v2614 = vpop.f32.mrf.mxu0
    %v2615 = vadd.f32 0.0, %v2614
    %v2616 = vpop.f32.mrf.mxu0
    %2617 = vmatprep.mubr.f32.mxu0 0.0
    %2618 = vmatmul.mubr.f32.gmra.mxu0 %v2546
    %v2619 = vpop.f32.mrf.mxu0
    %v2620 = vadd.f32 0.0, %v2619
    %v2621 = vpop.f32.mrf.mxu0
    %2622 = vdwg.mxu0
    %v2623 = vmul.f32 %v2615, %v421
    %v2624 = vmul.f32 %v2620, %v422
    %v2625 = vadd.f32 %v2540, %v2623
    %v2626 = vadd.f32 %v2541, %v2624
    %v2627 = vmul.f32 %v2532, %v757
    %v2628 = vmul.f32 %v2537, %v759
    %2629 = vrot.lane.b32.xlu0 %v2532, 96
    %v2630 = vpop.permute.xlu0 %2629
    %2631 = vrot.lane.b32.xlu0 %v2537, 96
    %v2632 = vpop.permute.xlu0 %2631
    %v2633 = vsel %vm323, %v2630, 0
    %v2635 = vsel %vm323, %v2632, 0
    %2637 = vmatprep.subr.mxu0 0.0
    %2638 = vmatpush1.msra.mxu0 0.0
    %2639 = vmatprep.subr.mxu0 0.0
    %2640 = vmatpush1.msra.mxu0 0.0
    %2641 = vmatprep.subr.mxu0 0.0
    %2642 = vmatpush1.msra.mxu0 0.0
    %2643 = vmatprep.subr.mxu0 0.0
    %2644 = vmatpush1.msra.mxu0 0.0
    %2645 = vmatprep.subr.mxu0 0.0
    %2646 = vmatpush1.msra.mxu0 0.0
    %2647 = vmatprep.subr.mxu0 0.0
    %2648 = vmatpush1.msra.mxu0 0.0
    %2649 = vmatprep.subr.mxu0 0.0
    %2650 = vmatpush1.msra.mxu0 0.0
    %2651 = vmatprep.subr.mxu0 0.0
    %2652 = vmatpush1.msra.mxu0 0.0
    %2653 = vmatprep.subr.mxu0 0.0
    %2654 = vmatpush1.msra.mxu0 0.0
    %2655 = vmatprep.subr.mxu0 0.0
    %2656 = vmatpush1.msra.mxu0 0.0
    %2657 = vmatprep.subr.mxu0 0.0
    %2658 = vmatpush1.msra.mxu0 0.0
    %2659 = vmatprep.subr.mxu0 0.0
    %2660 = vmatpush1.msra.mxu0 0.0
    %2661 = vmatprep.subr.mxu0 0.0
    %2662 = vmatpush1.msra.mxu0 %v426
    %2663 = vmatprep.subr.mxu0 0.0
    %2664 = vmatpush1.msra.mxu0 %v425
    %2665 = vmatprep.subr.mxu0 0.0
    %2666 = vmatpush1.msra.mxu0 %v424
    %2667 = vmatprep.subr.mxu0 0.0
    %2668 = vmatpush1.msra.mxu0 %v423
    %2669 = vmatprep.subr.mxu0 0.0
    %2670 = vmatpush2.msra.mxu0 0.0
    %2671 = vmatprep.subr.mxu0 0.0
    %2672 = vmatpush2.msra.mxu0 0.0
    %2673 = vmatprep.subr.mxu0 0.0
    %2674 = vmatpush2.msra.mxu0 0.0
    %2675 = vmatprep.subr.mxu0 0.0
    %2676 = vmatpush2.msra.mxu0 0.0
    %2677 = vmatprep.subr.mxu0 0.0
    %2678 = vmatpush2.msra.mxu0 0.0
    %2679 = vmatprep.subr.mxu0 0.0
    %2680 = vmatpush2.msra.mxu0 0.0
    %2681 = vmatprep.subr.mxu0 0.0
    %2682 = vmatpush2.msra.mxu0 0.0
    %2683 = vmatprep.subr.mxu0 0.0
    %2684 = vmatpush2.msra.mxu0 0.0
    %2685 = vmatprep.subr.mxu0 0.0
    %2686 = vmatpush2.msra.mxu0 0.0
    %2687 = vmatprep.subr.mxu0 0.0
    %2688 = vmatpush2.msra.mxu0 0.0
    %2689 = vmatprep.subr.mxu0 0.0
    %2690 = vmatpush2.msra.mxu0 0.0
    %2691 = vmatprep.subr.mxu0 0.0
    %2692 = vmatpush2.msra.mxu0 0.0
    %2693 = vmatprep.subr.mxu0 0.0
    %2694 = vmatpush2.msra.mxu0 0.0
    %2695 = vmatprep.subr.mxu0 0.0
    %2696 = vmatpush2.msra.mxu0 0.0
    %2697 = vmatprep.subr.mxu0 0.0
    %2698 = vmatpush2.msra.mxu0 0.0
    %2699 = vmatprep.subr.mxu0 0.0
    %2700 = vmatpush2.msra.mxu0 0.0
    %2701 = vmatprep.mubr.f32.mxu0 0.0
    %2702 = vmatmul.mubr.f32.gmra.mxu0 %v2633
    %v2703 = vpop.f32.mrf.mxu0
    %v2704 = vadd.f32 0.0, %v2703
    %v2705 = vpop.f32.mrf.mxu0
    %2706 = vmatprep.mubr.f32.mxu0 0.0
    %2707 = vmatmul.mubr.f32.gmra.mxu0 %v2635
    %v2708 = vpop.f32.mrf.mxu0
    %v2709 = vadd.f32 0.0, %v2708
    %v2710 = vpop.f32.mrf.mxu0
    %2711 = vdwg.mxu0
    %v2712 = vmul.f32 %v2704, %v421
    %v2713 = vmul.f32 %v2709, %v422
    %2716 = vrot.lane.b32.xlu0 %v2712, 32
    %v2717 = vpop.permute.xlu0 %2716
    %2718 = vrot.lane.b32.xlu0 %v2713, 32
    %v2719 = vpop.permute.xlu0 %2718
    %v2722 = vadd.f32 %v2627, %v2717
    %v2723 = vadd.f32 %v2628, %v2719
    %s2724 = scalar_lea.vmem %s16, 32
    %v2725 = vld [vmem:[%s2724] sm:$0xff]
    %v2726 = vld [vmem:[%s2724 + $0x8] sm:$0xff]
    %v2727 = vld [vmem:[%s2724 + $0x10] sm:$0xff]
    %v2728 = vld [vmem:[%s2724 + $0x18] sm:$0xff]
    %2731 = vrot.lane.b32.xlu0 %v2722, 96
    %v2732 = vpop.permute.xlu0 %2731
    %2733 = vrot.lane.b32.xlu0 %v2723, 96
    %v2734 = vpop.permute.xlu0 %2733
    %v2736 = vsel %vm869, %v2625, 0
    %v2739 = vsel %vm869, %v2626, 0
    %v2741 = vsel %vm869, %v2732, 0
    %v2743 = vsel %vm869, %v2734, 0
    %2745 = vmatprep.subr.mxu0 0.0
    %2746 = vmatpush1.xpose.msra.mxu0 0.0
    %2747 = vmatprep.subr.mxu0 0.0
    %2748 = vmatpush1.xpose.msra.mxu0 0.0
    %2749 = vmatprep.subr.mxu0 0.0
    %2750 = vmatpush1.xpose.msra.mxu0 0.0
    %2751 = vmatprep.subr.mxu0 0.0
    %2752 = vmatpush1.xpose.msra.mxu0 0.0
    %2753 = vmatprep.subr.mxu0 0.0
    %2754 = vmatpush1.xpose.msra.mxu0 0.0
    %2755 = vmatprep.subr.mxu0 0.0
    %2756 = vmatpush1.xpose.msra.mxu0 0.0
    %2757 = vmatprep.subr.mxu0 0.0
    %2758 = vmatpush1.xpose.msra.mxu0 0.0
    %2759 = vmatprep.subr.mxu0 0.0
    %2760 = vmatpush1.xpose.msra.mxu0 0.0
    %2761 = vmatprep.subr.mxu0 0.0
    %2762 = vmatpush1.xpose.msra.mxu0 0.0
    %2763 = vmatprep.subr.mxu0 0.0
    %2764 = vmatpush1.xpose.msra.mxu0 0.0
    %2765 = vmatprep.subr.mxu0 0.0
    %2766 = vmatpush1.xpose.msra.mxu0 0.0
    %2767 = vmatprep.subr.mxu0 0.0
    %2768 = vmatpush1.xpose.msra.mxu0 0.0
    %2769 = vmatprep.subr.mxu0 0.0
    %2770 = vmatpush1.xpose.msra.mxu0 0.0
    %2771 = vmatprep.subr.mxu0 0.0
    %2772 = vmatpush1.xpose.msra.mxu0 0.0
    %2773 = vmatprep.subr.mxu0 0.0
    %2774 = vmatpush1.xpose.msra.mxu0 %v2743
    %2775 = vmatprep.subr.mxu0 0.0
    %2776 = vmatpush1.xpose.msra.mxu0 %v2741
    %2777 = vmatprep.subr.mxu0 0.0
    %2778 = vmatpush2.xpose.msra.mxu0 0.0
    %2779 = vmatprep.subr.mxu0 0.0
    %2780 = vmatpush2.xpose.msra.mxu0 0.0
    %2781 = vmatprep.subr.mxu0 0.0
    %2782 = vmatpush2.xpose.msra.mxu0 0.0
    %2783 = vmatprep.subr.mxu0 0.0
    %2784 = vmatpush2.xpose.msra.mxu0 0.0
    %2785 = vmatprep.subr.mxu0 0.0
    %2786 = vmatpush2.xpose.msra.mxu0 0.0
    %2787 = vmatprep.subr.mxu0 0.0
    %2788 = vmatpush2.xpose.msra.mxu0 0.0
    %2789 = vmatprep.subr.mxu0 0.0
    %2790 = vmatpush2.xpose.msra.mxu0 0.0
    %2791 = vmatprep.subr.mxu0 0.0
    %2792 = vmatpush2.xpose.msra.mxu0 0.0
    %2793 = vmatprep.subr.mxu0 0.0
    %2794 = vmatpush2.xpose.msra.mxu0 0.0
    %2795 = vmatprep.subr.mxu0 0.0
    %2796 = vmatpush2.xpose.msra.mxu0 0.0
    %2797 = vmatprep.subr.mxu0 0.0
    %2798 = vmatpush2.xpose.msra.mxu0 0.0
    %2799 = vmatprep.subr.mxu0 0.0
    %2800 = vmatpush2.xpose.msra.mxu0 0.0
    %2801 = vmatprep.subr.mxu0 0.0
    %2802 = vmatpush2.xpose.msra.mxu0 0.0
    %2803 = vmatprep.subr.mxu0 0.0
    %2804 = vmatpush2.xpose.msra.mxu0 0.0
    %2805 = vmatprep.subr.mxu0 0.0
    %2806 = vmatpush2.xpose.msra.mxu0 0.0
    %2807 = vmatprep.subr.mxu0 0.0
    %2808 = vmatpush2.xpose.msra.mxu0 0.0
    %2809 = vmatprep.mubr.f32.mxu0 0.0
    %2810 = vmatmul.mubr.f32.gmra.mxu0 %v2736
    %v2811 = vpop.f32.mrf.mxu0
    %v2812 = vadd.f32 0.0, %v2811
    %v2813 = vpop.f32.mrf.mxu0
    %2814 = vmatprep.mubr.f32.mxu0 0.0
    %2815 = vmatmul.mubr.f32.gmra.mxu0 %v2739
    %v2816 = vpop.f32.mrf.mxu0
    %v2817 = vadd.f32 0.0, %v2816
    %v2818 = vpop.f32.mrf.mxu0
    %2819 = vdwg.mxu0
    %v2820 = vmul.f32 %v2812, 0.35355338
    %v2821 = vmul.f32 %v2817, 0.35355338
    %v2822 = vadd.f32 %v2820, %v427
    %v2823 = vadd.f32 %v2821, %v428
    %v2824 = vsel %vm98, %v2822, -inf
    %2825 = vmax.xlane.f32.xlu0 %v2824
    %v2826 = vpop.xlane.xlu0 %2825
    %v2827 = vsel %vm98, %v2823, -inf
    %2828 = vmax.xlane.f32.xlu0 %v2827
    %v2829 = vpop.xlane.xlu0 %2828
    %v2830 = vsub.f32 %v2822, %v2826
    %v2831 = vsub.f32 %v2823, %v2829
    %v2832 = vmul.f32 %v2830, 1.442695
    %v2833 = vpow.pop %v2832
    %v2834 = vmul.f32 %v2831, 1.442695
    %v2835 = vpow.pop %v2834
    %v2836 = vsel %vm98, %v2833, 0.0
    %2837 = vadd.xlane.f32.xlu0 %v2836
    %v2838 = vpop.xlane.xlu0 %2837
    %v2839 = vsel %vm98, %v2835, 0.0
    %2840 = vadd.xlane.f32.xlu0 %v2839
    %v2841 = vpop.xlane.xlu0 %2840
    %v2842 = vrcp.pop %v2838
    %v2843 = vrcp.pop %v2841
    %v2844 = vmul.f32 %v2833, %v2842
    %v2845 = vmul.f32 %v2835, %v2843
    %2846 = vrot.lane.b32.xlu0 %v2532, 64
    %v2847 = vpop.permute.xlu0 %2846
    %2848 = vrot.lane.b32.xlu0 %v2537, 64
    %v2849 = vpop.permute.xlu0 %2848
    %v2853 = vsel %vm98, %v2844, 0
    %v2856 = vsel %vm98, %v2845, 0
    %2858 = vmatprep.subr.mxu0 0.0
    %2859 = vmatpush1.msra.mxu0 0.0
    %2860 = vmatprep.subr.mxu0 0.0
    %2861 = vmatpush1.msra.mxu0 0.0
    %2862 = vmatprep.subr.mxu0 0.0
    %2863 = vmatpush1.msra.mxu0 0.0
    %2864 = vmatprep.subr.mxu0 0.0
    %2865 = vmatpush1.msra.mxu0 0.0
    %2866 = vmatprep.subr.mxu0 0.0
    %2867 = vmatpush1.msra.mxu0 0.0
    %2868 = vmatprep.subr.mxu0 0.0
    %2869 = vmatpush1.msra.mxu0 0.0
    %2870 = vmatprep.subr.mxu0 0.0
    %2871 = vmatpush1.msra.mxu0 0.0
    %2872 = vmatprep.subr.mxu0 0.0
    %2873 = vmatpush1.msra.mxu0 0.0
    %2874 = vmatprep.subr.mxu0 0.0
    %2875 = vmatpush1.msra.mxu0 0.0
    %2876 = vmatprep.subr.mxu0 0.0
    %2877 = vmatpush1.msra.mxu0 0.0
    %2878 = vmatprep.subr.mxu0 0.0
    %2879 = vmatpush1.msra.mxu0 0.0
    %2880 = vmatprep.subr.mxu0 0.0
    %2881 = vmatpush1.msra.mxu0 0.0
    %2882 = vmatprep.subr.mxu0 0.0
    %2883 = vmatpush1.msra.mxu0 0.0
    %2884 = vmatprep.subr.mxu0 0.0
    %2885 = vmatpush1.msra.mxu0 0.0
    %2886 = vmatprep.subr.mxu0 0.0
    %2887 = vmatpush1.msra.mxu0 %v2849
    %2888 = vmatprep.subr.mxu0 0.0
    %2889 = vmatpush1.msra.mxu0 %v2847
    %2890 = vmatprep.subr.mxu0 0.0
    %2891 = vmatpush2.msra.mxu0 0.0
    %2892 = vmatprep.subr.mxu0 0.0
    %2893 = vmatpush2.msra.mxu0 0.0
    %2894 = vmatprep.subr.mxu0 0.0
    %2895 = vmatpush2.msra.mxu0 0.0
    %2896 = vmatprep.subr.mxu0 0.0
    %2897 = vmatpush2.msra.mxu0 0.0
    %2898 = vmatprep.subr.mxu0 0.0
    %2899 = vmatpush2.msra.mxu0 0.0
    %2900 = vmatprep.subr.mxu0 0.0
    %2901 = vmatpush2.msra.mxu0 0.0
    %2902 = vmatprep.subr.mxu0 0.0
    %2903 = vmatpush2.msra.mxu0 0.0
    %2904 = vmatprep.subr.mxu0 0.0
    %2905 = vmatpush2.msra.mxu0 0.0
    %2906 = vmatprep.subr.mxu0 0.0
    %2907 = vmatpush2.msra.mxu0 0.0
    %2908 = vmatprep.subr.mxu0 0.0
    %2909 = vmatpush2.msra.mxu0 0.0
    %2910 = vmatprep.subr.mxu0 0.0
    %2911 = vmatpush2.msra.mxu0 0.0
    %2912 = vmatprep.subr.mxu0 0.0
    %2913 = vmatpush2.msra.mxu0 0.0
    %2914 = vmatprep.subr.mxu0 0.0
    %2915 = vmatpush2.msra.mxu0 0.0
    %2916 = vmatprep.subr.mxu0 0.0
    %2917 = vmatpush2.msra.mxu0 0.0
    %2918 = vmatprep.subr.mxu0 0.0
    %2919 = vmatpush2.msra.mxu0 0.0
    %2920 = vmatprep.subr.mxu0 0.0
    %2921 = vmatpush2.msra.mxu0 0.0
    %2922 = vmatprep.mubr.f32.mxu0 0.0
    %2923 = vmatmul.mubr.f32.gmra.mxu0 %v2853
    %v2924 = vpop.f32.mrf.mxu0
    %v2925 = vadd.f32 0.0, %v2924
    %v2926 = vpop.f32.mrf.mxu0
    %2927 = vmatprep.mubr.f32.mxu0 0.0
    %2928 = vmatmul.mubr.f32.gmra.mxu0 %v2856
    %v2929 = vpop.f32.mrf.mxu0
    %v2930 = vadd.f32 0.0, %v2929
    %v2931 = vpop.f32.mrf.mxu0
    %2932 = vdwg.mxu0
    %2933 = vrot.lane.b32.xlu0 %v2625, 120
    %v2934 = vpop.permute.xlu0 %2933
    %2935 = vrot.lane.b32.xlu0 %v2626, 120
    %v2936 = vpop.permute.xlu0 %2935
    %2937 = vrot.lane.b32.xlu0 %v2722, 88
    %v2938 = vpop.permute.xlu0 %2937
    %2939 = vrot.lane.b32.xlu0 %v2723, 88
    %v2940 = vpop.permute.xlu0 %2939
    %v2941 = vsel %vm869, %v2934, 0
    %v2943 = vsel %vm869, %v2936, 0
    %v2945 = vsel %vm869, %v2938, 0
    %v2947 = vsel %vm869, %v2940, 0
    %2949 = vmatprep.subr.mxu0 0.0
    %2950 = vmatpush1.xpose.msra.mxu0 0.0
    %2951 = vmatprep.subr.mxu0 0.0
    %2952 = vmatpush1.xpose.msra.mxu0 0.0
    %2953 = vmatprep.subr.mxu0 0.0
    %2954 = vmatpush1.xpose.msra.mxu0 0.0
    %2955 = vmatprep.subr.mxu0 0.0
    %2956 = vmatpush1.xpose.msra.mxu0 0.0
    %2957 = vmatprep.subr.mxu0 0.0
    %2958 = vmatpush1.xpose.msra.mxu0 0.0
    %2959 = vmatprep.subr.mxu0 0.0
    %2960 = vmatpush1.xpose.msra.mxu0 0.0
    %2961 = vmatprep.subr.mxu0 0.0
    %2962 = vmatpush1.xpose.msra.mxu0 0.0
    %2963 = vmatprep.subr.mxu0 0.0
    %2964 = vmatpush1.xpose.msra.mxu0 0.0
    %2965 = vmatprep.subr.mxu0 0.0
    %2966 = vmatpush1.xpose.msra.mxu0 0.0
    %2967 = vmatprep.subr.mxu0 0.0
    %2968 = vmatpush1.xpose.msra.mxu0 0.0
    %2969 = vmatprep.subr.mxu0 0.0
    %2970 = vmatpush1.xpose.msra.mxu0 0.0
    %2971 = vmatprep.subr.mxu0 0.0
    %2972 = vmatpush1.xpose.msra.mxu0 0.0
    %2973 = vmatprep.subr.mxu0 0.0
    %2974 = vmatpush1.xpose.msra.mxu0 0.0
    %2975 = vmatprep.subr.mxu0 0.0
    %2976 = vmatpush1.xpose.msra.mxu0 0.0
    %2977 = vmatprep.subr.mxu0 0.0
    %2978 = vmatpush1.xpose.msra.mxu0 %v2947
    %2979 = vmatprep.subr.mxu0 0.0
    %2980 = vmatpush1.xpose.msra.mxu0 %v2945
    %2981 = vmatprep.subr.mxu0 0.0
    %2982 = vmatpush2.xpose.msra.mxu0 0.0
    %2983 = vmatprep.subr.mxu0 0.0
    %2984 = vmatpush2.xpose.msra.mxu0 0.0
    %2985 = vmatprep.subr.mxu0 0.0
    %2986 = vmatpush2.xpose.msra.mxu0 0.0
    %2987 = vmatprep.subr.mxu0 0.0
    %2988 = vmatpush2.xpose.msra.mxu0 0.0
    %2989 = vmatprep.subr.mxu0 0.0
    %2990 = vmatpush2.xpose.msra.mxu0 0.0
    %2991 = vmatprep.subr.mxu0 0.0
    %2992 = vmatpush2.xpose.msra.mxu0 0.0
    %2993 = vmatprep.subr.mxu0 0.0
    %2994 = vmatpush2.xpose.msra.mxu0 0.0
    %2995 = vmatprep.subr.mxu0 0.0
    %2996 = vmatpush2.xpose.msra.mxu0 0.0
    %2997 = vmatprep.subr.mxu0 0.0
    %2998 = vmatpush2.xpose.msra.mxu0 0.0
    %2999 = vmatprep.subr.mxu0 0.0
    %3000 = vmatpush2.xpose.msra.mxu0 0.0
    %3001 = vmatprep.subr.mxu0 0.0
    %3002 = vmatpush2.xpose.msra.mxu0 0.0
    %3003 = vmatprep.subr.mxu0 0.0
    %3004 = vmatpush2.xpose.msra.mxu0 0.0
    %3005 = vmatprep.subr.mxu0 0.0
    %3006 = vmatpush2.xpose.msra.mxu0 0.0
    %3007 = vmatprep.subr.mxu0 0.0
    %3008 = vmatpush2.xpose.msra.mxu0 0.0
    %3009 = vmatprep.subr.mxu0 0.0
    %3010 = vmatpush2.xpose.msra.mxu0 0.0
    %3011 = vmatprep.subr.mxu0 0.0
    %3012 = vmatpush2.xpose.msra.mxu0 0.0
    %3013 = vmatprep.mubr.f32.mxu0 0.0
    %3014 = vmatmul.mubr.f32.gmra.mxu0 %v2941
    %v3015 = vpop.f32.mrf.mxu0
    %v3016 = vadd.f32 0.0, %v3015
    %v3017 = vpop.f32.mrf.mxu0
    %3018 = vmatprep.mubr.f32.mxu0 0.0
    %3019 = vmatmul.mubr.f32.gmra.mxu0 %v2943
    %v3020 = vpop.f32.mrf.mxu0
    %v3021 = vadd.f32 0.0, %v3020
    %v3022 = vpop.f32.mrf.mxu0
    %3023 = vdwg.mxu0
    %v3024 = vmul.f32 %v3016, 0.35355338
    %v3025 = vmul.f32 %v3021, 0.35355338
    %v3026 = vadd.f32 %v3024, %v427
    %v3027 = vadd.f32 %v3025, %v428
    %v3028 = vsel %vm98, %v3026, -inf
    %3029 = vmax.xlane.f32.xlu0 %v3028
    %v3030 = vpop.xlane.xlu0 %3029
    %v3031 = vsel %vm98, %v3027, -inf
    %3032 = vmax.xlane.f32.xlu0 %v3031
    %v3033 = vpop.xlane.xlu0 %3032
    %v3034 = vsub.f32 %v3026, %v3030
    %v3035 = vsub.f32 %v3027, %v3033
    %v3036 = vmul.f32 %v3034, 1.442695
    %v3037 = vpow.pop %v3036
    %v3038 = vmul.f32 %v3035, 1.442695
    %v3039 = vpow.pop %v3038
    %v3040 = vsel %vm98, %v3037, 0.0
    %3041 = vadd.xlane.f32.xlu0 %v3040
    %v3042 = vpop.xlane.xlu0 %3041
    %v3043 = vsel %vm98, %v3039, 0.0
    %3044 = vadd.xlane.f32.xlu0 %v3043
    %v3045 = vpop.xlane.xlu0 %3044
    %v3046 = vrcp.pop %v3042
    %v3047 = vrcp.pop %v3045
    %v3048 = vmul.f32 %v3037, %v3046
    %v3049 = vmul.f32 %v3039, %v3047
    %3050 = vrot.lane.b32.xlu0 %v2532, 56
    %v3051 = vpop.permute.xlu0 %3050
    %3052 = vrot.lane.b32.xlu0 %v2537, 56
    %v3053 = vpop.permute.xlu0 %3052
    %v3057 = vsel %vm98, %v3048, 0
    %v3060 = vsel %vm98, %v3049, 0
    %3062 = vmatprep.subr.mxu0 0.0
    %3063 = vmatpush1.msra.mxu0 0.0
    %3064 = vmatprep.subr.mxu0 0.0
    %3065 = vmatpush1.msra.mxu0 0.0
    %3066 = vmatprep.subr.mxu0 0.0
    %3067 = vmatpush1.msra.mxu0 0.0
    %3068 = vmatprep.subr.mxu0 0.0
    %3069 = vmatpush1.msra.mxu0 0.0
    %3070 = vmatprep.subr.mxu0 0.0
    %3071 = vmatpush1.msra.mxu0 0.0
    %3072 = vmatprep.subr.mxu0 0.0
    %3073 = vmatpush1.msra.mxu0 0.0
    %3074 = vmatprep.subr.mxu0 0.0
    %3075 = vmatpush1.msra.mxu0 0.0
    %3076 = vmatprep.subr.mxu0 0.0
    %3077 = vmatpush1.msra.mxu0 0.0
    %3078 = vmatprep.subr.mxu0 0.0
    %3079 = vmatpush1.msra.mxu0 0.0
    %3080 = vmatprep.subr.mxu0 0.0
    %3081 = vmatpush1.msra.mxu0 0.0
    %3082 = vmatprep.subr.mxu0 0.0
    %3083 = vmatpush1.msra.mxu0 0.0
    %3084 = vmatprep.subr.mxu0 0.0
    %3085 = vmatpush1.msra.mxu0 0.0
    %3086 = vmatprep.subr.mxu0 0.0
    %3087 = vmatpush1.msra.mxu0 0.0
    %3088 = vmatprep.subr.mxu0 0.0
    %3089 = vmatpush1.msra.mxu0 0.0
    %3090 = vmatprep.subr.mxu0 0.0
    %3091 = vmatpush1.msra.mxu0 %v3053
    %3092 = vmatprep.subr.mxu0 0.0
    %3093 = vmatpush1.msra.mxu0 %v3051
    %3094 = vmatprep.subr.mxu0 0.0
    %3095 = vmatpush2.msra.mxu0 0.0
    %3096 = vmatprep.subr.mxu0 0.0
    %3097 = vmatpush2.msra.mxu0 0.0
    %3098 = vmatprep.subr.mxu0 0.0
    %3099 = vmatpush2.msra.mxu0 0.0
    %3100 = vmatprep.subr.mxu0 0.0
    %3101 = vmatpush2.msra.mxu0 0.0
    %3102 = vmatprep.subr.mxu0 0.0
    %3103 = vmatpush2.msra.mxu0 0.0
    %3104 = vmatprep.subr.mxu0 0.0
    %3105 = vmatpush2.msra.mxu0 0.0
    %3106 = vmatprep.subr.mxu0 0.0
    %3107 = vmatpush2.msra.mxu0 0.0
    %3108 = vmatprep.subr.mxu0 0.0
    %3109 = vmatpush2.msra.mxu0 0.0
    %3110 = vmatprep.subr.mxu0 0.0
    %3111 = vmatpush2.msra.mxu0 0.0
    %3112 = vmatprep.subr.mxu0 0.0
    %3113 = vmatpush2.msra.mxu0 0.0
    %3114 = vmatprep.subr.mxu0 0.0
    %3115 = vmatpush2.msra.mxu0 0.0
    %3116 = vmatprep.subr.mxu0 0.0
    %3117 = vmatpush2.msra.mxu0 0.0
    %3118 = vmatprep.subr.mxu0 0.0
    %3119 = vmatpush2.msra.mxu0 0.0
    %3120 = vmatprep.subr.mxu0 0.0
    %3121 = vmatpush2.msra.mxu0 0.0
    %3122 = vmatprep.subr.mxu0 0.0
    %3123 = vmatpush2.msra.mxu0 0.0
    %3124 = vmatprep.subr.mxu0 0.0
    %3125 = vmatpush2.msra.mxu0 0.0
    %3126 = vmatprep.mubr.f32.mxu0 0.0
    %3127 = vmatmul.mubr.f32.gmra.mxu0 %v3057
    %v3128 = vpop.f32.mrf.mxu0
    %v3129 = vadd.f32 0.0, %v3128
    %v3130 = vpop.f32.mrf.mxu0
    %3131 = vmatprep.mubr.f32.mxu0 0.0
    %3132 = vmatmul.mubr.f32.gmra.mxu0 %v3060
    %v3133 = vpop.f32.mrf.mxu0
    %v3134 = vadd.f32 0.0, %v3133
    %v3135 = vpop.f32.mrf.mxu0
    %3136 = vdwg.mxu0
    %v3138 = vsel %vm869, %v3129, 0
    %v3141 = vsel %vm869, %v3134, 0
    %3143 = vmatprep.subr.mxu0 0.0
    %3144 = vmatpush1.msra.mxu0 0.0
    %3145 = vmatprep.subr.mxu0 0.0
    %3146 = vmatpush1.msra.mxu0 0.0
    %3147 = vmatprep.subr.mxu0 0.0
    %3148 = vmatpush1.msra.mxu0 0.0
    %3149 = vmatprep.subr.mxu0 0.0
    %3150 = vmatpush1.msra.mxu0 0.0
    %3151 = vmatprep.subr.mxu0 0.0
    %3152 = vmatpush1.msra.mxu0 0.0
    %3153 = vmatprep.subr.mxu0 0.0
    %3154 = vmatpush1.msra.mxu0 0.0
    %3155 = vmatprep.subr.mxu0 0.0
    %3156 = vmatpush1.msra.mxu0 0.0
    %3157 = vmatprep.subr.mxu0 0.0
    %3158 = vmatpush1.msra.mxu0 0.0
    %3159 = vmatprep.subr.mxu0 0.0
    %3160 = vmatpush1.msra.mxu0 0.0
    %3161 = vmatprep.subr.mxu0 0.0
    %3162 = vmatpush1.msra.mxu0 0.0
    %3163 = vmatprep.subr.mxu0 0.0
    %3164 = vmatpush1.msra.mxu0 0.0
    %3165 = vmatprep.subr.mxu0 0.0
    %3166 = vmatpush1.msra.mxu0 0.0
    %3167 = vmatprep.subr.mxu0 0.0
    %3168 = vmatpush1.msra.mxu0 0.0
    %3169 = vmatprep.subr.mxu0 0.0
    %3170 = vmatpush1.msra.mxu0 0.0
    %3171 = vmatprep.subr.mxu0 0.0
    %3172 = vmatpush1.msra.mxu0 0.0
    %3173 = vmatprep.subr.mxu0 0.0
    %3174 = vmatpush1.msra.mxu0 %v2726
    %3175 = vmatprep.subr.mxu0 0.0
    %3176 = vmatpush2.msra.mxu0 0.0
    %3177 = vmatprep.subr.mxu0 0.0
    %3178 = vmatpush2.msra.mxu0 0.0
    %3179 = vmatprep.subr.mxu0 0.0
    %3180 = vmatpush2.msra.mxu0 0.0
    %3181 = vmatprep.subr.mxu0 0.0
    %3182 = vmatpush2.msra.mxu0 0.0
    %3183 = vmatprep.subr.mxu0 0.0
    %3184 = vmatpush2.msra.mxu0 0.0
    %3185 = vmatprep.subr.mxu0 0.0
    %3186 = vmatpush2.msra.mxu0 0.0
    %3187 = vmatprep.subr.mxu0 0.0
    %3188 = vmatpush2.msra.mxu0 0.0
    %3189 = vmatprep.subr.mxu0 0.0
    %3190 = vmatpush2.msra.mxu0 0.0
    %3191 = vmatprep.subr.mxu0 0.0
    %3192 = vmatpush2.msra.mxu0 0.0
    %3193 = vmatprep.subr.mxu0 0.0
    %3194 = vmatpush2.msra.mxu0 0.0
    %3195 = vmatprep.subr.mxu0 0.0
    %3196 = vmatpush2.msra.mxu0 0.0
    %3197 = vmatprep.subr.mxu0 0.0
    %3198 = vmatpush2.msra.mxu0 0.0
    %3199 = vmatprep.subr.mxu0 0.0
    %3200 = vmatpush2.msra.mxu0 0.0
    %3201 = vmatprep.subr.mxu0 0.0
    %3202 = vmatpush2.msra.mxu0 0.0
    %3203 = vmatprep.subr.mxu0 0.0
    %3204 = vmatpush2.msra.mxu0 0.0
    %3205 = vmatprep.subr.mxu0 0.0
    %3206 = vmatpush2.msra.mxu0 0.0
    %3207 = vmatprep.mubr.f32.mxu0 0.0
    %3208 = vmatmul.mubr.f32.gmra.mxu0 %v3138
    %v3209 = vpop.f32.mrf.mxu0
    %v3210 = vadd.f32 0.0, %v3209
    %v3211 = vpop.f32.mrf.mxu0
    %3212 = vmatprep.mubr.f32.mxu0 0.0
    %3213 = vmatmul.mubr.f32.gmra.mxu0 %v3141
    %v3214 = vpop.f32.mrf.mxu0
    %v3215 = vadd.f32 0.0, %v3214
    %v3216 = vpop.f32.mrf.mxu0
    %3217 = vdwg.mxu0
    %v3219 = vsel %vm869, %v2925, 0
    %v3222 = vsel %vm869, %v2930, 0
    %3224 = vmatprep.subr.mxu0 0.0
    %3225 = vmatpush1.msra.mxu0 0.0
    %3226 = vmatprep.subr.mxu0 0.0
    %3227 = vmatpush1.msra.mxu0 0.0
    %3228 = vmatprep.subr.mxu0 0.0
    %3229 = vmatpush1.msra.mxu0 0.0
    %3230 = vmatprep.subr.mxu0 0.0
    %3231 = vmatpush1.msra.mxu0 0.0
    %3232 = vmatprep.subr.mxu0 0.0
    %3233 = vmatpush1.msra.mxu0 0.0
    %3234 = vmatprep.subr.mxu0 0.0
    %3235 = vmatpush1.msra.mxu0 0.0
    %3236 = vmatprep.subr.mxu0 0.0
    %3237 = vmatpush1.msra.mxu0 0.0
    %3238 = vmatprep.subr.mxu0 0.0
    %3239 = vmatpush1.msra.mxu0 0.0
    %3240 = vmatprep.subr.mxu0 0.0
    %3241 = vmatpush1.msra.mxu0 0.0
    %3242 = vmatprep.subr.mxu0 0.0
    %3243 = vmatpush1.msra.mxu0 0.0
    %3244 = vmatprep.subr.mxu0 0.0
    %3245 = vmatpush1.msra.mxu0 0.0
    %3246 = vmatprep.subr.mxu0 0.0
    %3247 = vmatpush1.msra.mxu0 0.0
    %3248 = vmatprep.subr.mxu0 0.0
    %3249 = vmatpush1.msra.mxu0 0.0
    %3250 = vmatprep.subr.mxu0 0.0
    %3251 = vmatpush1.msra.mxu0 0.0
    %3252 = vmatprep.subr.mxu0 0.0
    %3253 = vmatpush1.msra.mxu0 0.0
    %3254 = vmatprep.subr.mxu0 0.0
    %3255 = vmatpush1.msra.mxu0 %v2725
    %3256 = vmatprep.subr.mxu0 0.0
    %3257 = vmatpush2.msra.mxu0 0.0
    %3258 = vmatprep.subr.mxu0 0.0
    %3259 = vmatpush2.msra.mxu0 0.0
    %3260 = vmatprep.subr.mxu0 0.0
    %3261 = vmatpush2.msra.mxu0 0.0
    %3262 = vmatprep.subr.mxu0 0.0
    %3263 = vmatpush2.msra.mxu0 0.0
    %3264 = vmatprep.subr.mxu0 0.0
    %3265 = vmatpush2.msra.mxu0 0.0
    %3266 = vmatprep.subr.mxu0 0.0
    %3267 = vmatpush2.msra.mxu0 0.0
    %3268 = vmatprep.subr.mxu0 0.0
    %3269 = vmatpush2.msra.mxu0 0.0
    %3270 = vmatprep.subr.mxu0 0.0
    %3271 = vmatpush2.msra.mxu0 0.0
    %3272 = vmatprep.subr.mxu0 0.0
    %3273 = vmatpush2.msra.mxu0 0.0
    %3274 = vmatprep.subr.mxu0 0.0
    %3275 = vmatpush2.msra.mxu0 0.0
    %3276 = vmatprep.subr.mxu0 0.0
    %3277 = vmatpush2.msra.mxu0 0.0
    %3278 = vmatprep.subr.mxu0 0.0
    %3279 = vmatpush2.msra.mxu0 0.0
    %3280 = vmatprep.subr.mxu0 0.0
    %3281 = vmatpush2.msra.mxu0 0.0
    %3282 = vmatprep.subr.mxu0 0.0
    %3283 = vmatpush2.msra.mxu0 0.0
    %3284 = vmatprep.subr.mxu0 0.0
    %3285 = vmatpush2.msra.mxu0 0.0
    %3286 = vmatprep.subr.mxu0 0.0
    %3287 = vmatpush2.msra.mxu0 0.0
    %3288 = vmatprep.mubr.f32.mxu0 0.0
    %3289 = vmatmul.mubr.f32.gmra.mxu0 %v3219
    %v3290 = vpop.f32.mrf.mxu0
    %v3291 = vadd.f32 %v3210, %v3290
    %v3292 = vpop.f32.mrf.mxu0
    %3293 = vmatprep.mubr.f32.mxu0 0.0
    %3294 = vmatmul.mubr.f32.gmra.mxu0 %v3222
    %v3295 = vpop.f32.mrf.mxu0
    %v3296 = vadd.f32 %v3215, %v3295
    %v3297 = vpop.f32.mrf.mxu0
    %3298 = vdwg.mxu0
    %3299 = vrot.lane.b32.xlu0 %v2625, 112
    %v3300 = vpop.permute.xlu0 %3299
    %3301 = vrot.lane.b32.xlu0 %v2626, 112
    %v3302 = vpop.permute.xlu0 %3301
    %3303 = vrot.lane.b32.xlu0 %v2722, 80
    %v3304 = vpop.permute.xlu0 %3303
    %3305 = vrot.lane.b32.xlu0 %v2723, 80
    %v3306 = vpop.permute.xlu0 %3305
    %v3307 = vsel %vm869, %v3300, 0
    %v3309 = vsel %vm869, %v3302, 0
    %v3311 = vsel %vm869, %v3304, 0
    %v3313 = vsel %vm869, %v3306, 0
    %3315 = vmatprep.subr.mxu0 0.0
    %3316 = vmatpush1.xpose.msra.mxu0 0.0
    %3317 = vmatprep.subr.mxu0 0.0
    %3318 = vmatpush1.xpose.msra.mxu0 0.0
    %3319 = vmatprep.subr.mxu0 0.0
    %3320 = vmatpush1.xpose.msra.mxu0 0.0
    %3321 = vmatprep.subr.mxu0 0.0
    %3322 = vmatpush1.xpose.msra.mxu0 0.0
    %3323 = vmatprep.subr.mxu0 0.0
    %3324 = vmatpush1.xpose.msra.mxu0 0.0
    %3325 = vmatprep.subr.mxu0 0.0
    %3326 = vmatpush1.xpose.msra.mxu0 0.0
    %3327 = vmatprep.subr.mxu0 0.0
    %3328 = vmatpush1.xpose.msra.mxu0 0.0
    %3329 = vmatprep.subr.mxu0 0.0
    %3330 = vmatpush1.xpose.msra.mxu0 0.0
    %3331 = vmatprep.subr.mxu0 0.0
    %3332 = vmatpush1.xpose.msra.mxu0 0.0
    %3333 = vmatprep.subr.mxu0 0.0
    %3334 = vmatpush1.xpose.msra.mxu0 0.0
    %3335 = vmatprep.subr.mxu0 0.0
    %3336 = vmatpush1.xpose.msra.mxu0 0.0
    %3337 = vmatprep.subr.mxu0 0.0
    %3338 = vmatpush1.xpose.msra.mxu0 0.0
    %3339 = vmatprep.subr.mxu0 0.0
    %3340 = vmatpush1.xpose.msra.mxu0 0.0
    %3341 = vmatprep.subr.mxu0 0.0
    %3342 = vmatpush1.xpose.msra.mxu0 0.0
    %3343 = vmatprep.subr.mxu0 0.0
    %3344 = vmatpush1.xpose.msra.mxu0 %v3313
    %3345 = vmatprep.subr.mxu0 0.0
    %3346 = vmatpush1.xpose.msra.mxu0 %v3311
    %3347 = vmatprep.subr.mxu0 0.0
    %3348 = vmatpush2.xpose.msra.mxu0 0.0
    %3349 = vmatprep.subr.mxu0 0.0
    %3350 = vmatpush2.xpose.msra.mxu0 0.0
    %3351 = vmatprep.subr.mxu0 0.0
    %3352 = vmatpush2.xpose.msra.mxu0 0.0
    %3353 = vmatprep.subr.mxu0 0.0
    %3354 = vmatpush2.xpose.msra.mxu0 0.0
    %3355 = vmatprep.subr.mxu0 0.0
    %3356 = vmatpush2.xpose.msra.mxu0 0.0
    %3357 = vmatprep.subr.mxu0 0.0
    %3358 = vmatpush2.xpose.msra.mxu0 0.0
    %3359 = vmatprep.subr.mxu0 0.0
    %3360 = vmatpush2.xpose.msra.mxu0 0.0
    %3361 = vmatprep.subr.mxu0 0.0
    %3362 = vmatpush2.xpose.msra.mxu0 0.0
    %3363 = vmatprep.subr.mxu0 0.0
    %3364 = vmatpush2.xpose.msra.mxu0 0.0
    %3365 = vmatprep.subr.mxu0 0.0
    %3366 = vmatpush2.xpose.msra.mxu0 0.0
    %3367 = vmatprep.subr.mxu0 0.0
    %3368 = vmatpush2.xpose.msra.mxu0 0.0
    %3369 = vmatprep.subr.mxu0 0.0
    %3370 = vmatpush2.xpose.msra.mxu0 0.0
    %3371 = vmatprep.subr.mxu0 0.0
    %3372 = vmatpush2.xpose.msra.mxu0 0.0
    %3373 = vmatprep.subr.mxu0 0.0
    %3374 = vmatpush2.xpose.msra.mxu0 0.0
    %3375 = vmatprep.subr.mxu0 0.0
    %3376 = vmatpush2.xpose.msra.mxu0 0.0
    %3377 = vmatprep.subr.mxu0 0.0
    %3378 = vmatpush2.xpose.msra.mxu0 0.0
    %3379 = vmatprep.mubr.f32.mxu0 0.0
    %3380 = vmatmul.mubr.f32.gmra.mxu0 %v3307
    %v3381 = vpop.f32.mrf.mxu0
    %v3382 = vadd.f32 0.0, %v3381
    %v3383 = vpop.f32.mrf.mxu0
    %3384 = vmatprep.mubr.f32.mxu0 0.0
    %3385 = vmatmul.mubr.f32.gmra.mxu0 %v3309
    %v3386 = vpop.f32.mrf.mxu0
    %v3387 = vadd.f32 0.0, %v3386
    %v3388 = vpop.f32.mrf.mxu0
    %3389 = vdwg.mxu0
    %v3390 = vmul.f32 %v3382, 0.35355338
    %v3391 = vmul.f32 %v3387, 0.35355338
    %v3392 = vadd.f32 %v3390, %v427
    %v3393 = vadd.f32 %v3391, %v428
    %v3394 = vsel %vm98, %v3392, -inf
    %3395 = vmax.xlane.f32.xlu0 %v3394
    %v3396 = vpop.xlane.xlu0 %3395
    %v3397 = vsel %vm98, %v3393, -inf
    %3398 = vmax.xlane.f32.xlu0 %v3397
    %v3399 = vpop.xlane.xlu0 %3398
    %v3400 = vsub.f32 %v3392, %v3396
    %v3401 = vsub.f32 %v3393, %v3399
    %v3402 = vmul.f32 %v3400, 1.442695
    %v3403 = vpow.pop %v3402
    %v3404 = vmul.f32 %v3401, 1.442695
    %v3405 = vpow.pop %v3404
    %v3406 = vsel %vm98, %v3403, 0.0
    %3407 = vadd.xlane.f32.xlu0 %v3406
    %v3408 = vpop.xlane.xlu0 %3407
    %v3409 = vsel %vm98, %v3405, 0.0
    %3410 = vadd.xlane.f32.xlu0 %v3409
    %v3411 = vpop.xlane.xlu0 %3410
    %v3412 = vrcp.pop %v3408
    %v3413 = vrcp.pop %v3411
    %v3414 = vmul.f32 %v3403, %v3412
    %v3415 = vmul.f32 %v3405, %v3413
    %3416 = vrot.lane.b32.xlu0 %v2532, 48
    %v3417 = vpop.permute.xlu0 %3416
    %3418 = vrot.lane.b32.xlu0 %v2537, 48
    %v3419 = vpop.permute.xlu0 %3418
    %v3423 = vsel %vm98, %v3414, 0
    %v3426 = vsel %vm98, %v3415, 0
    %3428 = vmatprep.subr.mxu0 0.0
    %3429 = vmatpush1.msra.mxu0 0.0
    %3430 = vmatprep.subr.mxu0 0.0
    %3431 = vmatpush1.msra.mxu0 0.0
    %3432 = vmatprep.subr.mxu0 0.0
    %3433 = vmatpush1.msra.mxu0 0.0
    %3434 = vmatprep.subr.mxu0 0.0
    %3435 = vmatpush1.msra.mxu0 0.0
    %3436 = vmatprep.subr.mxu0 0.0
    %3437 = vmatpush1.msra.mxu0 0.0
    %3438 = vmatprep.subr.mxu0 0.0
    %3439 = vmatpush1.msra.mxu0 0.0
    %3440 = vmatprep.subr.mxu0 0.0
    %3441 = vmatpush1.msra.mxu0 0.0
    %3442 = vmatprep.subr.mxu0 0.0
    %3443 = vmatpush1.msra.mxu0 0.0
    %3444 = vmatprep.subr.mxu0 0.0
    %3445 = vmatpush1.msra.mxu0 0.0
    %3446 = vmatprep.subr.mxu0 0.0
    %3447 = vmatpush1.msra.mxu0 0.0
    %3448 = vmatprep.subr.mxu0 0.0
    %3449 = vmatpush1.msra.mxu0 0.0
    %3450 = vmatprep.subr.mxu0 0.0
    %3451 = vmatpush1.msra.mxu0 0.0
    %3452 = vmatprep.subr.mxu0 0.0
    %3453 = vmatpush1.msra.mxu0 0.0
    %3454 = vmatprep.subr.mxu0 0.0
    %3455 = vmatpush1.msra.mxu0 0.0
    %3456 = vmatprep.subr.mxu0 0.0
    %3457 = vmatpush1.msra.mxu0 %v3419
    %3458 = vmatprep.subr.mxu0 0.0
    %3459 = vmatpush1.msra.mxu0 %v3417
    %3460 = vmatprep.subr.mxu0 0.0
    %3461 = vmatpush2.msra.mxu0 0.0
    %3462 = vmatprep.subr.mxu0 0.0
    %3463 = vmatpush2.msra.mxu0 0.0
    %3464 = vmatprep.subr.mxu0 0.0
    %3465 = vmatpush2.msra.mxu0 0.0
    %3466 = vmatprep.subr.mxu0 0.0
    %3467 = vmatpush2.msra.mxu0 0.0
    %3468 = vmatprep.subr.mxu0 0.0
    %3469 = vmatpush2.msra.mxu0 0.0
    %3470 = vmatprep.subr.mxu0 0.0
    %3471 = vmatpush2.msra.mxu0 0.0
    %3472 = vmatprep.subr.mxu0 0.0
    %3473 = vmatpush2.msra.mxu0 0.0
    %3474 = vmatprep.subr.mxu0 0.0
    %3475 = vmatpush2.msra.mxu0 0.0
    %3476 = vmatprep.subr.mxu0 0.0
    %3477 = vmatpush2.msra.mxu0 0.0
    %3478 = vmatprep.subr.mxu0 0.0
    %3479 = vmatpush2.msra.mxu0 0.0
    %3480 = vmatprep.subr.mxu0 0.0
    %3481 = vmatpush2.msra.mxu0 0.0
    %3482 = vmatprep.subr.mxu0 0.0
    %3483 = vmatpush2.msra.mxu0 0.0
    %3484 = vmatprep.subr.mxu0 0.0
    %3485 = vmatpush2.msra.mxu0 0.0
    %3486 = vmatprep.subr.mxu0 0.0
    %3487 = vmatpush2.msra.mxu0 0.0
    %3488 = vmatprep.subr.mxu0 0.0
    %3489 = vmatpush2.msra.mxu0 0.0
    %3490 = vmatprep.subr.mxu0 0.0
    %3491 = vmatpush2.msra.mxu0 0.0
    %3492 = vmatprep.mubr.f32.mxu0 0.0
    %3493 = vmatmul.mubr.f32.gmra.mxu0 %v3423
    %v3494 = vpop.f32.mrf.mxu0
    %v3495 = vadd.f32 0.0, %v3494
    %v3496 = vpop.f32.mrf.mxu0
    %3497 = vmatprep.mubr.f32.mxu0 0.0
    %3498 = vmatmul.mubr.f32.gmra.mxu0 %v3426
    %v3499 = vpop.f32.mrf.mxu0
    %v3500 = vadd.f32 0.0, %v3499
    %v3501 = vpop.f32.mrf.mxu0
    %3502 = vdwg.mxu0
    %v3504 = vsel %vm869, %v3495, 0
    %v3507 = vsel %vm869, %v3500, 0
    %3509 = vmatprep.subr.mxu0 0.0
    %3510 = vmatpush1.msra.mxu0 0.0
    %3511 = vmatprep.subr.mxu0 0.0
    %3512 = vmatpush1.msra.mxu0 0.0
    %3513 = vmatprep.subr.mxu0 0.0
    %3514 = vmatpush1.msra.mxu0 0.0
    %3515 = vmatprep.subr.mxu0 0.0
    %3516 = vmatpush1.msra.mxu0 0.0
    %3517 = vmatprep.subr.mxu0 0.0
    %3518 = vmatpush1.msra.mxu0 0.0
    %3519 = vmatprep.subr.mxu0 0.0
    %3520 = vmatpush1.msra.mxu0 0.0
    %3521 = vmatprep.subr.mxu0 0.0
    %3522 = vmatpush1.msra.mxu0 0.0
    %3523 = vmatprep.subr.mxu0 0.0
    %3524 = vmatpush1.msra.mxu0 0.0
    %3525 = vmatprep.subr.mxu0 0.0
    %3526 = vmatpush1.msra.mxu0 0.0
    %3527 = vmatprep.subr.mxu0 0.0
    %3528 = vmatpush1.msra.mxu0 0.0
    %3529 = vmatprep.subr.mxu0 0.0
    %3530 = vmatpush1.msra.mxu0 0.0
    %3531 = vmatprep.subr.mxu0 0.0
    %3532 = vmatpush1.msra.mxu0 0.0
    %3533 = vmatprep.subr.mxu0 0.0
    %3534 = vmatpush1.msra.mxu0 0.0
    %3535 = vmatprep.subr.mxu0 0.0
    %3536 = vmatpush1.msra.mxu0 0.0
    %3537 = vmatprep.subr.mxu0 0.0
    %3538 = vmatpush1.msra.mxu0 0.0
    %3539 = vmatprep.subr.mxu0 0.0
    %3540 = vmatpush1.msra.mxu0 %v2727
    %3541 = vmatprep.subr.mxu0 0.0
    %3542 = vmatpush2.msra.mxu0 0.0
    %3543 = vmatprep.subr.mxu0 0.0
    %3544 = vmatpush2.msra.mxu0 0.0
    %3545 = vmatprep.subr.mxu0 0.0
    %3546 = vmatpush2.msra.mxu0 0.0
    %3547 = vmatprep.subr.mxu0 0.0
    %3548 = vmatpush2.msra.mxu0 0.0
    %3549 = vmatprep.subr.mxu0 0.0
    %3550 = vmatpush2.msra.mxu0 0.0
    %3551 = vmatprep.subr.mxu0 0.0
    %3552 = vmatpush2.msra.mxu0 0.0
    %3553 = vmatprep.subr.mxu0 0.0
    %3554 = vmatpush2.msra.mxu0 0.0
    %3555 = vmatprep.subr.mxu0 0.0
    %3556 = vmatpush2.msra.mxu0 0.0
    %3557 = vmatprep.subr.mxu0 0.0
    %3558 = vmatpush2.msra.mxu0 0.0
    %3559 = vmatprep.subr.mxu0 0.0
    %3560 = vmatpush2.msra.mxu0 0.0
    %3561 = vmatprep.subr.mxu0 0.0
    %3562 = vmatpush2.msra.mxu0 0.0
    %3563 = vmatprep.subr.mxu0 0.0
    %3564 = vmatpush2.msra.mxu0 0.0
    %3565 = vmatprep.subr.mxu0 0.0
    %3566 = vmatpush2.msra.mxu0 0.0
    %3567 = vmatprep.subr.mxu0 0.0
    %3568 = vmatpush2.msra.mxu0 0.0
    %3569 = vmatprep.subr.mxu0 0.0
    %3570 = vmatpush2.msra.mxu0 0.0
    %3571 = vmatprep.subr.mxu0 0.0
    %3572 = vmatpush2.msra.mxu0 0.0
    %3573 = vmatprep.mubr.f32.mxu0 0.0
    %3574 = vmatmul.mubr.f32.gmra.mxu0 %v3504
    %v3575 = vpop.f32.mrf.mxu0
    %v3576 = vadd.f32 0.0, %v3575
    %v3577 = vpop.f32.mrf.mxu0
    %3578 = vmatprep.mubr.f32.mxu0 0.0
    %3579 = vmatmul.mubr.f32.gmra.mxu0 %v3507
    %v3580 = vpop.f32.mrf.mxu0
    %v3581 = vadd.f32 0.0, %v3580
    %v3582 = vpop.f32.mrf.mxu0
    %3583 = vdwg.mxu0
    %v3584 = vadd.f32 %v3291, %v3576
    %v3585 = vadd.f32 %v3296, %v3581
    %3586 = vrot.lane.b32.xlu0 %v2625, 104
    %v3587 = vpop.permute.xlu0 %3586
    %3588 = vrot.lane.b32.xlu0 %v2626, 104
    %v3589 = vpop.permute.xlu0 %3588
    %3590 = vrot.lane.b32.xlu0 %v2722, 72
    %v3591 = vpop.permute.xlu0 %3590
    %3592 = vrot.lane.b32.xlu0 %v2723, 72
    %v3593 = vpop.permute.xlu0 %3592
    %v3594 = vsel %vm869, %v3587, 0
    %v3596 = vsel %vm869, %v3589, 0
    %v3598 = vsel %vm869, %v3591, 0
    %v3600 = vsel %vm869, %v3593, 0
    %3602 = vmatprep.subr.mxu0 0.0
    %3603 = vmatpush1.xpose.msra.mxu0 0.0
    %3604 = vmatprep.subr.mxu0 0.0
    %3605 = vmatpush1.xpose.msra.mxu0 0.0
    %3606 = vmatprep.subr.mxu0 0.0
    %3607 = vmatpush1.xpose.msra.mxu0 0.0
    %3608 = vmatprep.subr.mxu0 0.0
    %3609 = vmatpush1.xpose.msra.mxu0 0.0
    %3610 = vmatprep.subr.mxu0 0.0
    %3611 = vmatpush1.xpose.msra.mxu0 0.0
    %3612 = vmatprep.subr.mxu0 0.0
    %3613 = vmatpush1.xpose.msra.mxu0 0.0
    %3614 = vmatprep.subr.mxu0 0.0
    %3615 = vmatpush1.xpose.msra.mxu0 0.0
    %3616 = vmatprep.subr.mxu0 0.0
    %3617 = vmatpush1.xpose.msra.mxu0 0.0
    %3618 = vmatprep.subr.mxu0 0.0
    %3619 = vmatpush1.xpose.msra.mxu0 0.0
    %3620 = vmatprep.subr.mxu0 0.0
    %3621 = vmatpush1.xpose.msra.mxu0 0.0
    %3622 = vmatprep.subr.mxu0 0.0
    %3623 = vmatpush1.xpose.msra.mxu0 0.0
    %3624 = vmatprep.subr.mxu0 0.0
    %3625 = vmatpush1.xpose.msra.mxu0 0.0
    %3626 = vmatprep.subr.mxu0 0.0
    %3627 = vmatpush1.xpose.msra.mxu0 0.0
    %3628 = vmatprep.subr.mxu0 0.0
    %3629 = vmatpush1.xpose.msra.mxu0 0.0
    %3630 = vmatprep.subr.mxu0 0.0
    %3631 = vmatpush1.xpose.msra.mxu0 %v3600
    %3632 = vmatprep.subr.mxu0 0.0
    %3633 = vmatpush1.xpose.msra.mxu0 %v3598
    %3634 = vmatprep.subr.mxu0 0.0
    %3635 = vmatpush2.xpose.msra.mxu0 0.0
    %3636 = vmatprep.subr.mxu0 0.0
    %3637 = vmatpush2.xpose.msra.mxu0 0.0
    %3638 = vmatprep.subr.mxu0 0.0
    %3639 = vmatpush2.xpose.msra.mxu0 0.0
    %3640 = vmatprep.subr.mxu0 0.0
    %3641 = vmatpush2.xpose.msra.mxu0 0.0
    %3642 = vmatprep.subr.mxu0 0.0
    %3643 = vmatpush2.xpose.msra.mxu0 0.0
    %3644 = vmatprep.subr.mxu0 0.0
    %3645 = vmatpush2.xpose.msra.mxu0 0.0
    %3646 = vmatprep.subr.mxu0 0.0
    %3647 = vmatpush2.xpose.msra.mxu0 0.0
    %3648 = vmatprep.subr.mxu0 0.0
    %3649 = vmatpush2.xpose.msra.mxu0 0.0
    %3650 = vmatprep.subr.mxu0 0.0
    %3651 = vmatpush2.xpose.msra.mxu0 0.0
    %3652 = vmatprep.subr.mxu0 0.0
    %3653 = vmatpush2.xpose.msra.mxu0 0.0
    %3654 = vmatprep.subr.mxu0 0.0
    %3655 = vmatpush2.xpose.msra.mxu0 0.0
    %3656 = vmatprep.subr.mxu0 0.0
    %3657 = vmatpush2.xpose.msra.mxu0 0.0
    %3658 = vmatprep.subr.mxu0 0.0
    %3659 = vmatpush2.xpose.msra.mxu0 0.0
    %3660 = vmatprep.subr.mxu0 0.0
    %3661 = vmatpush2.xpose.msra.mxu0 0.0
    %3662 = vmatprep.subr.mxu0 0.0
    %3663 = vmatpush2.xpose.msra.mxu0 0.0
    %3664 = vmatprep.subr.mxu0 0.0
    %3665 = vmatpush2.xpose.msra.mxu0 0.0
    %3666 = vmatprep.mubr.f32.mxu0 0.0
    %3667 = vmatmul.mubr.f32.gmra.mxu0 %v3594
    %v3668 = vpop.f32.mrf.mxu0
    %v3669 = vadd.f32 0.0, %v3668
    %v3670 = vpop.f32.mrf.mxu0
    %3671 = vmatprep.mubr.f32.mxu0 0.0
    %3672 = vmatmul.mubr.f32.gmra.mxu0 %v3596
    %v3673 = vpop.f32.mrf.mxu0
    %v3674 = vadd.f32 0.0, %v3673
    %v3675 = vpop.f32.mrf.mxu0
    %3676 = vdwg.mxu0
    %v3677 = vmul.f32 %v3669, 0.35355338
    %v3678 = vmul.f32 %v3674, 0.35355338
    %v3679 = vadd.f32 %v3677, %v427
    %v3680 = vadd.f32 %v3678, %v428
    %v3681 = vsel %vm98, %v3679, -inf
    %3682 = vmax.xlane.f32.xlu0 %v3681
    %v3683 = vpop.xlane.xlu0 %3682
    %v3684 = vsel %vm98, %v3680, -inf
    %3685 = vmax.xlane.f32.xlu0 %v3684
    %v3686 = vpop.xlane.xlu0 %3685
    %v3687 = vsub.f32 %v3679, %v3683
    %v3688 = vsub.f32 %v3680, %v3686
    %v3689 = vmul.f32 %v3687, 1.442695
    %v3690 = vpow.pop %v3689
    %v3691 = vmul.f32 %v3688, 1.442695
    %v3692 = vpow.pop %v3691
    %v3693 = vsel %vm98, %v3690, 0.0
    %3694 = vadd.xlane.f32.xlu0 %v3693
    %v3695 = vpop.xlane.xlu0 %3694
    %v3696 = vsel %vm98, %v3692, 0.0
    %3697 = vadd.xlane.f32.xlu0 %v3696
    %v3698 = vpop.xlane.xlu0 %3697
    %v3699 = vrcp.pop %v3695
    %v3700 = vrcp.pop %v3698
    %v3701 = vmul.f32 %v3690, %v3699
    %v3702 = vmul.f32 %v3692, %v3700
    %3703 = vrot.lane.b32.xlu0 %v2532, 40
    %v3704 = vpop.permute.xlu0 %3703
    %3705 = vrot.lane.b32.xlu0 %v2537, 40
    %v3706 = vpop.permute.xlu0 %3705
    %v3710 = vsel %vm98, %v3701, 0
    %v3713 = vsel %vm98, %v3702, 0
    %3715 = vmatprep.subr.mxu0 0.0
    %3716 = vmatpush1.msra.mxu0 0.0
    %3717 = vmatprep.subr.mxu0 0.0
    %3718 = vmatpush1.msra.mxu0 0.0
    %3719 = vmatprep.subr.mxu0 0.0
    %3720 = vmatpush1.msra.mxu0 0.0
    %3721 = vmatprep.subr.mxu0 0.0
    %3722 = vmatpush1.msra.mxu0 0.0
    %3723 = vmatprep.subr.mxu0 0.0
    %3724 = vmatpush1.msra.mxu0 0.0
    %3725 = vmatprep.subr.mxu0 0.0
    %3726 = vmatpush1.msra.mxu0 0.0
    %3727 = vmatprep.subr.mxu0 0.0
    %3728 = vmatpush1.msra.mxu0 0.0
    %3729 = vmatprep.subr.mxu0 0.0
    %3730 = vmatpush1.msra.mxu0 0.0
    %3731 = vmatprep.subr.mxu0 0.0
    %3732 = vmatpush1.msra.mxu0 0.0
    %3733 = vmatprep.subr.mxu0 0.0
    %3734 = vmatpush1.msra.mxu0 0.0
    %3735 = vmatprep.subr.mxu0 0.0
    %3736 = vmatpush1.msra.mxu0 0.0
    %3737 = vmatprep.subr.mxu0 0.0
    %3738 = vmatpush1.msra.mxu0 0.0
    %3739 = vmatprep.subr.mxu0 0.0
    %3740 = vmatpush1.msra.mxu0 0.0
    %3741 = vmatprep.subr.mxu0 0.0
    %3742 = vmatpush1.msra.mxu0 0.0
    %3743 = vmatprep.subr.mxu0 0.0
    %3744 = vmatpush1.msra.mxu0 %v3706
    %3745 = vmatprep.subr.mxu0 0.0
    %3746 = vmatpush1.msra.mxu0 %v3704
    %3747 = vmatprep.subr.mxu0 0.0
    %3748 = vmatpush2.msra.mxu0 0.0
    %3749 = vmatprep.subr.mxu0 0.0
    %3750 = vmatpush2.msra.mxu0 0.0
    %3751 = vmatprep.subr.mxu0 0.0
    %3752 = vmatpush2.msra.mxu0 0.0
    %3753 = vmatprep.subr.mxu0 0.0
    %3754 = vmatpush2.msra.mxu0 0.0
    %3755 = vmatprep.subr.mxu0 0.0
    %3756 = vmatpush2.msra.mxu0 0.0
    %3757 = vmatprep.subr.mxu0 0.0
    %3758 = vmatpush2.msra.mxu0 0.0
    %3759 = vmatprep.subr.mxu0 0.0
    %3760 = vmatpush2.msra.mxu0 0.0
    %3761 = vmatprep.subr.mxu0 0.0
    %3762 = vmatpush2.msra.mxu0 0.0
    %3763 = vmatprep.subr.mxu0 0.0
    %3764 = vmatpush2.msra.mxu0 0.0
    %3765 = vmatprep.subr.mxu0 0.0
    %3766 = vmatpush2.msra.mxu0 0.0
    %3767 = vmatprep.subr.mxu0 0.0
    %3768 = vmatpush2.msra.mxu0 0.0
    %3769 = vmatprep.subr.mxu0 0.0
    %3770 = vmatpush2.msra.mxu0 0.0
    %3771 = vmatprep.subr.mxu0 0.0
    %3772 = vmatpush2.msra.mxu0 0.0
    %3773 = vmatprep.subr.mxu0 0.0
    %3774 = vmatpush2.msra.mxu0 0.0
    %3775 = vmatprep.subr.mxu0 0.0
    %3776 = vmatpush2.msra.mxu0 0.0
    %3777 = vmatprep.subr.mxu0 0.0
    %3778 = vmatpush2.msra.mxu0 0.0
    %3779 = vmatprep.mubr.f32.mxu0 0.0
    %3780 = vmatmul.mubr.f32.gmra.mxu0 %v3710
    %v3781 = vpop.f32.mrf.mxu0
    %v3782 = vadd.f32 0.0, %v3781
    %v3783 = vpop.f32.mrf.mxu0
    %3784 = vmatprep.mubr.f32.mxu0 0.0
    %3785 = vmatmul.mubr.f32.gmra.mxu0 %v3713
    %v3786 = vpop.f32.mrf.mxu0
    %v3787 = vadd.f32 0.0, %v3786
    %v3788 = vpop.f32.mrf.mxu0
    %3789 = vdwg.mxu0
    %v3791 = vsel %vm869, %v3782, 0
    %v3794 = vsel %vm869, %v3787, 0
    %3796 = vmatprep.subr.mxu0 0.0
    %3797 = vmatpush1.msra.mxu0 0.0
    %3798 = vmatprep.subr.mxu0 0.0
    %3799 = vmatpush1.msra.mxu0 0.0
    %3800 = vmatprep.subr.mxu0 0.0
    %3801 = vmatpush1.msra.mxu0 0.0
    %3802 = vmatprep.subr.mxu0 0.0
    %3803 = vmatpush1.msra.mxu0 0.0
    %3804 = vmatprep.subr.mxu0 0.0
    %3805 = vmatpush1.msra.mxu0 0.0
    %3806 = vmatprep.subr.mxu0 0.0
    %3807 = vmatpush1.msra.mxu0 0.0
    %3808 = vmatprep.subr.mxu0 0.0
    %3809 = vmatpush1.msra.mxu0 0.0
    %3810 = vmatprep.subr.mxu0 0.0
    %3811 = vmatpush1.msra.mxu0 0.0
    %3812 = vmatprep.subr.mxu0 0.0
    %3813 = vmatpush1.msra.mxu0 0.0
    %3814 = vmatprep.subr.mxu0 0.0
    %3815 = vmatpush1.msra.mxu0 0.0
    %3816 = vmatprep.subr.mxu0 0.0
    %3817 = vmatpush1.msra.mxu0 0.0
    %3818 = vmatprep.subr.mxu0 0.0
    %3819 = vmatpush1.msra.mxu0 0.0
    %3820 = vmatprep.subr.mxu0 0.0
    %3821 = vmatpush1.msra.mxu0 0.0
    %3822 = vmatprep.subr.mxu0 0.0
    %3823 = vmatpush1.msra.mxu0 0.0
    %3824 = vmatprep.subr.mxu0 0.0
    %3825 = vmatpush1.msra.mxu0 0.0
    %3826 = vmatprep.subr.mxu0 0.0
    %3827 = vmatpush1.msra.mxu0 %v2728
    %3828 = vmatprep.subr.mxu0 0.0
    %3829 = vmatpush2.msra.mxu0 0.0
    %3830 = vmatprep.subr.mxu0 0.0
    %3831 = vmatpush2.msra.mxu0 0.0
    %3832 = vmatprep.subr.mxu0 0.0
    %3833 = vmatpush2.msra.mxu0 0.0
    %3834 = vmatprep.subr.mxu0 0.0
    %3835 = vmatpush2.msra.mxu0 0.0
    %3836 = vmatprep.subr.mxu0 0.0
    %3837 = vmatpush2.msra.mxu0 0.0
    %3838 = vmatprep.subr.mxu0 0.0
    %3839 = vmatpush2.msra.mxu0 0.0
    %3840 = vmatprep.subr.mxu0 0.0
    %3841 = vmatpush2.msra.mxu0 0.0
    %3842 = vmatprep.subr.mxu0 0.0
    %3843 = vmatpush2.msra.mxu0 0.0
    %3844 = vmatprep.subr.mxu0 0.0
    %3845 = vmatpush2.msra.mxu0 0.0
    %3846 = vmatprep.subr.mxu0 0.0
    %3847 = vmatpush2.msra.mxu0 0.0
    %3848 = vmatprep.subr.mxu0 0.0
    %3849 = vmatpush2.msra.mxu0 0.0
    %3850 = vmatprep.subr.mxu0 0.0
    %3851 = vmatpush2.msra.mxu0 0.0
    %3852 = vmatprep.subr.mxu0 0.0
    %3853 = vmatpush2.msra.mxu0 0.0
    %3854 = vmatprep.subr.mxu0 0.0
    %3855 = vmatpush2.msra.mxu0 0.0
    %3856 = vmatprep.subr.mxu0 0.0
    %3857 = vmatpush2.msra.mxu0 0.0
    %3858 = vmatprep.subr.mxu0 0.0
    %3859 = vmatpush2.msra.mxu0 0.0
    %3860 = vmatprep.mubr.f32.mxu0 0.0
    %3861 = vmatmul.mubr.f32.gmra.mxu0 %v3791
    %v3862 = vpop.f32.mrf.mxu0
    %v3863 = vadd.f32 0.0, %v3862
    %v3864 = vpop.f32.mrf.mxu0
    %3865 = vmatprep.mubr.f32.mxu0 0.0
    %3866 = vmatmul.mubr.f32.gmra.mxu0 %v3794
    %v3867 = vpop.f32.mrf.mxu0
    %v3868 = vadd.f32 0.0, %v3867
    %v3869 = vpop.f32.mrf.mxu0
    %3870 = vdwg.mxu0
    %v3871 = vadd.f32 %v3584, %v3863
    %v3872 = vadd.f32 %v3585, %v3868
    %3875 = vrot.lane.b32.xlu0 %v3871, 64
    %v3876 = vpop.permute.xlu0 %3875
    %3877 = vrot.lane.b32.xlu0 %v3872, 64
    %v3878 = vpop.permute.xlu0 %3877
    %v3881 = vmul.f32 %v2394, %v3876
    %v3882 = vmul.f32 %v2400, %v3878
    %3885 = vrot.lane.b32.xlu0 %v3881, 64
    %v3886 = vpop.permute.xlu0 %3885
    %3887 = vrot.lane.b32.xlu0 %v3882, 64
    %v3888 = vpop.permute.xlu0 %3887
    %v3891 = vadd.f32 %v2303, %v3886
    %v3892 = vadd.f32 %v2304, %v3888
    %s3893 = scalar_lea.vmem %s17, 1
    %v3894 = vld [vmem:[%s3893] sm:$0x1]
    %v3895 = vsel %vm323, %v3891, 0.0
    %3896 = vadd.xlane.f32.xlu0 %v3895
    %v3897 = vpop.xlane.xlu0 %3896
    %v3898 = vsel %vm323, %v3892, 0.0
    %3899 = vadd.xlane.f32.xlu0 %v3898
    %v3900 = vpop.xlane.xlu0 %3899
    %v3901 = vmul.f32 %v3897, %v539
    %v3902 = vmul.f32 %v3900, %v539
    %v3903 = vsub.f32 %v3891, %v3901
    %v3904 = vsub.f32 %v3892, %v3902
    %v3905 = vmul.f32 %v3903, %v3903
    %v3906 = vmul.f32 %v3904, %v3904
    %v3907 = vsel %vm323, %v3905, 0.0
    %3908 = vadd.xlane.f32.xlu0 %v3907
    %v3909 = vpop.xlane.xlu0 %3908
    %v3910 = vsel %vm323, %v3906, 0.0
    %3911 = vadd.xlane.f32.xlu0 %v3910
    %v3912 = vpop.xlane.xlu0 %3911
    %v3913 = vmul.f32 %v3909, %v539
    %v3914 = vmul.f32 %v3912, %v539
    %v3915 = vadd.f32 %v3913, 1e-05
    %v3916 = vadd.f32 %v3914, 1e-05
    %v3917 = vrsqrt.pop %v3915
    %v3918 = vrsqrt.pop %v3916
    %v3919 = vmul.f32 %v3903, %v3917
    %v3920 = vmul.f32 %v3904, %v3918
    %v3922 = vlaneseq
    %v3923 = vshrl.u32 %v3922, 7
    %v3924 = vsub.s32 0, %v3923
    %v3925 = vrot.slane %v3894, %v3924
    %v3927 = vmul.f32 %v3919, %v3925
    %v3928 = vmul.f32 %v3920, %v3925
    %v3929 = vadd.f32 %v2396, 1.0
    %v3930 = vadd.f32 %v2402, 1.0
    %v3931 = vmul.f32 %v3927, %v3929
    %v3932 = vmul.f32 %v3928, %v3930
    %3935 = vrot.lane.b32.xlu0 %v2394, 32
    %v3936 = vpop.permute.xlu0 %3935
    %3937 = vrot.lane.b32.xlu0 %v2400, 32
    %v3938 = vpop.permute.xlu0 %3937
    %v3941 = vadd.f32 %v3931, %v3936
    %v3942 = vadd.f32 %v3932, %v3938
    %s3943 = scalar_lea.vmem %s18, 32
    %v3944 = vld [vmem:[%s3943] sm:$0xff]
    %v3945 = vld [vmem:[%s3943 + $0x8] sm:$0xff]
    %v3946 = vld [vmem:[%s3943 + $0x10] sm:$0xff]
    %v3947 = vld [vmem:[%s3943 + $0x18] sm:$0xff]
    %s3948 = scalar_lea.vmem %s19, 1
    %v3949 = vld [vmem:[%s3948] sm:$0x1]
    %v3951 = vlaneseq
    %v3952 = vshrl.u32 %v3951, 7
    %v3953 = vsub.s32 0, %v3952
    %v3954 = vrot.slane %v3949, %v3953
    %v3957 = vsel %vm323, %v3941, 0
    %v3960 = vsel %vm323, %v3942, 0
    %3962 = vmatprep.subr.mxu0 0.0
    %3963 = vmatpush1.msra.mxu0 0.0
    %3964 = vmatprep.subr.mxu0 0.0
    %3965 = vmatpush1.msra.mxu0 0.0
    %3966 = vmatprep.subr.mxu0 0.0
    %3967 = vmatpush1.msra.mxu0 0.0
    %3968 = vmatprep.subr.mxu0 0.0
    %3969 = vmatpush1.msra.mxu0 0.0
    %3970 = vmatprep.subr.mxu0 0.0
    %3971 = vmatpush1.msra.mxu0 0.0
    %3972 = vmatprep.subr.mxu0 0.0
    %3973 = vmatpush1.msra.mxu0 0.0
    %3974 = vmatprep.subr.mxu0 0.0
    %3975 = vmatpush1.msra.mxu0 0.0
    %3976 = vmatprep.subr.mxu0 0.0
    %3977 = vmatpush1.msra.mxu0 0.0
    %3978 = vmatprep.subr.mxu0 0.0
    %3979 = vmatpush1.msra.mxu0 0.0
    %3980 = vmatprep.subr.mxu0 0.0
    %3981 = vmatpush1.msra.mxu0 0.0
    %3982 = vmatprep.subr.mxu0 0.0
    %3983 = vmatpush1.msra.mxu0 0.0
    %3984 = vmatprep.subr.mxu0 0.0
    %3985 = vmatpush1.msra.mxu0 0.0
    %3986 = vmatprep.subr.mxu0 0.0
    %3987 = vmatpush1.msra.mxu0 %v3947
    %3988 = vmatprep.subr.mxu0 0.0
    %3989 = vmatpush1.msra.mxu0 %v3946
    %3990 = vmatprep.subr.mxu0 0.0
    %3991 = vmatpush1.msra.mxu0 %v3945
    %3992 = vmatprep.subr.mxu0 0.0
    %3993 = vmatpush1.msra.mxu0 %v3944
    %3994 = vmatprep.subr.mxu0 0.0
    %3995 = vmatpush2.msra.mxu0 0.0
    %3996 = vmatprep.subr.mxu0 0.0
    %3997 = vmatpush2.msra.mxu0 0.0
    %3998 = vmatprep.subr.mxu0 0.0
    %3999 = vmatpush2.msra.mxu0 0.0
    %4000 = vmatprep.subr.mxu0 0.0
    %4001 = vmatpush2.msra.mxu0 0.0
    %4002 = vmatprep.subr.mxu0 0.0
    %4003 = vmatpush2.msra.mxu0 0.0
    %4004 = vmatprep.subr.mxu0 0.0
    %4005 = vmatpush2.msra.mxu0 0.0
    %4006 = vmatprep.subr.mxu0 0.0
    %4007 = vmatpush2.msra.mxu0 0.0
    %4008 = vmatprep.subr.mxu0 0.0
    %4009 = vmatpush2.msra.mxu0 0.0
    %4010 = vmatprep.subr.mxu0 0.0
    %4011 = vmatpush2.msra.mxu0 0.0
    %4012 = vmatprep.subr.mxu0 0.0
    %4013 = vmatpush2.msra.mxu0 0.0
    %4014 = vmatprep.subr.mxu0 0.0
    %4015 = vmatpush2.msra.mxu0 0.0
    %4016 = vmatprep.subr.mxu0 0.0
    %4017 = vmatpush2.msra.mxu0 0.0
    %4018 = vmatprep.subr.mxu0 0.0
    %4019 = vmatpush2.msra.mxu0 0.0
    %4020 = vmatprep.subr.mxu0 0.0
    %4021 = vmatpush2.msra.mxu0 0.0
    %4022 = vmatprep.subr.mxu0 0.0
    %4023 = vmatpush2.msra.mxu0 0.0
    %4024 = vmatprep.subr.mxu0 0.0
    %4025 = vmatpush2.msra.mxu0 0.0
    %4026 = vmatprep.mubr.f32.mxu0 0.0
    %4027 = vmatmul.mubr.f32.gmra.mxu0 %v3957
    %v4028 = vpop.f32.mrf.mxu0
    %v4029 = vadd.f32 %v3954, %v4028
    %v4030 = vpop.f32.mrf.mxu0
    %4031 = vmatprep.mubr.f32.mxu0 0.0
    %4032 = vmatmul.mubr.f32.gmra.mxu0 %v3960
    %v4033 = vpop.f32.mrf.mxu0
    %v4034 = vadd.f32 %v3954, %v4033
    %v4035 = vpop.f32.mrf.mxu0
    %4036 = vdwg.mxu0
    %v4037 = vmul.f32 %v4029, 0.5
    %v4038 = vmul.f32 %v4034, 0.5
    %v4039 = vmul.f32 %v4029, 0.044715
    %v4040 = vmul.f32 %v4034, 0.044715
    %v4041 = vmul.f32 %v4039, %v4029
    %v4042 = vmul.f32 %v4040, %v4034
    %v4043 = vmul.f32 %v4041, %v4029
    %v4044 = vmul.f32 %v4042, %v4034
    %v4045 = vadd.f32 %v4029, %v4043
    %v4046 = vadd.f32 %v4034, %v4044
    %v4047 = vmul.f32 %v4045, 0.7978846
    %v4048 = vmul.f32 %v4046, 0.7978846
    %v4049 = vtanh.pop %v4047
    %v4050 = vtanh.pop %v4048
    %v4051 = vadd.f32 %v4049, 1.0
    %v4052 = vadd.f32 %v4050, 1.0
    %v4053 = vmul.f32 %v4037, %v4051
    %v4054 = vmul.f32 %v4038, %v4052
    %s4055 = scalar_lea.vmem %s20, 128
    %v4056 = vld [vmem:[%s4055] sm:$0xff]
    %v4057 = vld [vmem:[%s4055 + $0x8] sm:$0xff]
    %v4058 = vld [vmem:[%s4055 + $0x10] sm:$0xff]
    %v4059 = vld [vmem:[%s4055 + $0x18] sm:$0xff]
    %v4060 = vld [vmem:[%s4055 + $0x20] sm:$0xff]
    %v4061 = vld [vmem:[%s4055 + $0x28] sm:$0xff]
    %v4062 = vld [vmem:[%s4055 + $0x30] sm:$0xff]
    %v4063 = vld [vmem:[%s4055 + $0x38] sm:$0xff]
    %v4064 = vld [vmem:[%s4055 + $0x40] sm:$0xff]
    %v4065 = vld [vmem:[%s4055 + $0x48] sm:$0xff]
    %v4066 = vld [vmem:[%s4055 + $0x50] sm:$0xff]
    %v4067 = vld [vmem:[%s4055 + $0x58] sm:$0xff]
    %v4068 = vld [vmem:[%s4055 + $0x60] sm:$0xff]
    %v4069 = vld [vmem:[%s4055 + $0x68] sm:$0xff]
    %v4070 = vld [vmem:[%s4055 + $0x70] sm:$0xff]
    %v4071 = vld [vmem:[%s4055 + $0x78] sm:$0xff]
    %s4072 = scalar_lea.vmem %s21, 1
    %v4073 = vld [vmem:[%s4072] sm:$0x1]
    %v4075 = vlaneseq
    %v4076 = vshrl.u32 %v4075, 7
    %v4077 = vsub.s32 0, %v4076
    %v4078 = vrot.slane %v4073, %v4077
    %4080 = vmatprep.subr.mxu0 0.0
    %4081 = vmatpush1.msra.mxu0 %v4071
    %4082 = vmatprep.subr.mxu0 0.0
    %4083 = vmatpush1.msra.mxu0 %v4070
    %4084 = vmatprep.subr.mxu0 0.0
    %4085 = vmatpush1.msra.mxu0 %v4069
    %4086 = vmatprep.subr.mxu0 0.0
    %4087 = vmatpush1.msra.mxu0 %v4068
    %4088 = vmatprep.subr.mxu0 0.0
    %4089 = vmatpush1.msra.mxu0 %v4067
    %4090 = vmatprep.subr.mxu0 0.0
    %4091 = vmatpush1.msra.mxu0 %v4066
    %4092 = vmatprep.subr.mxu0 0.0
    %4093 = vmatpush1.msra.mxu0 %v4065
    %4094 = vmatprep.subr.mxu0 0.0
    %4095 = vmatpush1.msra.mxu0 %v4064
    %4096 = vmatprep.subr.mxu0 0.0
    %4097 = vmatpush1.msra.mxu0 %v4063
    %4098 = vmatprep.subr.mxu0 0.0
    %4099 = vmatpush1.msra.mxu0 %v4062
    %4100 = vmatprep.subr.mxu0 0.0
    %4101 = vmatpush1.msra.mxu0 %v4061
    %4102 = vmatprep.subr.mxu0 0.0
    %4103 = vmatpush1.msra.mxu0 %v4060
    %4104 = vmatprep.subr.mxu0 0.0
    %4105 = vmatpush1.msra.mxu0 %v4059
    %4106 = vmatprep.subr.mxu0 0.0
    %4107 = vmatpush1.msra.mxu0 %v4058
    %4108 = vmatprep.subr.mxu0 0.0
    %4109 = vmatpush1.msra.mxu0 %v4057
    %4110 = vmatprep.subr.mxu0 0.0
    %4111 = vmatpush1.msra.mxu0 %v4056
    %4112 = vmatprep.subr.mxu0 0.0
    %4113 = vmatpush2.msra.mxu0 0.0
    %4114 = vmatprep.subr.mxu0 0.0
    %4115 = vmatpush2.msra.mxu0 0.0
    %4116 = vmatprep.subr.mxu0 0.0
    %4117 = vmatpush2.msra.mxu0 0.0
    %4118 = vmatprep.subr.mxu0 0.0
    %4119 = vmatpush2.msra.mxu0 0.0
    %4120 = vmatprep.subr.mxu0 0.0
    %4121 = vmatpush2.msra.mxu0 0.0
    %4122 = vmatprep.subr.mxu0 0.0
    %4123 = vmatpush2.msra.mxu0 0.0
    %4124 = vmatprep.subr.mxu0 0.0
    %4125 = vmatpush2.msra.mxu0 0.0
    %4126 = vmatprep.subr.mxu0 0.0
    %4127 = vmatpush2.msra.mxu0 0.0
    %4128 = vmatprep.subr.mxu0 0.0
    %4129 = vmatpush2.msra.mxu0 0.0
    %4130 = vmatprep.subr.mxu0 0.0
    %4131 = vmatpush2.msra.mxu0 0.0
    %4132 = vmatprep.subr.mxu0 0.0
    %4133 = vmatpush2.msra.mxu0 0.0
    %4134 = vmatprep.subr.mxu0 0.0
    %4135 = vmatpush2.msra.mxu0 0.0
    %4136 = vmatprep.subr.mxu0 0.0
    %4137 = vmatpush2.msra.mxu0 0.0
    %4138 = vmatprep.subr.mxu0 0.0
    %4139 = vmatpush2.msra.mxu0 0.0
    %4140 = vmatprep.subr.mxu0 0.0
    %4141 = vmatpush2.msra.mxu0 0.0
    %4142 = vmatprep.subr.mxu0 0.0
    %4143 = vmatpush2.msra.mxu0 0.0
    %4144 = vmatprep.mubr.f32.mxu0 0.0
    %4145 = vmatmul.mubr.f32.gmra.mxu0 %v4053
    %v4146 = vpop.f32.mrf.mxu0
    %v4147 = vadd.f32 %v4078, %v4146
    %v4148 = vpop.f32.mrf.mxu0
    %4149 = vmatprep.mubr.f32.mxu0 0.0
    %4150 = vmatmul.mubr.f32.gmra.mxu0 %v4054
    %v4151 = vpop.f32.mrf.mxu0
    %v4152 = vadd.f32 %v4078, %v4151
    %v4153 = vpop.f32.mrf.mxu0
    %4154 = vdwg.mxu0
    %4157 = vrot.lane.b32.xlu0 %v4147, 32
    %v4158 = vpop.permute.xlu0 %4157
    %4159 = vrot.lane.b32.xlu0 %v4152, 32
    %v4160 = vpop.permute.xlu0 %4159
    %v4163 = vmul.f32 %v2396, %v4158
    %v4164 = vmul.f32 %v2402, %v4160
    %4167 = vrot.lane.b32.xlu0 %v4163, 96
    %v4168 = vpop.permute.xlu0 %4167
    %4169 = vrot.lane.b32.xlu0 %v4164, 96
    %v4170 = vpop.permute.xlu0 %4169
    %v4173 = vadd.f32 %v3891, %v4168
    %v4174 = vadd.f32 %v3892, %v4170
    %v4175 = vld [vmem:[%s22] sm:$0xff]
    %v4176 = vld [vmem:[%s22 + $0x8] sm:$0xff]
    %v4177 = vld [vmem:[%s22 + $0x10] sm:$0xff]
    %v4178 = vld [vmem:[%s22 + $0x18] sm:$0xff]
    %v4179 = vld [vmem:[%s23] sm:$0x1]
    %v4181 = vlaneseq
    %v4182 = vshrl.u32 %v4181, 7
    %v4183 = vsub.s32 0, %v4182
    %v4184 = vrot.slane %v4179, %v4183
    %4186 = vmatprep.subr.mxu0 0.0
    %4187 = vmatpush1.msra.mxu0 0.0
    %4188 = vmatprep.subr.mxu0 0.0
    %4189 = vmatpush1.msra.mxu0 0.0
    %4190 = vmatprep.subr.mxu0 0.0
    %4191 = vmatpush1.msra.mxu0 0.0
    %4192 = vmatprep.subr.mxu0 0.0
    %4193 = vmatpush1.msra.mxu0 0.0
    %4194 = vmatprep.subr.mxu0 0.0
    %4195 = vmatpush1.msra.mxu0 0.0
    %4196 = vmatprep.subr.mxu0 0.0
    %4197 = vmatpush1.msra.mxu0 0.0
    %4198 = vmatprep.subr.mxu0 0.0
    %4199 = vmatpush1.msra.mxu0 0.0
    %4200 = vmatprep.subr.mxu0 0.0
    %4201 = vmatpush1.msra.mxu0 0.0
    %4202 = vmatprep.subr.mxu0 0.0
    %4203 = vmatpush1.msra.mxu0 0.0
    %4204 = vmatprep.subr.mxu0 0.0
    %4205 = vmatpush1.msra.mxu0 0.0
    %4206 = vmatprep.subr.mxu0 0.0
    %4207 = vmatpush1.msra.mxu0 0.0
    %4208 = vmatprep.subr.mxu0 0.0
    %4209 = vmatpush1.msra.mxu0 0.0
    %4210 = vmatprep.subr.mxu0 0.0
    %4211 = vmatpush1.msra.mxu0 %v4178
    %4212 = vmatprep.subr.mxu0 0.0
    %4213 = vmatpush1.msra.mxu0 %v4177
    %4214 = vmatprep.subr.mxu0 0.0
    %4215 = vmatpush1.msra.mxu0 %v4176
    %4216 = vmatprep.subr.mxu0 0.0
    %4217 = vmatpush1.msra.mxu0 %v4175
    %4218 = vmatprep.subr.mxu0 0.0
    %4219 = vmatpush2.msra.mxu0 0.0
    %4220 = vmatprep.subr.mxu0 0.0
    %4221 = vmatpush2.msra.mxu0 0.0
    %4222 = vmatprep.subr.mxu0 0.0
    %4223 = vmatpush2.msra.mxu0 0.0
    %4224 = vmatprep.subr.mxu0 0.0
    %4225 = vmatpush2.msra.mxu0 0.0
    %4226 = vmatprep.subr.mxu0 0.0
    %4227 = vmatpush2.msra.mxu0 0.0
    %4228 = vmatprep.subr.mxu0 0.0
    %4229 = vmatpush2.msra.mxu0 0.0
    %4230 = vmatprep.subr.mxu0 0.0
    %4231 = vmatpush2.msra.mxu0 0.0
    %4232 = vmatprep.subr.mxu0 0.0
    %4233 = vmatpush2.msra.mxu0 0.0
    %4234 = vmatprep.subr.mxu0 0.0
    %4235 = vmatpush2.msra.mxu0 0.0
    %4236 = vmatprep.subr.mxu0 0.0
    %4237 = vmatpush2.msra.mxu0 0.0
    %4238 = vmatprep.subr.mxu0 0.0
    %4239 = vmatpush2.msra.mxu0 0.0
    %4240 = vmatprep.subr.mxu0 0.0
    %4241 = vmatpush2.msra.mxu0 0.0
    %4242 = vmatprep.subr.mxu0 0.0
    %4243 = vmatpush2.msra.mxu0 0.0
    %4244 = vmatprep.subr.mxu0 0.0
    %4245 = vmatpush2.msra.mxu0 0.0
    %4246 = vmatprep.subr.mxu0 0.0
    %4247 = vmatpush2.msra.mxu0 0.0
    %4248 = vmatprep.subr.mxu0 0.0
    %4249 = vmatpush2.msra.mxu0 0.0
    %4250 = vmatprep.mubr.f32.mxu0 0.0
    %4251 = vmatmul.mubr.f32.gmra.mxu0 %v450
    %v4252 = vpop.f32.mrf.mxu0
    %v4253 = vadd.f32 %v4184, %v4252
    %v4254 = vpop.f32.mrf.mxu0
    %4255 = vmatprep.mubr.f32.mxu0 0.0
    %4256 = vmatmul.mubr.f32.gmra.mxu0 %v453
    %v4257 = vpop.f32.mrf.mxu0
    %v4258 = vadd.f32 %v4184, %v4257
    %v4259 = vpop.f32.mrf.mxu0
    %4260 = vdwg.mxu0
    %v4261 = vld [vmem:[%s24] sm:$0x1]
    %v4262 = vsel %vm323, %v4173, 0.0
    %4263 = vadd.xlane.f32.xlu0 %v4262
    %v4264 = vpop.xlane.xlu0 %4263
    %v4265 = vsel %vm323, %v4174, 0.0
    %4266 = vadd.xlane.f32.xlu0 %v4265
    %v4267 = vpop.xlane.xlu0 %4266
    %v4268 = vmul.f32 %v4264, %v539
    %v4269 = vmul.f32 %v4267, %v539
    %v4270 = vsub.f32 %v4173, %v4268
    %v4271 = vsub.f32 %v4174, %v4269
    %v4272 = vmul.f32 %v4270, %v4270
    %v4273 = vmul.f32 %v4271, %v4271
    %v4274 = vsel %vm323, %v4272, 0.0
    %4275 = vadd.xlane.f32.xlu0 %v4274
    %v4276 = vpop.xlane.xlu0 %4275
    %v4277 = vsel %vm323, %v4273, 0.0
    %4278 = vadd.xlane.f32.xlu0 %v4277
    %v4279 = vpop.xlane.xlu0 %4278
    %v4280 = vmul.f32 %v4276, %v539
    %v4281 = vmul.f32 %v4279, %v539
    %v4282 = vadd.f32 %v4280, 1e-05
    %v4283 = vadd.f32 %v4281, 1e-05
    %v4284 = vrsqrt.pop %v4282
    %v4285 = vrsqrt.pop %v4283
    %v4286 = vmul.f32 %v4270, %v4284
    %v4287 = vmul.f32 %v4271, %v4285
    %v4289 = vlaneseq
    %v4290 = vshrl.u32 %v4289, 7
    %v4291 = vsub.s32 0, %v4290
    %v4292 = vrot.slane %v4261, %v4291
    %v4294 = vmul.f32 %v4286, %v4292
    %v4295 = vmul.f32 %v4287, %v4292
    %v4296 = vadd.f32 %v4253, 1.0
    %v4297 = vadd.f32 %v4258, 1.0
    %4300 = vrot.lane.b32.xlu0 %v4296, 96
    %v4301 = vpop.permute.xlu0 %4300
    %4302 = vrot.lane.b32.xlu0 %v4297, 96
    %v4303 = vpop.permute.xlu0 %4302
    %v4306 = vmul.f32 %v4294, %v4301
    %v4307 = vmul.f32 %v4295, %v4303
    %v4308 = vadd.f32 %v4306, %v4253
    %v4309 = vadd.f32 %v4307, %v4258
    %v4310 = vld [vmem:[%s25] sm:$0xff]
    %v4311 = vld [vmem:[%s25 + $0x8] sm:$0xff]
    %v4312 = vld [vmem:[%s25 + $0x10] sm:$0xff]
    %v4313 = vld [vmem:[%s25 + $0x18] sm:$0xff]
    %v4314 = vld [vmem:[%s26] sm:$0x1]
    %v4316 = vlaneseq
    %v4317 = vshrl.u32 %v4316, 7
    %v4318 = vsub.s32 0, %v4317
    %v4319 = vrot.slane %v4314, %v4318
    %v4322 = vsel %vm323, %v4308, 0
    %v4325 = vsel %vm323, %v4309, 0
    %4327 = vmatprep.subr.mxu0 0.0
    %4328 = vmatpush1.msra.mxu0 0.0
    %4329 = vmatprep.subr.mxu0 0.0
    %4330 = vmatpush1.msra.mxu0 0.0
    %4331 = vmatprep.subr.mxu0 0.0
    %4332 = vmatpush1.msra.mxu0 0.0
    %4333 = vmatprep.subr.mxu0 0.0
    %4334 = vmatpush1.msra.mxu0 0.0
    %4335 = vmatprep.subr.mxu0 0.0
    %4336 = vmatpush1.msra.mxu0 0.0
    %4337 = vmatprep.subr.mxu0 0.0
    %4338 = vmatpush1.msra.mxu0 0.0
    %4339 = vmatprep.subr.mxu0 0.0
    %4340 = vmatpush1.msra.mxu0 0.0
    %4341 = vmatprep.subr.mxu0 0.0
    %4342 = vmatpush1.msra.mxu0 0.0
    %4343 = vmatprep.subr.mxu0 0.0
    %4344 = vmatpush1.msra.mxu0 0.0
    %4345 = vmatprep.subr.mxu0 0.0
    %4346 = vmatpush1.msra.mxu0 0.0
    %4347 = vmatprep.subr.mxu0 0.0
    %4348 = vmatpush1.msra.mxu0 0.0
    %4349 = vmatprep.subr.mxu0 0.0
    %4350 = vmatpush1.msra.mxu0 0.0
    %4351 = vmatprep.subr.mxu0 0.0
    %4352 = vmatpush1.msra.mxu0 %v4313
    %4353 = vmatprep.subr.mxu0 0.0
    %4354 = vmatpush1.msra.mxu0 %v4312
    %4355 = vmatprep.subr.mxu0 0.0
    %4356 = vmatpush1.msra.mxu0 %v4311
    %4357 = vmatprep.subr.mxu0 0.0
    %4358 = vmatpush1.msra.mxu0 %v4310
    %4359 = vmatprep.subr.mxu0 0.0
    %4360 = vmatpush2.msra.mxu0 0.0
    %4361 = vmatprep.subr.mxu0 0.0
    %4362 = vmatpush2.msra.mxu0 0.0
    %4363 = vmatprep.subr.mxu0 0.0
    %4364 = vmatpush2.msra.mxu0 0.0
    %4365 = vmatprep.subr.mxu0 0.0
    %4366 = vmatpush2.msra.mxu0 0.0
    %4367 = vmatprep.subr.mxu0 0.0
    %4368 = vmatpush2.msra.mxu0 0.0
    %4369 = vmatprep.subr.mxu0 0.0
    %4370 = vmatpush2.msra.mxu0 0.0
    %4371 = vmatprep.subr.mxu0 0.0
    %4372 = vmatpush2.msra.mxu0 0.0
    %4373 = vmatprep.subr.mxu0 0.0
    %4374 = vmatpush2.msra.mxu0 0.0
    %4375 = vmatprep.subr.mxu0 0.0
    %4376 = vmatpush2.msra.mxu0 0.0
    %4377 = vmatprep.subr.mxu0 0.0
    %4378 = vmatpush2.msra.mxu0 0.0
    %4379 = vmatprep.subr.mxu0 0.0
    %4380 = vmatpush2.msra.mxu0 0.0
    %4381 = vmatprep.subr.mxu0 0.0
    %4382 = vmatpush2.msra.mxu0 0.0
    %4383 = vmatprep.subr.mxu0 0.0
    %4384 = vmatpush2.msra.mxu0 0.0
    %4385 = vmatprep.subr.mxu0 0.0
    %4386 = vmatpush2.msra.mxu0 0.0
    %4387 = vmatprep.subr.mxu0 0.0
    %4388 = vmatpush2.msra.mxu0 0.0
    %4389 = vmatprep.subr.mxu0 0.0
    %4390 = vmatpush2.msra.mxu0 0.0
    %4391 = vmatprep.mubr.f32.mxu0 0.0
    %4392 = vmatmul.mubr.f32.gmra.mxu0 %v4322
    %v4393 = vpop.f32.mrf.mxu0
    %v4394 = vadd.f32 %v4319, %v4393
    %v4395 = vpop.f32.mrf.mxu0
    %4396 = vmatprep.mubr.f32.mxu0 0.0
    %4397 = vmatmul.mubr.f32.gmra.mxu0 %v4325
    %v4398 = vpop.f32.mrf.mxu0
    %v4399 = vadd.f32 %v4319, %v4398
    %v4400 = vpop.f32.mrf.mxu0
    %4401 = vdwg.mxu0
    %4402 = vst.msk [vmem:[#allocation2] sm:$0xff] %vm98, %v4394
    %4403 = vst.msk [vmem:[#allocation2 + $0x8] sm:$0xff] %vm98, %v4399
    // Predicated region
    $region110: #{decoder_forward.1} parent=1 // pred_check
      _
    $region111: #{decoder_forward.1} parent=1 // pred_check_branch
      %4405 = sbr.rel (0) target = $region113
    $region112: #{decoder_forward.1} parent=1 // pred_region
      %s4407 = ssub.s32 256, 256
      %4408 = vsyncadd [#allocation3], %s4407
      %s4409 = sshll.u32 [#allocation2], 4
      %s4410 = int_to_ptr.vmem [resolvable:$true] %s4409
      %4415 = dma.vmem_to_hbm [thread:$0]  %s4410, 256, %s27, [#allocation3], 128, 128, 8
    $region113: #{decoder_forward.1} parent=1 // pred_fallthru
      _
    // Predicated region
    $region114: #{decoder_forward.1} parent=1 // pred_check
      _
    $region115: #{decoder_forward.1} parent=1 // pred_check_branch
      %4417 = sbr.rel (0) target = $region117
    $region116: #{decoder_forward.1} parent=1 // pred_region
      %4418 = dma.done [#allocation3], 256
    $region117: #{decoder_forward.1} parent=1 // pred_fallthru
      _
    %4419 = vsyncpa [#allocation3], 1

</llo_original>
